<compile_context>
chip_gen: v5e
topology: v5e:2x2
jax: 0.10.0
libtpu: 0.0.40
codegen_flags: <defaults>
</compile_context>

<pallas_src>
import functools

import jax
import jax.numpy as jnp
from jax.experimental import pallas as pl
from jax.experimental.pallas import tpu as pltpu


def _vmem_limit_bytes():
    """Scoped-VMEM limit derived from the actual chip (v7x has only 64 MiB/TC)."""
    cap = None
    try:
        cap = int(getattr(pltpu.get_tpu_info(), "vmem_capacity_bytes", 0)) or None
    except Exception:
        cap = None
    if cap is None:
        return 48 * 1024 * 1024                      # safe on every generation
    return max(32 * 1024 * 1024, min(96 * 1024 * 1024, (cap * 3) // 4))


def _pick_cout_tile(cout):
    if cout <= 256:
        return cout
    for t in (256, 128):                             # MXU-native tiles (v6e/v7x, v5e)
        if cout % t == 0:
            return t
    return cout


def _pick_trows(h, w, cin, tc, n_batch, nct, budget_bytes, itemsize, max_rows):
    """Output-row tile: divisor of H, sublane friendly, sized to the VMEM budget."""
    wp = w + 2

    def est(tr):                                     # rough per-call VMEM footprint
        x_blk = cin * (tr + 2) * wp * itemsize
        y_blk = tc * tr * w * itemsize
        w_blk = 9 * tc * cin * itemsize
        live = w_blk + 6 * tc * w * 4 + 4 * cin * wp * itemsize
        return 2 * (x_blk + y_blk + w_blk) + live + (2 << 20)

    cands = [d for d in range(1, min(h, max_rows) + 1)
             if h % d == 0 and (d % 8 == 0 or d == h)]
    if not cands:
        cands = [h]                                  # whole-image fallback: full-dim blocks
    fitting = [d for d in cands if est(d) <= budget_bytes] or [min(cands)]
    tr = max(fitting)
    if n_batch * (h // tr) * nct < 4:                # keep both v7x TensorCores busy
        smaller = [d for d in fitting if n_batch * (h // d) * nct >= 4]
        if smaller:
            tr = max(smaller)
    return tr


def _conv_relu_stats_kernel(x_ref, w_ref, b_ref, y_ref, dsum_ref, dsq_ref, *,
                            trows, width):
    # x_ref   : (Cin, trows+2, W+2)   halo'd padded input rows (matmul dtype)
    # w_ref   : (9, Cout_t, Cin)      per-tap conv weights (matmul dtype)
    # b_ref   : (Cout_t, 1)           conv bias (f32)
    # y_ref   : (Cout_t, trows, W)    post-ReLU activations (bf16 by default)
    # dsum_ref/dsq_ref : (1, Cout_t)  per-tile shifted sum / sum-of-squares (f32)
    b = b_ref[...]
    stat_shift = jnp.maximum(b, 0.0)                 # relu(bias): cancellation-safe stats
    w_taps = [w_ref[t] for t in range(9)]            # 9 x (Cout_t, Cin)

    dsum_acc = None
    dsq_acc = None
    for r in range(trows):
        acc = None
        for kh in range(3):
            xrow = x_ref[:, r + kh, :]               # (Cin, W+2)
            for kw in range(3):
                part = jnp.dot(w_taps[3 * kh + kw], xrow[:, kw:kw + width],
                               preferred_element_type=jnp.float32)
                acc = part if acc is None else acc + part
        y = jnp.maximum(acc + b, 0.0)                # (Cout_t, W) f32
        y_ref[:, r, :] = y.astype(y_ref.dtype)
        d = y - stat_shift
        dsum_acc = d if dsum_acc is None else dsum_acc + d
        dsq_acc = d * d if dsq_acc is None else dsq_acc + d * d

    dsum_ref[...] = jnp.sum(dsum_acc, axis=1).reshape(1, -1)
    dsq_ref[...] = jnp.sum(dsq_acc, axis=1).reshape(1, -1)


def _bn_apply_kernel(y_ref, scale_ref, shift_ref, o_ref):
    # y_ref: (Cout_t, trows, W); scale/shift: (Cout_t, 1, 1); o_ref: (Cout_t, trows, W) f32
    o_ref[...] = y_ref[...].astype(jnp.float32) * scale_ref[...] + shift_ref[...]


@functools.partial(jax.jit,
                   static_argnames=("matmul_dtype", "intermediate_dtype", "max_rows"))
def crb2d_forward(x, weight, bias, gamma, beta, eps=1e-5,
                  matmul_dtype=jnp.bfloat16, intermediate_dtype=jnp.bfloat16,
                  max_rows=32):
    """CRB2D forward: BatchNorm2d(ReLU(Conv2d_{3x3,s1,p1}(x))), training-mode BN.

    x: (N, Cin, H, W) f32; weight: (Cout, Cin, 3, 3); bias/gamma/beta: (Cout,).
    Returns (N, Cout, H, W) f32.  Pass matmul_dtype / intermediate_dtype = jnp.float32
    to recover exact-f32 conv / intermediate numerics at ~2x the HBM cost.
    """
    n, cin, h, w = x.shape
    cout = weight.shape[0]
    wp = w + 2

    tc = _pick_cout_tile(cout)
    nct = cout // tc
    itemsize = jnp.dtype(matmul_dtype).itemsize
    vmem_limit = _vmem_limit_bytes()
    trows = _pick_trows(h, w, cin, tc, n, nct, (vmem_limit * 7) // 10, itemsize, max_rows)
    nrt = h // trows

    # ---- wrapper prep: cast to matmul dtype FIRST, pad once, halo'd row blocks ----
    xpad = jnp.pad(x.astype(matmul_dtype), ((0, 0), (0, 0), (1, 1), (1, 1)))
    xblocks = jnp.stack(
        [xpad[:, :, r0:r0 + trows + 2, :] for r0 in range(0, h, trows)],
        axis=1)                                          # (N, nrt, Cin, trows+2, W+2)
    w9 = jnp.transpose(weight, (2, 3, 0, 1)).reshape(9, cout, cin).astype(matmul_dtype)
    b2d = bias.astype(jnp.float32).reshape(cout, 1)

    # ---- pass 1: fused 3x3 conv + bias + ReLU + per-tile shifted BN partials ----
    kern1 = functools.partial(_conv_relu_stats_kernel, trows=trows, width=w)
    y, dsum, dsq = pl.pallas_call(
        kern1,
        grid=(n, nrt, nct),
        in_specs=[
            pl.BlockSpec((None, None, cin, trows + 2, wp),
                         lambda i, r, j: (i, r, 0, 0, 0)),
            pl.BlockSpec((9, tc, cin), lambda i, r, j: (0, j, 0)),
            pl.BlockSpec((tc, 1), lambda i, r, j: (j, 0)),
        ],
        out_specs=[
            pl.BlockSpec((None, tc, trows, w), lambda i, r, j: (i, j, r, 0)),
            pl.BlockSpec((None, None, None, 1, tc), lambda i, r, j: (i, r, j, 0, 0)),
            pl.BlockSpec((None, None, None, 1, tc), lambda i, r, j: (i, r, j, 0, 0)),
        ],
        out_shape=(
            jax.ShapeDtypeStruct((n, cout, h, w), intermediate_dtype),
            jax.ShapeDtypeStruct((n, nrt, nct, 1, tc), jnp.float32),
            jax.ShapeDtypeStruct((n, nrt, nct, 1, tc), jnp.float32),
        ),
        compiler_params=pltpu.CompilerParams(
            dimension_semantics=("parallel", "parallel", "parallel"),
            vmem_limit_bytes=vmem_limit),
    )(xblocks, w9, b2d)

    # ---- tiny XLA reduction of the partials -> per-channel scale / shift ----
    cnt = jnp.float32(n * h * w)
    stat_shift = jnp.maximum(bias.astype(jnp.float32), 0.0)
    dmean = jnp.sum(dsum, axis=(0, 1, 3)).reshape(cout) / cnt       # E[y - relu(bias)]
    dsq_mean = jnp.sum(dsq, axis=(0, 1, 3)).reshape(cout) / cnt     # E[(y - relu(bias))^2]
    mean = dmean + stat_shift
    var = jnp.maximum(dsq_mean - dmean * dmean, 0.0)                # biased (training) var
    inv = jax.lax.rsqrt(var + eps)
    g32 = gamma.astype(jnp.float32)
    scale = (g32 * inv).reshape(cout, 1, 1)
    shift = (beta.astype(jnp.float32) - mean * g32 * inv).reshape(cout, 1, 1)

    # ---- pass 2: y * scale + shift, written straight into the NCHW output ----
    out = pl.pallas_call(
        _bn_apply_kernel,
        grid=(n, nrt, nct),
        in_specs=[
            pl.BlockSpec((None, tc, trows, w), lambda i, r, j: (i, j, r, 0)),
            pl.BlockSpec((tc, 1, 1), lambda i, r, j: (j, 0, 0)),
            pl.BlockSpec((tc, 1, 1), lambda i, r, j: (j, 0, 0)),
        ],
        out_specs=pl.BlockSpec((None, tc, trows, w), lambda i, r, j: (i, j, r, 0)),
        out_shape=jax.ShapeDtypeStruct((n, cout, h, w), jnp.float32),
        compiler_params=pltpu.CompilerParams(
            dimension_semantics=("parallel", "parallel", "parallel"),
            vmem_limit_bytes=vmem_limit),
    )(y, scale, shift)
    return out


def _reference_forward(x, weight, bias, gamma, beta, eps=1e-5,
                       matmul_dtype=jnp.float32, intermediate_dtype=jnp.float32):
    """Pure-JAX reference with PyTorch CRB2D semantics (training-mode BatchNorm).

    matmul_dtype / intermediate_dtype mirror the kernel's precisions so the assert
    can be tight; pass jnp.float32 for exact PyTorch-f32 numerics.
    """
    nb, cin, h, w = x.shape
    cout = weight.shape[0]
    xp = jnp.pad(x.astype(matmul_dtype), ((0, 0), (0, 0), (1, 1), (1, 1)))
    wm = weight.astype(matmul_dtype)
    y = jnp.zeros((nb, cout, h, w), jnp.float32)
    for kh in range(3):
        for kw in range(3):
            y = y + jnp.einsum('nchw,dc->ndhw', xp[:, :, kh:kh + h, kw:kw + w],
                               wm[:, :, kh, kw], preferred_element_type=jnp.float32)
    y = jnp.maximum(y + bias.reshape(1, cout, 1, 1).astype(jnp.float32), 0.0)
    mean = y.mean(axis=(0, 2, 3), keepdims=True)
    var = ((y - mean) ** 2).mean(axis=(0, 2, 3), keepdims=True)      # biased variance
    y_r = y.astype(intermediate_dtype).astype(jnp.float32)           # mirror bf16 intermediate
    out = (y_r - mean) * jax.lax.rsqrt(var + eps)
    return out * gamma.reshape(1, cout, 1, 1) + beta.reshape(1, cout, 1, 1)


if __name__ == "__main__":
    # Small, module-consistent shapes; trows=8 -> 2 row tiles, so the halo'd
    # fused-conv tiling and the multi-step parallel grid are actually exercised.
    N, Cin, Cout, H, W = 2, 4, 8, 16, 16
    eps = 1e-5

    key = jax.random.PRNGKey(0)
    kx, kw_, kb, kg, kbeta = jax.random.split(key, 5)
    x = jax.random.normal(kx, (N, Cin, H, W), jnp.float32)
    weight = 0.2 * jax.random.normal(kw_, (Cout, Cin, 3, 3), jnp.float32)
    bias = 0.1 * jax.random.normal(kb, (Cout,), jnp.float32)
    gamma = 1.0 + 0.1 * jax.random.normal(kg, (Cout,), jnp.float32)
    beta = 0.1 * jax.random.normal(kbeta, (Cout,), jnp.float32)

    out = crb2d_forward(x, weight, bias, gamma, beta, eps=eps)
    out = jax.block_until_ready(out)
    assert out.shape == (N, Cout, H, W)

    ref = _reference_forward(x, weight, bias, gamma, beta, eps=eps,
                             matmul_dtype=jnp.bfloat16,
                             intermediate_dtype=jnp.bfloat16)
    max_err = float(jnp.max(jnp.abs(out - ref)))
    # bf16 conv inputs + bf16 intermediate (mirrored in the reference): a few e-3 typical.
    assert max_err < 3e-2, f"Pallas CRB2D mismatch vs reference (max abs err {max_err})"

    print("KERNEL_OK")
</pallas_src>

<mosaic_0001>
module attributes {stable_mosaic.version = 11 : i64} {
  func.func @_conv_relu_stats_kernel(%arg0: i32, %arg1: i32, %arg2: i32, %arg3: memref<1x1x4x10x18xbf16, #tpu.memory_space<vmem>>, %arg4: memref<9x8x4xbf16, #tpu.memory_space<vmem>>, %arg5: memref<8x1xf32, #tpu.memory_space<vmem>>, %arg6: memref<1x8x8x16xbf16, #tpu.memory_space<vmem>>, %arg7: memref<1x1x1x1x8xf32, #tpu.memory_space<vmem>>, %arg8: memref<1x1x1x1x8xf32, #tpu.memory_space<vmem>>) attributes {dimension_semantics = [#tpu.dimension_semantics<parallel>, #tpu.dimension_semantics<parallel>, #tpu.dimension_semantics<parallel>], iteration_bounds = array<i64: 2, 2, 1>, scalar_prefetch = 0 : i64, scratch_operands = 0 : i64, tpu.core_type = #tpu.core_type<tc>, window_params = [{transform_indices = @transform_0, window_bounds = array<i64: 1, 1, 4, 10, 18>}, {transform_indices = @transform_1, window_bounds = array<i64: 9, 8, 4>}, {transform_indices = @transform_2, window_bounds = array<i64: 8, 1>}, {transform_indices = @transform_3, window_bounds = array<i64: 1, 8, 8, 16>}, {transform_indices = @transform_4, window_bounds = array<i64: 1, 1, 1, 1, 8>}, {transform_indices = @transform_5, window_bounds = array<i64: 1, 1, 1, 1, 8>}]} {
    %c0 = arith.constant 0 : index
    %c0_0 = arith.constant 0 : index
    %0 = vector.load %arg5[%c0, %c0_0] : memref<8x1xf32, #tpu.memory_space<vmem>>, vector<8x1xf32>
    %cst = arith.constant 0.000000e+00 : f32
    %1 = vector.broadcast %cst : f32 to vector<8x1xf32>
    %2 = arith.maximumf %0, %1 : vector<8x1xf32>
    %c0_1 = arith.constant 0 : index
    %c0_2 = arith.constant 0 : index
    %c0_3 = arith.constant 0 : index
    %3 = vector.load %arg4[%c0_1, %c0_2, %c0_3] : memref<9x8x4xbf16, #tpu.memory_space<vmem>>, vector<1x8x4xbf16>
    %4 = vector.shape_cast %3 : vector<1x8x4xbf16> to vector<8x4xbf16>
    %c1 = arith.constant 1 : index
    %c0_4 = arith.constant 0 : index
    %c0_5 = arith.constant 0 : index
    %5 = vector.load %arg4[%c1, %c0_4, %c0_5] : memref<9x8x4xbf16, #tpu.memory_space<vmem>>, vector<1x8x4xbf16>
    %6 = vector.shape_cast %5 : vector<1x8x4xbf16> to vector<8x4xbf16>
    %c2 = arith.constant 2 : index
    %c0_6 = arith.constant 0 : index
    %c0_7 = arith.constant 0 : index
    %7 = vector.load %arg4[%c2, %c0_6, %c0_7] : memref<9x8x4xbf16, #tpu.memory_space<vmem>>, vector<1x8x4xbf16>
    %8 = vector.shape_cast %7 : vector<1x8x4xbf16> to vector<8x4xbf16>
    %c3 = arith.constant 3 : index
    %c0_8 = arith.constant 0 : index
    %c0_9 = arith.constant 0 : index
    %9 = vector.load %arg4[%c3, %c0_8, %c0_9] : memref<9x8x4xbf16, #tpu.memory_space<vmem>>, vector<1x8x4xbf16>
    %10 = vector.shape_cast %9 : vector<1x8x4xbf16> to vector<8x4xbf16>
    %c4 = arith.constant 4 : index
    %c0_10 = arith.constant 0 : index
    %c0_11 = arith.constant 0 : index
    %11 = vector.load %arg4[%c4, %c0_10, %c0_11] : memref<9x8x4xbf16, #tpu.memory_space<vmem>>, vector<1x8x4xbf16>
    %12 = vector.shape_cast %11 : vector<1x8x4xbf16> to vector<8x4xbf16>
    %c5 = arith.constant 5 : index
    %c0_12 = arith.constant 0 : index
    %c0_13 = arith.constant 0 : index
    %13 = vector.load %arg4[%c5, %c0_12, %c0_13] : memref<9x8x4xbf16, #tpu.memory_space<vmem>>, vector<1x8x4xbf16>
    %14 = vector.shape_cast %13 : vector<1x8x4xbf16> to vector<8x4xbf16>
    %c6 = arith.constant 6 : index
    %c0_14 = arith.constant 0 : index
    %c0_15 = arith.constant 0 : index
    %15 = vector.load %arg4[%c6, %c0_14, %c0_15] : memref<9x8x4xbf16, #tpu.memory_space<vmem>>, vector<1x8x4xbf16>
    %16 = vector.shape_cast %15 : vector<1x8x4xbf16> to vector<8x4xbf16>
    %c7 = arith.constant 7 : index
    %c0_16 = arith.constant 0 : index
    %c0_17 = arith.constant 0 : index
    %17 = vector.load %arg4[%c7, %c0_16, %c0_17] : memref<9x8x4xbf16, #tpu.memory_space<vmem>>, vector<1x8x4xbf16>
    %18 = vector.shape_cast %17 : vector<1x8x4xbf16> to vector<8x4xbf16>
    %c8 = arith.constant 8 : index
    %c0_18 = arith.constant 0 : index
    %c0_19 = arith.constant 0 : index
    %19 = vector.load %arg4[%c8, %c0_18, %c0_19] : memref<9x8x4xbf16, #tpu.memory_space<vmem>>, vector<1x8x4xbf16>
    %20 = vector.shape_cast %19 : vector<1x8x4xbf16> to vector<8x4xbf16>
    %c0_20 = arith.constant 0 : index
    %c0_21 = arith.constant 0 : index
    %c0_22 = arith.constant 0 : index
    %c0_23 = arith.constant 0 : index
    %c0_24 = arith.constant 0 : index
    %21 = vector.load %arg3[%c0_20, %c0_21, %c0_22, %c0_23, %c0_24] : memref<1x1x4x10x18xbf16, #tpu.memory_space<vmem>>, vector<1x1x4x1x18xbf16>
    %22 = vector.shape_cast %21 : vector<1x1x4x1x18xbf16> to vector<4x18xbf16>
    %23 = vector.extract_strided_slice %22 {offsets = [0, 0], sizes = [4, 16], strides = [1, 1]} : vector<4x18xbf16> to vector<4x16xbf16>
    %cst_25 = arith.constant dense<0.000000e+00> : vector<8x16xf32>
    %24 = tpu.matmul %4, %23, %cst_25 {dimension_numbers = #tpu.dot_dimension_numbers<[1], [0], [0], [1], [0, 0, 1, 1], [], []>} : vector<8x4xbf16>, vector<4x16xbf16>, vector<8x16xf32> -> vector<8x16xf32>
    %25 = vector.extract_strided_slice %22 {offsets = [0, 1], sizes = [4, 16], strides = [1, 1]} : vector<4x18xbf16> to vector<4x16xbf16>
    %cst_26 = arith.constant dense<0.000000e+00> : vector<8x16xf32>
    %26 = tpu.matmul %6, %25, %cst_26 {dimension_numbers = #tpu.dot_dimension_numbers<[1], [0], [0], [1], [0, 0, 1, 1], [], []>} : vector<8x4xbf16>, vector<4x16xbf16>, vector<8x16xf32> -> vector<8x16xf32>
    %27 = arith.addf %24, %26 : vector<8x16xf32>
    %28 = vector.extract_strided_slice %22 {offsets = [0, 2], sizes = [4, 16], strides = [1, 1]} : vector<4x18xbf16> to vector<4x16xbf16>
    %cst_27 = arith.constant dense<0.000000e+00> : vector<8x16xf32>
    %29 = tpu.matmul %8, %28, %cst_27 {dimension_numbers = #tpu.dot_dimension_numbers<[1], [0], [0], [1], [0, 0, 1, 1], [], []>} : vector<8x4xbf16>, vector<4x16xbf16>, vector<8x16xf32> -> vector<8x16xf32>
    %30 = arith.addf %27, %29 : vector<8x16xf32>
    %c0_28 = arith.constant 0 : index
    %c0_29 = arith.constant 0 : index
    %c0_30 = arith.constant 0 : index
    %c1_31 = arith.constant 1 : index
    %c0_32 = arith.constant 0 : index
    %31 = vector.load %arg3[%c0_28, %c0_29, %c0_30, %c1_31, %c0_32] : memref<1x1x4x10x18xbf16, #tpu.memory_space<vmem>>, vector<1x1x4x1x18xbf16>
    %32 = vector.shape_cast %31 : vector<1x1x4x1x18xbf16> to vector<4x18xbf16>
    %33 = vector.extract_strided_slice %32 {offsets = [0, 0], sizes = [4, 16], strides = [1, 1]} : vector<4x18xbf16> to vector<4x16xbf16>
    %cst_33 = arith.constant dense<0.000000e+00> : vector<8x16xf32>
    %34 = tpu.matmul %10, %33, %cst_33 {dimension_numbers = #tpu.dot_dimension_numbers<[1], [0], [0], [1], [0, 0, 1, 1], [], []>} : vector<8x4xbf16>, vector<4x16xbf16>, vector<8x16xf32> -> vector<8x16xf32>
    %35 = arith.addf %30, %34 : vector<8x16xf32>
    %36 = vector.extract_strided_slice %32 {offsets = [0, 1], sizes = [4, 16], strides = [1, 1]} : vector<4x18xbf16> to vector<4x16xbf16>
    %cst_34 = arith.constant dense<0.000000e+00> : vector<8x16xf32>
    %37 = tpu.matmul %12, %36, %cst_34 {dimension_numbers = #tpu.dot_dimension_numbers<[1], [0], [0], [1], [0, 0, 1, 1], [], []>} : vector<8x4xbf16>, vector<4x16xbf16>, vector<8x16xf32> -> vector<8x16xf32>
    %38 = arith.addf %35, %37 : vector<8x16xf32>
    %39 = vector.extract_strided_slice %32 {offsets = [0, 2], sizes = [4, 16], strides = [1, 1]} : vector<4x18xbf16> to vector<4x16xbf16>
    %cst_35 = arith.constant dense<0.000000e+00> : vector<8x16xf32>
    %40 = tpu.matmul %14, %39, %cst_35 {dimension_numbers = #tpu.dot_dimension_numbers<[1], [0], [0], [1], [0, 0, 1, 1], [], []>} : vector<8x4xbf16>, vector<4x16xbf16>, vector<8x16xf32> -> vector<8x16xf32>
    %41 = arith.addf %38, %40 : vector<8x16xf32>
    %c0_36 = arith.constant 0 : index
    %c0_37 = arith.constant 0 : index
    %c0_38 = arith.constant 0 : index
    %c2_39 = arith.constant 2 : index
    %c0_40 = arith.constant 0 : index
    %42 = vector.load %arg3[%c0_36, %c0_37, %c0_38, %c2_39, %c0_40] : memref<1x1x4x10x18xbf16, #tpu.memory_space<vmem>>, vector<1x1x4x1x18xbf16>
    %43 = vector.shape_cast %42 : vector<1x1x4x1x18xbf16> to vector<4x18xbf16>
    %44 = vector.extract_strided_slice %43 {offsets = [0, 0], sizes = [4, 16], strides = [1, 1]} : vector<4x18xbf16> to vector<4x16xbf16>
    %cst_41 = arith.constant dense<0.000000e+00> : vector<8x16xf32>
    %45 = tpu.matmul %16, %44, %cst_41 {dimension_numbers = #tpu.dot_dimension_numbers<[1], [0], [0], [1], [0, 0, 1, 1], [], []>} : vector<8x4xbf16>, vector<4x16xbf16>, vector<8x16xf32> -> vector<8x16xf32>
    %46 = arith.addf %41, %45 : vector<8x16xf32>
    %47 = vector.extract_strided_slice %43 {offsets = [0, 1], sizes = [4, 16], strides = [1, 1]} : vector<4x18xbf16> to vector<4x16xbf16>
    %cst_42 = arith.constant dense<0.000000e+00> : vector<8x16xf32>
    %48 = tpu.matmul %18, %47, %cst_42 {dimension_numbers = #tpu.dot_dimension_numbers<[1], [0], [0], [1], [0, 0, 1, 1], [], []>} : vector<8x4xbf16>, vector<4x16xbf16>, vector<8x16xf32> -> vector<8x16xf32>
    %49 = arith.addf %46, %48 : vector<8x16xf32>
    %50 = vector.extract_strided_slice %43 {offsets = [0, 2], sizes = [4, 16], strides = [1, 1]} : vector<4x18xbf16> to vector<4x16xbf16>
    %cst_43 = arith.constant dense<0.000000e+00> : vector<8x16xf32>
    %51 = tpu.matmul %20, %50, %cst_43 {dimension_numbers = #tpu.dot_dimension_numbers<[1], [0], [0], [1], [0, 0, 1, 1], [], []>} : vector<8x4xbf16>, vector<4x16xbf16>, vector<8x16xf32> -> vector<8x16xf32>
    %52 = arith.addf %49, %51 : vector<8x16xf32>
    %53 = vector.broadcast %0 : vector<8x1xf32> to vector<8x16xf32>
    %54 = arith.addf %52, %53 : vector<8x16xf32>
    %cst_44 = arith.constant 0.000000e+00 : f32
    %55 = vector.broadcast %cst_44 : f32 to vector<8x16xf32>
    %56 = arith.maximumf %54, %55 : vector<8x16xf32>
    %57 = arith.truncf %56 : vector<8x16xf32> to vector<8x16xbf16>
    %c0_45 = arith.constant 0 : index
    %c0_46 = arith.constant 0 : index
    %c0_47 = arith.constant 0 : index
    %c0_48 = arith.constant 0 : index
    %58 = vector.load %arg6[%c0_45, %c0_46, %c0_47, %c0_48] : memref<1x8x8x16xbf16, #tpu.memory_space<vmem>>, vector<1x8x1x16xbf16>
    %59 = vector.shape_cast %58 : vector<1x8x1x16xbf16> to vector<8x16xbf16>
    %60 = vector.shape_cast %57 : vector<8x16xbf16> to vector<1x8x1x16xbf16>
    tpu.vector_store %arg6[%c0_45, %c0_46, %c0_47, %c0_48], %60 {strides = array<i32>} : memref<1x8x8x16xbf16, #tpu.memory_space<vmem>>, vector<1x8x1x16xbf16>,
    %61 = vector.broadcast %2 : vector<8x1xf32> to vector<8x16xf32>
    %62 = arith.subf %56, %61 : vector<8x16xf32>
    %63 = arith.mulf %62, %62 : vector<8x16xf32>
    %c0_49 = arith.constant 0 : index
    %c0_50 = arith.constant 0 : index
    %c0_51 = arith.constant 0 : index
    %c1_52 = arith.constant 1 : index
    %c0_53 = arith.constant 0 : index
    %64 = vector.load %arg3[%c0_49, %c0_50, %c0_51, %c1_52, %c0_53] : memref<1x1x4x10x18xbf16, #tpu.memory_space<vmem>>, vector<1x1x4x1x18xbf16>
    %65 = vector.shape_cast %64 : vector<1x1x4x1x18xbf16> to vector<4x18xbf16>
    %66 = vector.extract_strided_slice %65 {offsets = [0, 0], sizes = [4, 16], strides = [1, 1]} : vector<4x18xbf16> to vector<4x16xbf16>
    %cst_54 = arith.constant dense<0.000000e+00> : vector<8x16xf32>
    %67 = tpu.matmul %4, %66, %cst_54 {dimension_numbers = #tpu.dot_dimension_numbers<[1], [0], [0], [1], [0, 0, 1, 1], [], []>} : vector<8x4xbf16>, vector<4x16xbf16>, vector<8x16xf32> -> vector<8x16xf32>
    %68 = vector.extract_strided_slice %65 {offsets = [0, 1], sizes = [4, 16], strides = [1, 1]} : vector<4x18xbf16> to vector<4x16xbf16>
    %cst_55 = arith.constant dense<0.000000e+00> : vector<8x16xf32>
    %69 = tpu.matmul %6, %68, %cst_55 {dimension_numbers = #tpu.dot_dimension_numbers<[1], [0], [0], [1], [0, 0, 1, 1], [], []>} : vector<8x4xbf16>, vector<4x16xbf16>, vector<8x16xf32> -> vector<8x16xf32>
    %70 = arith.addf %67, %69 : vector<8x16xf32>
    %71 = vector.extract_strided_slice %65 {offsets = [0, 2], sizes = [4, 16], strides = [1, 1]} : vector<4x18xbf16> to vector<4x16xbf16>
    %cst_56 = arith.constant dense<0.000000e+00> : vector<8x16xf32>
    %72 = tpu.matmul %8, %71, %cst_56 {dimension_numbers = #tpu.dot_dimension_numbers<[1], [0], [0], [1], [0, 0, 1, 1], [], []>} : vector<8x4xbf16>, vector<4x16xbf16>, vector<8x16xf32> -> vector<8x16xf32>
    %73 = arith.addf %70, %72 : vector<8x16xf32>
    %c0_57 = arith.constant 0 : index
    %c0_58 = arith.constant 0 : index
    %c0_59 = arith.constant 0 : index
    %c2_60 = arith.constant 2 : index
    %c0_61 = arith.constant 0 : index
    %74 = vector.load %arg3[%c0_57, %c0_58, %c0_59, %c2_60, %c0_61] : memref<1x1x4x10x18xbf16, #tpu.memory_space<vmem>>, vector<1x1x4x1x18xbf16>
    %75 = vector.shape_cast %74 : vector<1x1x4x1x18xbf16> to vector<4x18xbf16>
    %76 = vector.extract_strided_slice %75 {offsets = [0, 0], sizes = [4, 16], strides = [1, 1]} : vector<4x18xbf16> to vector<4x16xbf16>
    %cst_62 = arith.constant dense<0.000000e+00> : vector<8x16xf32>
    %77 = tpu.matmul %10, %76, %cst_62 {dimension_numbers = #tpu.dot_dimension_numbers<[1], [0], [0], [1], [0, 0, 1, 1], [], []>} : vector<8x4xbf16>, vector<4x16xbf16>, vector<8x16xf32> -> vector<8x16xf32>
    %78 = arith.addf %73, %77 : vector<8x16xf32>
    %79 = vector.extract_strided_slice %75 {offsets = [0, 1], sizes = [4, 16], strides = [1, 1]} : vector<4x18xbf16> to vector<4x16xbf16>
    %cst_63 = arith.constant dense<0.000000e+00> : vector<8x16xf32>
    %80 = tpu.matmul %12, %79, %cst_63 {dimension_numbers = #tpu.dot_dimension_numbers<[1], [0], [0], [1], [0, 0, 1, 1], [], []>} : vector<8x4xbf16>, vector<4x16xbf16>, vector<8x16xf32> -> vector<8x16xf32>
    %81 = arith.addf %78, %80 : vector<8x16xf32>
    %82 = vector.extract_strided_slice %75 {offsets = [0, 2], sizes = [4, 16], strides = [1, 1]} : vector<4x18xbf16> to vector<4x16xbf16>
    %cst_64 = arith.constant dense<0.000000e+00> : vector<8x16xf32>
    %83 = tpu.matmul %14, %82, %cst_64 {dimension_numbers = #tpu.dot_dimension_numbers<[1], [0], [0], [1], [0, 0, 1, 1], [], []>} : vector<8x4xbf16>, vector<4x16xbf16>, vector<8x16xf32> -> vector<8x16xf32>
    %84 = arith.addf %81, %83 : vector<8x16xf32>
    %c0_65 = arith.constant 0 : index
    %c0_66 = arith.constant 0 : index
    %c0_67 = arith.constant 0 : index
    %c3_68 = arith.constant 3 : index
    %c0_69 = arith.constant 0 : index
    %85 = vector.load %arg3[%c0_65, %c0_66, %c0_67, %c3_68, %c0_69] : memref<1x1x4x10x18xbf16, #tpu.memory_space<vmem>>, vector<1x1x4x1x18xbf16>
    %86 = vector.shape_cast %85 : vector<1x1x4x1x18xbf16> to vector<4x18xbf16>
    %87 = vector.extract_strided_slice %86 {offsets = [0, 0], sizes = [4, 16], strides = [1, 1]} : vector<4x18xbf16> to vector<4x16xbf16>
    %cst_70 = arith.constant dense<0.000000e+00> : vector<8x16xf32>
    %88 = tpu.matmul %16, %87, %cst_70 {dimension_numbers = #tpu.dot_dimension_numbers<[1], [0], [0], [1], [0, 0, 1, 1], [], []>} : vector<8x4xbf16>, vector<4x16xbf16>, vector<8x16xf32> -> vector<8x16xf32>
    %89 = arith.addf %84, %88 : vector<8x16xf32>
    %90 = vector.extract_strided_slice %86 {offsets = [0, 1], sizes = [4, 16], strides = [1, 1]} : vector<4x18xbf16> to vector<4x16xbf16>
    %cst_71 = arith.constant dense<0.000000e+00> : vector<8x16xf32>
    %91 = tpu.matmul %18, %90, %cst_71 {dimension_numbers = #tpu.dot_dimension_numbers<[1], [0], [0], [1], [0, 0, 1, 1], [], []>} : vector<8x4xbf16>, vector<4x16xbf16>, vector<8x16xf32> -> vector<8x16xf32>
    %92 = arith.addf %89, %91 : vector<8x16xf32>
    %93 = vector.extract_strided_slice %86 {offsets = [0, 2], sizes = [4, 16], strides = [1, 1]} : vector<4x18xbf16> to vector<4x16xbf16>
    %cst_72 = arith.constant dense<0.000000e+00> : vector<8x16xf32>
    %94 = tpu.matmul %20, %93, %cst_72 {dimension_numbers = #tpu.dot_dimension_numbers<[1], [0], [0], [1], [0, 0, 1, 1], [], []>} : vector<8x4xbf16>, vector<4x16xbf16>, vector<8x16xf32> -> vector<8x16xf32>
    %95 = arith.addf %92, %94 : vector<8x16xf32>
    %96 = vector.broadcast %0 : vector<8x1xf32> to vector<8x16xf32>
    %97 = arith.addf %95, %96 : vector<8x16xf32>
    %cst_73 = arith.constant 0.000000e+00 : f32
    %98 = vector.broadcast %cst_73 : f32 to vector<8x16xf32>
    %99 = arith.maximumf %97, %98 : vector<8x16xf32>
    %100 = arith.truncf %99 : vector<8x16xf32> to vector<8x16xbf16>
    %c0_74 = arith.constant 0 : index
    %c0_75 = arith.constant 0 : index
    %c1_76 = arith.constant 1 : index
    %c0_77 = arith.constant 0 : index
    %101 = vector.load %arg6[%c0_74, %c0_75, %c1_76, %c0_77] : memref<1x8x8x16xbf16, #tpu.memory_space<vmem>>, vector<1x8x1x16xbf16>
    %102 = vector.shape_cast %101 : vector<1x8x1x16xbf16> to vector<8x16xbf16>
    %103 = vector.shape_cast %100 : vector<8x16xbf16> to vector<1x8x1x16xbf16>
    tpu.vector_store %arg6[%c0_74, %c0_75, %c1_76, %c0_77], %103 {strides = array<i32>} : memref<1x8x8x16xbf16, #tpu.memory_space<vmem>>, vector<1x8x1x16xbf16>,
    %104 = vector.broadcast %2 : vector<8x1xf32> to vector<8x16xf32>
    %105 = arith.subf %99, %104 : vector<8x16xf32>
    %106 = arith.addf %62, %105 : vector<8x16xf32>
    %107 = arith.mulf %105, %105 : vector<8x16xf32>
    %108 = arith.addf %63, %107 : vector<8x16xf32>
    %c0_78 = arith.constant 0 : index
    %c0_79 = arith.constant 0 : index
    %c0_80 = arith.constant 0 : index
    %c2_81 = arith.constant 2 : index
    %c0_82 = arith.constant 0 : index
    %109 = vector.load %arg3[%c0_78, %c0_79, %c0_80, %c2_81, %c0_82] : memref<1x1x4x10x18xbf16, #tpu.memory_space<vmem>>, vector<1x1x4x1x18xbf16>
    %110 = vector.shape_cast %109 : vector<1x1x4x1x18xbf16> to vector<4x18xbf16>
    %111 = vector.extract_strided_slice %110 {offsets = [0, 0], sizes = [4, 16], strides = [1, 1]} : vector<4x18xbf16> to vector<4x16xbf16>
    %cst_83 = arith.constant dense<0.000000e+00> : vector<8x16xf32>
    %112 = tpu.matmul %4, %111, %cst_83 {dimension_numbers = #tpu.dot_dimension_numbers<[1], [0], [0], [1], [0, 0, 1, 1], [], []>} : vector<8x4xbf16>, vector<4x16xbf16>, vector<8x16xf32> -> vector<8x16xf32>
    %113 = vector.extract_strided_slice %110 {offsets = [0, 1], sizes = [4, 16], strides = [1, 1]} : vector<4x18xbf16> to vector<4x16xbf16>
    %cst_84 = arith.constant dense<0.000000e+00> : vector<8x16xf32>
    %114 = tpu.matmul %6, %113, %cst_84 {dimension_numbers = #tpu.dot_dimension_numbers<[1], [0], [0], [1], [0, 0, 1, 1], [], []>} : vector<8x4xbf16>, vector<4x16xbf16>, vector<8x16xf32> -> vector<8x16xf32>
    %115 = arith.addf %112, %114 : vector<8x16xf32>
    %116 = vector.extract_strided_slice %110 {offsets = [0, 2], sizes = [4, 16], strides = [1, 1]} : vector<4x18xbf16> to vector<4x16xbf16>
    %cst_85 = arith.constant dense<0.000000e+00> : vector<8x16xf32>
    %117 = tpu.matmul %8, %116, %cst_85 {dimension_numbers = #tpu.dot_dimension_numbers<[1], [0], [0], [1], [0, 0, 1, 1], [], []>} : vector<8x4xbf16>, vector<4x16xbf16>, vector<8x16xf32> -> vector<8x16xf32>
    %118 = arith.addf %115, %117 : vector<8x16xf32>
    %c0_86 = arith.constant 0 : index
    %c0_87 = arith.constant 0 : index
    %c0_88 = arith.constant 0 : index
    %c3_89 = arith.constant 3 : index
    %c0_90 = arith.constant 0 : index
    %119 = vector.load %arg3[%c0_86, %c0_87, %c0_88, %c3_89, %c0_90] : memref<1x1x4x10x18xbf16, #tpu.memory_space<vmem>>, vector<1x1x4x1x18xbf16>
    %120 = vector.shape_cast %119 : vector<1x1x4x1x18xbf16> to vector<4x18xbf16>
    %121 = vector.extract_strided_slice %120 {offsets = [0, 0], sizes = [4, 16], strides = [1, 1]} : vector<4x18xbf16> to vector<4x16xbf16>
    %cst_91 = arith.constant dense<0.000000e+00> : vector<8x16xf32>
    %122 = tpu.matmul %10, %121, %cst_91 {dimension_numbers = #tpu.dot_dimension_numbers<[1], [0], [0], [1], [0, 0, 1, 1], [], []>} : vector<8x4xbf16>, vector<4x16xbf16>, vector<8x16xf32> -> vector<8x16xf32>
    %123 = arith.addf %118, %122 : vector<8x16xf32>
    %124 = vector.extract_strided_slice %120 {offsets = [0, 1], sizes = [4, 16], strides = [1, 1]} : vector<4x18xbf16> to vector<4x16xbf16>
    %cst_92 = arith.constant dense<0.000000e+00> : vector<8x16xf32>
    %125 = tpu.matmul %12, %124, %cst_92 {dimension_numbers = #tpu.dot_dimension_numbers<[1], [0], [0], [1], [0, 0, 1, 1], [], []>} : vector<8x4xbf16>, vector<4x16xbf16>, vector<8x16xf32> -> vector<8x16xf32>
    %126 = arith.addf %123, %125 : vector<8x16xf32>
    %127 = vector.extract_strided_slice %120 {offsets = [0, 2], sizes = [4, 16], strides = [1, 1]} : vector<4x18xbf16> to vector<4x16xbf16>
    %cst_93 = arith.constant dense<0.000000e+00> : vector<8x16xf32>
    %128 = tpu.matmul %14, %127, %cst_93 {dimension_numbers = #tpu.dot_dimension_numbers<[1], [0], [0], [1], [0, 0, 1, 1], [], []>} : vector<8x4xbf16>, vector<4x16xbf16>, vector<8x16xf32> -> vector<8x16xf32>
    %129 = arith.addf %126, %128 : vector<8x16xf32>
    %c0_94 = arith.constant 0 : index
    %c0_95 = arith.constant 0 : index
    %c0_96 = arith.constant 0 : index
    %c4_97 = arith.constant 4 : index
    %c0_98 = arith.constant 0 : index
    %130 = vector.load %arg3[%c0_94, %c0_95, %c0_96, %c4_97, %c0_98] : memref<1x1x4x10x18xbf16, #tpu.memory_space<vmem>>, vector<1x1x4x1x18xbf16>
    %131 = vector.shape_cast %130 : vector<1x1x4x1x18xbf16> to vector<4x18xbf16>
    %132 = vector.extract_strided_slice %131 {offsets = [0, 0], sizes = [4, 16], strides = [1, 1]} : vector<4x18xbf16> to vector<4x16xbf16>
    %cst_99 = arith.constant dense<0.000000e+00> : vector<8x16xf32>
    %133 = tpu.matmul %16, %132, %cst_99 {dimension_numbers = #tpu.dot_dimension_numbers<[1], [0], [0], [1], [0, 0, 1, 1], [], []>} : vector<8x4xbf16>, vector<4x16xbf16>, vector<8x16xf32> -> vector<8x16xf32>
    %134 = arith.addf %129, %133 : vector<8x16xf32>
    %135 = vector.extract_strided_slice %131 {offsets = [0, 1], sizes = [4, 16], strides = [1, 1]} : vector<4x18xbf16> to vector<4x16xbf16>
    %cst_100 = arith.constant dense<0.000000e+00> : vector<8x16xf32>
    %136 = tpu.matmul %18, %135, %cst_100 {dimension_numbers = #tpu.dot_dimension_numbers<[1], [0], [0], [1], [0, 0, 1, 1], [], []>} : vector<8x4xbf16>, vector<4x16xbf16>, vector<8x16xf32> -> vector<8x16xf32>
    %137 = arith.addf %134, %136 : vector<8x16xf32>
    %138 = vector.extract_strided_slice %131 {offsets = [0, 2], sizes = [4, 16], strides = [1, 1]} : vector<4x18xbf16> to vector<4x16xbf16>
    %cst_101 = arith.constant dense<0.000000e+00> : vector<8x16xf32>
    %139 = tpu.matmul %20, %138, %cst_101 {dimension_numbers = #tpu.dot_dimension_numbers<[1], [0], [0], [1], [0, 0, 1, 1], [], []>} : vector<8x4xbf16>, vector<4x16xbf16>, vector<8x16xf32> -> vector<8x16xf32>
    %140 = arith.addf %137, %139 : vector<8x16xf32>
    %141 = vector.broadcast %0 : vector<8x1xf32> to vector<8x16xf32>
    %142 = arith.addf %140, %141 : vector<8x16xf32>
    %cst_102 = arith.constant 0.000000e+00 : f32
    %143 = vector.broadcast %cst_102 : f32 to vector<8x16xf32>
    %144 = arith.maximumf %142, %143 : vector<8x16xf32>
    %145 = arith.truncf %144 : vector<8x16xf32> to vector<8x16xbf16>
    %c0_103 = arith.constant 0 : index
    %c0_104 = arith.constant 0 : index
    %c2_105 = arith.constant 2 : index
    %c0_106 = arith.constant 0 : index
    %146 = vector.load %arg6[%c0_103, %c0_104, %c2_105, %c0_106] : memref<1x8x8x16xbf16, #tpu.memory_space<vmem>>, vector<1x8x1x16xbf16>
    %147 = vector.shape_cast %146 : vector<1x8x1x16xbf16> to vector<8x16xbf16>
    %148 = vector.shape_cast %145 : vector<8x16xbf16> to vector<1x8x1x16xbf16>
    tpu.vector_store %arg6[%c0_103, %c0_104, %c2_105, %c0_106], %148 {strides = array<i32>} : memref<1x8x8x16xbf16, #tpu.memory_space<vmem>>, vector<1x8x1x16xbf16>,
    %149 = vector.broadcast %2 : vector<8x1xf32> to vector<8x16xf32>
    %150 = arith.subf %144, %149 : vector<8x16xf32>
    %151 = arith.addf %106, %150 : vector<8x16xf32>
    %152 = arith.mulf %150, %150 : vector<8x16xf32>
    %153 = arith.addf %108, %152 : vector<8x16xf32>
    %c0_107 = arith.constant 0 : index
    %c0_108 = arith.constant 0 : index
    %c0_109 = arith.constant 0 : index
    %c3_110 = arith.constant 3 : index
    %c0_111 = arith.constant 0 : index
    %154 = vector.load %arg3[%c0_107, %c0_108, %c0_109, %c3_110, %c0_111] : memref<1x1x4x10x18xbf16, #tpu.memory_space<vmem>>, vector<1x1x4x1x18xbf16>
    %155 = vector.shape_cast %154 : vector<1x1x4x1x18xbf16> to vector<4x18xbf16>
    %156 = vector.extract_strided_slice %155 {offsets = [0, 0], sizes = [4, 16], strides = [1, 1]} : vector<4x18xbf16> to vector<4x16xbf16>
    %cst_112 = arith.constant dense<0.000000e+00> : vector<8x16xf32>
    %157 = tpu.matmul %4, %156, %cst_112 {dimension_numbers = #tpu.dot_dimension_numbers<[1], [0], [0], [1], [0, 0, 1, 1], [], []>} : vector<8x4xbf16>, vector<4x16xbf16>, vector<8x16xf32> -> vector<8x16xf32>
    %158 = vector.extract_strided_slice %155 {offsets = [0, 1], sizes = [4, 16], strides = [1, 1]} : vector<4x18xbf16> to vector<4x16xbf16>
    %cst_113 = arith.constant dense<0.000000e+00> : vector<8x16xf32>
    %159 = tpu.matmul %6, %158, %cst_113 {dimension_numbers = #tpu.dot_dimension_numbers<[1], [0], [0], [1], [0, 0, 1, 1], [], []>} : vector<8x4xbf16>, vector<4x16xbf16>, vector<8x16xf32> -> vector<8x16xf32>
    %160 = arith.addf %157, %159 : vector<8x16xf32>
    %161 = vector.extract_strided_slice %155 {offsets = [0, 2], sizes = [4, 16], strides = [1, 1]} : vector<4x18xbf16> to vector<4x16xbf16>
    %cst_114 = arith.constant dense<0.000000e+00> : vector<8x16xf32>
    %162 = tpu.matmul %8, %161, %cst_114 {dimension_numbers = #tpu.dot_dimension_numbers<[1], [0], [0], [1], [0, 0, 1, 1], [], []>} : vector<8x4xbf16>, vector<4x16xbf16>, vector<8x16xf32> -> vector<8x16xf32>
    %163 = arith.addf %160, %162 : vector<8x16xf32>
    %c0_115 = arith.constant 0 : index
    %c0_116 = arith.constant 0 : index
    %c0_117 = arith.constant 0 : index
    %c4_118 = arith.constant 4 : index
    %c0_119 = arith.constant 0 : index
    %164 = vector.load %arg3[%c0_115, %c0_116, %c0_117, %c4_118, %c0_119] : memref<1x1x4x10x18xbf16, #tpu.memory_space<vmem>>, vector<1x1x4x1x18xbf16>
    %165 = vector.shape_cast %164 : vector<1x1x4x1x18xbf16> to vector<4x18xbf16>
    %166 = vector.extract_strided_slice %165 {offsets = [0, 0], sizes = [4, 16], strides = [1, 1]} : vector<4x18xbf16> to vector<4x16xbf16>
    %cst_120 = arith.constant dense<0.000000e+00> : vector<8x16xf32>
    %167 = tpu.matmul %10, %166, %cst_120 {dimension_numbers = #tpu.dot_dimension_numbers<[1], [0], [0], [1], [0, 0, 1, 1], [], []>} : vector<8x4xbf16>, vector<4x16xbf16>, vector<8x16xf32> -> vector<8x16xf32>
    %168 = arith.addf %163, %167 : vector<8x16xf32>
    %169 = vector.extract_strided_slice %165 {offsets = [0, 1], sizes = [4, 16], strides = [1, 1]} : vector<4x18xbf16> to vector<4x16xbf16>
    %cst_121 = arith.constant dense<0.000000e+00> : vector<8x16xf32>
    %170 = tpu.matmul %12, %169, %cst_121 {dimension_numbers = #tpu.dot_dimension_numbers<[1], [0], [0], [1], [0, 0, 1, 1], [], []>} : vector<8x4xbf16>, vector<4x16xbf16>, vector<8x16xf32> -> vector<8x16xf32>
    %171 = arith.addf %168, %170 : vector<8x16xf32>
    %172 = vector.extract_strided_slice %165 {offsets = [0, 2], sizes = [4, 16], strides = [1, 1]} : vector<4x18xbf16> to vector<4x16xbf16>
    %cst_122 = arith.constant dense<0.000000e+00> : vector<8x16xf32>
    %173 = tpu.matmul %14, %172, %cst_122 {dimension_numbers = #tpu.dot_dimension_numbers<[1], [0], [0], [1], [0, 0, 1, 1], [], []>} : vector<8x4xbf16>, vector<4x16xbf16>, vector<8x16xf32> -> vector<8x16xf32>
    %174 = arith.addf %171, %173 : vector<8x16xf32>
    %c0_123 = arith.constant 0 : index
    %c0_124 = arith.constant 0 : index
    %c0_125 = arith.constant 0 : index
    %c5_126 = arith.constant 5 : index
    %c0_127 = arith.constant 0 : index
    %175 = vector.load %arg3[%c0_123, %c0_124, %c0_125, %c5_126, %c0_127] : memref<1x1x4x10x18xbf16, #tpu.memory_space<vmem>>, vector<1x1x4x1x18xbf16>
    %176 = vector.shape_cast %175 : vector<1x1x4x1x18xbf16> to vector<4x18xbf16>
    %177 = vector.extract_strided_slice %176 {offsets = [0, 0], sizes = [4, 16], strides = [1, 1]} : vector<4x18xbf16> to vector<4x16xbf16>
    %cst_128 = arith.constant dense<0.000000e+00> : vector<8x16xf32>
    %178 = tpu.matmul %16, %177, %cst_128 {dimension_numbers = #tpu.dot_dimension_numbers<[1], [0], [0], [1], [0, 0, 1, 1], [], []>} : vector<8x4xbf16>, vector<4x16xbf16>, vector<8x16xf32> -> vector<8x16xf32>
    %179 = arith.addf %174, %178 : vector<8x16xf32>
    %180 = vector.extract_strided_slice %176 {offsets = [0, 1], sizes = [4, 16], strides = [1, 1]} : vector<4x18xbf16> to vector<4x16xbf16>
    %cst_129 = arith.constant dense<0.000000e+00> : vector<8x16xf32>
    %181 = tpu.matmul %18, %180, %cst_129 {dimension_numbers = #tpu.dot_dimension_numbers<[1], [0], [0], [1], [0, 0, 1, 1], [], []>} : vector<8x4xbf16>, vector<4x16xbf16>, vector<8x16xf32> -> vector<8x16xf32>
    %182 = arith.addf %179, %181 : vector<8x16xf32>
    %183 = vector.extract_strided_slice %176 {offsets = [0, 2], sizes = [4, 16], strides = [1, 1]} : vector<4x18xbf16> to vector<4x16xbf16>
    %cst_130 = arith.constant dense<0.000000e+00> : vector<8x16xf32>
    %184 = tpu.matmul %20, %183, %cst_130 {dimension_numbers = #tpu.dot_dimension_numbers<[1], [0], [0], [1], [0, 0, 1, 1], [], []>} : vector<8x4xbf16>, vector<4x16xbf16>, vector<8x16xf32> -> vector<8x16xf32>
    %185 = arith.addf %182, %184 : vector<8x16xf32>
    %186 = vector.broadcast %0 : vector<8x1xf32> to vector<8x16xf32>
    %187 = arith.addf %185, %186 : vector<8x16xf32>
    %cst_131 = arith.constant 0.000000e+00 : f32
    %188 = vector.broadcast %cst_131 : f32 to vector<8x16xf32>
    %189 = arith.maximumf %187, %188 : vector<8x16xf32>
    %190 = arith.truncf %189 : vector<8x16xf32> to vector<8x16xbf16>
    %c0_132 = arith.constant 0 : index
    %c0_133 = arith.constant 0 : index
    %c3_134 = arith.constant 3 : index
    %c0_135 = arith.constant 0 : index
    %191 = vector.load %arg6[%c0_132, %c0_133, %c3_134, %c0_135] : memref<1x8x8x16xbf16, #tpu.memory_space<vmem>>, vector<1x8x1x16xbf16>
    %192 = vector.shape_cast %191 : vector<1x8x1x16xbf16> to vector<8x16xbf16>
    %193 = vector.shape_cast %190 : vector<8x16xbf16> to vector<1x8x1x16xbf16>
    tpu.vector_store %arg6[%c0_132, %c0_133, %c3_134, %c0_135], %193 {strides = array<i32>} : memref<1x8x8x16xbf16, #tpu.memory_space<vmem>>, vector<1x8x1x16xbf16>,
    %194 = vector.broadcast %2 : vector<8x1xf32> to vector<8x16xf32>
    %195 = arith.subf %189, %194 : vector<8x16xf32>
    %196 = arith.addf %151, %195 : vector<8x16xf32>
    %197 = arith.mulf %195, %195 : vector<8x16xf32>
    %198 = arith.addf %153, %197 : vector<8x16xf32>
    %c0_136 = arith.constant 0 : index
    %c0_137 = arith.constant 0 : index
    %c0_138 = arith.constant 0 : index
    %c4_139 = arith.constant 4 : index
    %c0_140 = arith.constant 0 : index
    %199 = vector.load %arg3[%c0_136, %c0_137, %c0_138, %c4_139, %c0_140] : memref<1x1x4x10x18xbf16, #tpu.memory_space<vmem>>, vector<1x1x4x1x18xbf16>
    %200 = vector.shape_cast %199 : vector<1x1x4x1x18xbf16> to vector<4x18xbf16>
    %201 = vector.extract_strided_slice %200 {offsets = [0, 0], sizes = [4, 16], strides = [1, 1]} : vector<4x18xbf16> to vector<4x16xbf16>
    %cst_141 = arith.constant dense<0.000000e+00> : vector<8x16xf32>
    %202 = tpu.matmul %4, %201, %cst_141 {dimension_numbers = #tpu.dot_dimension_numbers<[1], [0], [0], [1], [0, 0, 1, 1], [], []>} : vector<8x4xbf16>, vector<4x16xbf16>, vector<8x16xf32> -> vector<8x16xf32>
    %203 = vector.extract_strided_slice %200 {offsets = [0, 1], sizes = [4, 16], strides = [1, 1]} : vector<4x18xbf16> to vector<4x16xbf16>
    %cst_142 = arith.constant dense<0.000000e+00> : vector<8x16xf32>
    %204 = tpu.matmul %6, %203, %cst_142 {dimension_numbers = #tpu.dot_dimension_numbers<[1], [0], [0], [1], [0, 0, 1, 1], [], []>} : vector<8x4xbf16>, vector<4x16xbf16>, vector<8x16xf32> -> vector<8x16xf32>
    %205 = arith.addf %202, %204 : vector<8x16xf32>
    %206 = vector.extract_strided_slice %200 {offsets = [0, 2], sizes = [4, 16], strides = [1, 1]} : vector<4x18xbf16> to vector<4x16xbf16>
    %cst_143 = arith.constant dense<0.000000e+00> : vector<8x16xf32>
    %207 = tpu.matmul %8, %206, %cst_143 {dimension_numbers = #tpu.dot_dimension_numbers<[1], [0], [0], [1], [0, 0, 1, 1], [], []>} : vector<8x4xbf16>, vector<4x16xbf16>, vector<8x16xf32> -> vector<8x16xf32>
    %208 = arith.addf %205, %207 : vector<8x16xf32>
    %c0_144 = arith.constant 0 : index
    %c0_145 = arith.constant 0 : index
    %c0_146 = arith.constant 0 : index
    %c5_147 = arith.constant 5 : index
    %c0_148 = arith.constant 0 : index
    %209 = vector.load %arg3[%c0_144, %c0_145, %c0_146, %c5_147, %c0_148] : memref<1x1x4x10x18xbf16, #tpu.memory_space<vmem>>, vector<1x1x4x1x18xbf16>
    %210 = vector.shape_cast %209 : vector<1x1x4x1x18xbf16> to vector<4x18xbf16>
    %211 = vector.extract_strided_slice %210 {offsets = [0, 0], sizes = [4, 16], strides = [1, 1]} : vector<4x18xbf16> to vector<4x16xbf16>
    %cst_149 = arith.constant dense<0.000000e+00> : vector<8x16xf32>
    %212 = tpu.matmul %10, %211, %cst_149 {dimension_numbers = #tpu.dot_dimension_numbers<[1], [0], [0], [1], [0, 0, 1, 1], [], []>} : vector<8x4xbf16>, vector<4x16xbf16>, vector<8x16xf32> -> vector<8x16xf32>
    %213 = arith.addf %208, %212 : vector<8x16xf32>
    %214 = vector.extract_strided_slice %210 {offsets = [0, 1], sizes = [4, 16], strides = [1, 1]} : vector<4x18xbf16> to vector<4x16xbf16>
    %cst_150 = arith.constant dense<0.000000e+00> : vector<8x16xf32>
    %215 = tpu.matmul %12, %214, %cst_150 {dimension_numbers = #tpu.dot_dimension_numbers<[1], [0], [0], [1], [0, 0, 1, 1], [], []>} : vector<8x4xbf16>, vector<4x16xbf16>, vector<8x16xf32> -> vector<8x16xf32>
    %216 = arith.addf %213, %215 : vector<8x16xf32>
    %217 = vector.extract_strided_slice %210 {offsets = [0, 2], sizes = [4, 16], strides = [1, 1]} : vector<4x18xbf16> to vector<4x16xbf16>
    %cst_151 = arith.constant dense<0.000000e+00> : vector<8x16xf32>
    %218 = tpu.matmul %14, %217, %cst_151 {dimension_numbers = #tpu.dot_dimension_numbers<[1], [0], [0], [1], [0, 0, 1, 1], [], []>} : vector<8x4xbf16>, vector<4x16xbf16>, vector<8x16xf32> -> vector<8x16xf32>
    %219 = arith.addf %216, %218 : vector<8x16xf32>
    %c0_152 = arith.constant 0 : index
    %c0_153 = arith.constant 0 : index
    %c0_154 = arith.constant 0 : index
    %c6_155 = arith.constant 6 : index
    %c0_156 = arith.constant 0 : index
    %220 = vector.load %arg3[%c0_152, %c0_153, %c0_154, %c6_155, %c0_156] : memref<1x1x4x10x18xbf16, #tpu.memory_space<vmem>>, vector<1x1x4x1x18xbf16>
    %221 = vector.shape_cast %220 : vector<1x1x4x1x18xbf16> to vector<4x18xbf16>
    %222 = vector.extract_strided_slice %221 {offsets = [0, 0], sizes = [4, 16], strides = [1, 1]} : vector<4x18xbf16> to vector<4x16xbf16>
    %cst_157 = arith.constant dense<0.000000e+00> : vector<8x16xf32>
    %223 = tpu.matmul %16, %222, %cst_157 {dimension_numbers = #tpu.dot_dimension_numbers<[1], [0], [0], [1], [0, 0, 1, 1], [], []>} : vector<8x4xbf16>, vector<4x16xbf16>, vector<8x16xf32> -> vector<8x16xf32>
    %224 = arith.addf %219, %223 : vector<8x16xf32>
    %225 = vector.extract_strided_slice %221 {offsets = [0, 1], sizes = [4, 16], strides = [1, 1]} : vector<4x18xbf16> to vector<4x16xbf16>
    %cst_158 = arith.constant dense<0.000000e+00> : vector<8x16xf32>
    %226 = tpu.matmul %18, %225, %cst_158 {dimension_numbers = #tpu.dot_dimension_numbers<[1], [0], [0], [1], [0, 0, 1, 1], [], []>} : vector<8x4xbf16>, vector<4x16xbf16>, vector<8x16xf32> -> vector<8x16xf32>
    %227 = arith.addf %224, %226 : vector<8x16xf32>
    %228 = vector.extract_strided_slice %221 {offsets = [0, 2], sizes = [4, 16], strides = [1, 1]} : vector<4x18xbf16> to vector<4x16xbf16>
    %cst_159 = arith.constant dense<0.000000e+00> : vector<8x16xf32>
    %229 = tpu.matmul %20, %228, %cst_159 {dimension_numbers = #tpu.dot_dimension_numbers<[1], [0], [0], [1], [0, 0, 1, 1], [], []>} : vector<8x4xbf16>, vector<4x16xbf16>, vector<8x16xf32> -> vector<8x16xf32>
    %230 = arith.addf %227, %229 : vector<8x16xf32>
    %231 = vector.broadcast %0 : vector<8x1xf32> to vector<8x16xf32>
    %232 = arith.addf %230, %231 : vector<8x16xf32>
    %cst_160 = arith.constant 0.000000e+00 : f32
    %233 = vector.broadcast %cst_160 : f32 to vector<8x16xf32>
    %234 = arith.maximumf %232, %233 : vector<8x16xf32>
    %235 = arith.truncf %234 : vector<8x16xf32> to vector<8x16xbf16>
    %c0_161 = arith.constant 0 : index
    %c0_162 = arith.constant 0 : index
    %c4_163 = arith.constant 4 : index
    %c0_164 = arith.constant 0 : index
    %236 = vector.load %arg6[%c0_161, %c0_162, %c4_163, %c0_164] : memref<1x8x8x16xbf16, #tpu.memory_space<vmem>>, vector<1x8x1x16xbf16>
    %237 = vector.shape_cast %236 : vector<1x8x1x16xbf16> to vector<8x16xbf16>
    %238 = vector.shape_cast %235 : vector<8x16xbf16> to vector<1x8x1x16xbf16>
    tpu.vector_store %arg6[%c0_161, %c0_162, %c4_163, %c0_164], %238 {strides = array<i32>} : memref<1x8x8x16xbf16, #tpu.memory_space<vmem>>, vector<1x8x1x16xbf16>,
    %239 = vector.broadcast %2 : vector<8x1xf32> to vector<8x16xf32>
    %240 = arith.subf %234, %239 : vector<8x16xf32>
    %241 = arith.addf %196, %240 : vector<8x16xf32>
    %242 = arith.mulf %240, %240 : vector<8x16xf32>
    %243 = arith.addf %198, %242 : vector<8x16xf32>
    %c0_165 = arith.constant 0 : index
    %c0_166 = arith.constant 0 : index
    %c0_167 = arith.constant 0 : index
    %c5_168 = arith.constant 5 : index
    %c0_169 = arith.constant 0 : index
    %244 = vector.load %arg3[%c0_165, %c0_166, %c0_167, %c5_168, %c0_169] : memref<1x1x4x10x18xbf16, #tpu.memory_space<vmem>>, vector<1x1x4x1x18xbf16>
    %245 = vector.shape_cast %244 : vector<1x1x4x1x18xbf16> to vector<4x18xbf16>
    %246 = vector.extract_strided_slice %245 {offsets = [0, 0], sizes = [4, 16], strides = [1, 1]} : vector<4x18xbf16> to vector<4x16xbf16>
    %cst_170 = arith.constant dense<0.000000e+00> : vector<8x16xf32>
    %247 = tpu.matmul %4, %246, %cst_170 {dimension_numbers = #tpu.dot_dimension_numbers<[1], [0], [0], [1], [0, 0, 1, 1], [], []>} : vector<8x4xbf16>, vector<4x16xbf16>, vector<8x16xf32> -> vector<8x16xf32>
    %248 = vector.extract_strided_slice %245 {offsets = [0, 1], sizes = [4, 16], strides = [1, 1]} : vector<4x18xbf16> to vector<4x16xbf16>
    %cst_171 = arith.constant dense<0.000000e+00> : vector<8x16xf32>
    %249 = tpu.matmul %6, %248, %cst_171 {dimension_numbers = #tpu.dot_dimension_numbers<[1], [0], [0], [1], [0, 0, 1, 1], [], []>} : vector<8x4xbf16>, vector<4x16xbf16>, vector<8x16xf32> -> vector<8x16xf32>
    %250 = arith.addf %247, %249 : vector<8x16xf32>
    %251 = vector.extract_strided_slice %245 {offsets = [0, 2], sizes = [4, 16], strides = [1, 1]} : vector<4x18xbf16> to vector<4x16xbf16>
    %cst_172 = arith.constant dense<0.000000e+00> : vector<8x16xf32>
    %252 = tpu.matmul %8, %251, %cst_172 {dimension_numbers = #tpu.dot_dimension_numbers<[1], [0], [0], [1], [0, 0, 1, 1], [], []>} : vector<8x4xbf16>, vector<4x16xbf16>, vector<8x16xf32> -> vector<8x16xf32>
    %253 = arith.addf %250, %252 : vector<8x16xf32>
    %c0_173 = arith.constant 0 : index
    %c0_174 = arith.constant 0 : index
    %c0_175 = arith.constant 0 : index
    %c6_176 = arith.constant 6 : index
    %c0_177 = arith.constant 0 : index
    %254 = vector.load %arg3[%c0_173, %c0_174, %c0_175, %c6_176, %c0_177] : memref<1x1x4x10x18xbf16, #tpu.memory_space<vmem>>, vector<1x1x4x1x18xbf16>
    %255 = vector.shape_cast %254 : vector<1x1x4x1x18xbf16> to vector<4x18xbf16>
    %256 = vector.extract_strided_slice %255 {offsets = [0, 0], sizes = [4, 16], strides = [1, 1]} : vector<4x18xbf16> to vector<4x16xbf16>
    %cst_178 = arith.constant dense<0.000000e+00> : vector<8x16xf32>
    %257 = tpu.matmul %10, %256, %cst_178 {dimension_numbers = #tpu.dot_dimension_numbers<[1], [0], [0], [1], [0, 0, 1, 1], [], []>} : vector<8x4xbf16>, vector<4x16xbf16>, vector<8x16xf32> -> vector<8x16xf32>
    %258 = arith.addf %253, %257 : vector<8x16xf32>
    %259 = vector.extract_strided_slice %255 {offsets = [0, 1], sizes = [4, 16], strides = [1, 1]} : vector<4x18xbf16> to vector<4x16xbf16>
    %cst_179 = arith.constant dense<0.000000e+00> : vector<8x16xf32>
    %260 = tpu.matmul %12, %259, %cst_179 {dimension_numbers = #tpu.dot_dimension_numbers<[1], [0], [0], [1], [0, 0, 1, 1], [], []>} : vector<8x4xbf16>, vector<4x16xbf16>, vector<8x16xf32> -> vector<8x16xf32>
    %261 = arith.addf %258, %260 : vector<8x16xf32>
    %262 = vector.extract_strided_slice %255 {offsets = [0, 2], sizes = [4, 16], strides = [1, 1]} : vector<4x18xbf16> to vector<4x16xbf16>
    %cst_180 = arith.constant dense<0.000000e+00> : vector<8x16xf32>
    %263 = tpu.matmul %14, %262, %cst_180 {dimension_numbers = #tpu.dot_dimension_numbers<[1], [0], [0], [1], [0, 0, 1, 1], [], []>} : vector<8x4xbf16>, vector<4x16xbf16>, vector<8x16xf32> -> vector<8x16xf32>
    %264 = arith.addf %261, %263 : vector<8x16xf32>
    %c0_181 = arith.constant 0 : index
    %c0_182 = arith.constant 0 : index
    %c0_183 = arith.constant 0 : index
    %c7_184 = arith.constant 7 : index
    %c0_185 = arith.constant 0 : index
    %265 = vector.load %arg3[%c0_181, %c0_182, %c0_183, %c7_184, %c0_185] : memref<1x1x4x10x18xbf16, #tpu.memory_space<vmem>>, vector<1x1x4x1x18xbf16>
    %266 = vector.shape_cast %265 : vector<1x1x4x1x18xbf16> to vector<4x18xbf16>
    %267 = vector.extract_strided_slice %266 {offsets = [0, 0], sizes = [4, 16], strides = [1, 1]} : vector<4x18xbf16> to vector<4x16xbf16>
    %cst_186 = arith.constant dense<0.000000e+00> : vector<8x16xf32>
    %268 = tpu.matmul %16, %267, %cst_186 {dimension_numbers = #tpu.dot_dimension_numbers<[1], [0], [0], [1], [0, 0, 1, 1], [], []>} : vector<8x4xbf16>, vector<4x16xbf16>, vector<8x16xf32> -> vector<8x16xf32>
    %269 = arith.addf %264, %268 : vector<8x16xf32>
    %270 = vector.extract_strided_slice %266 {offsets = [0, 1], sizes = [4, 16], strides = [1, 1]} : vector<4x18xbf16> to vector<4x16xbf16>
    %cst_187 = arith.constant dense<0.000000e+00> : vector<8x16xf32>
    %271 = tpu.matmul %18, %270, %cst_187 {dimension_numbers = #tpu.dot_dimension_numbers<[1], [0], [0], [1], [0, 0, 1, 1], [], []>} : vector<8x4xbf16>, vector<4x16xbf16>, vector<8x16xf32> -> vector<8x16xf32>
    %272 = arith.addf %269, %271 : vector<8x16xf32>
    %273 = vector.extract_strided_slice %266 {offsets = [0, 2], sizes = [4, 16], strides = [1, 1]} : vector<4x18xbf16> to vector<4x16xbf16>
    %cst_188 = arith.constant dense<0.000000e+00> : vector<8x16xf32>
    %274 = tpu.matmul %20, %273, %cst_188 {dimension_numbers = #tpu.dot_dimension_numbers<[1], [0], [0], [1], [0, 0, 1, 1], [], []>} : vector<8x4xbf16>, vector<4x16xbf16>, vector<8x16xf32> -> vector<8x16xf32>
    %275 = arith.addf %272, %274 : vector<8x16xf32>
    %276 = vector.broadcast %0 : vector<8x1xf32> to vector<8x16xf32>
    %277 = arith.addf %275, %276 : vector<8x16xf32>
    %cst_189 = arith.constant 0.000000e+00 : f32
    %278 = vector.broadcast %cst_189 : f32 to vector<8x16xf32>
    %279 = arith.maximumf %277, %278 : vector<8x16xf32>
    %280 = arith.truncf %279 : vector<8x16xf32> to vector<8x16xbf16>
    %c0_190 = arith.constant 0 : index
    %c0_191 = arith.constant 0 : index
    %c5_192 = arith.constant 5 : index
    %c0_193 = arith.constant 0 : index
    %281 = vector.load %arg6[%c0_190, %c0_191, %c5_192, %c0_193] : memref<1x8x8x16xbf16, #tpu.memory_space<vmem>>, vector<1x8x1x16xbf16>
    %282 = vector.shape_cast %281 : vector<1x8x1x16xbf16> to vector<8x16xbf16>
    %283 = vector.shape_cast %280 : vector<8x16xbf16> to vector<1x8x1x16xbf16>
    tpu.vector_store %arg6[%c0_190, %c0_191, %c5_192, %c0_193], %283 {strides = array<i32>} : memref<1x8x8x16xbf16, #tpu.memory_space<vmem>>, vector<1x8x1x16xbf16>,
    %284 = vector.broadcast %2 : vector<8x1xf32> to vector<8x16xf32>
    %285 = arith.subf %279, %284 : vector<8x16xf32>
    %286 = arith.addf %241, %285 : vector<8x16xf32>
    %287 = arith.mulf %285, %285 : vector<8x16xf32>
    %288 = arith.addf %243, %287 : vector<8x16xf32>
    %c0_194 = arith.constant 0 : index
    %c0_195 = arith.constant 0 : index
    %c0_196 = arith.constant 0 : index
    %c6_197 = arith.constant 6 : index
    %c0_198 = arith.constant 0 : index
    %289 = vector.load %arg3[%c0_194, %c0_195, %c0_196, %c6_197, %c0_198] : memref<1x1x4x10x18xbf16, #tpu.memory_space<vmem>>, vector<1x1x4x1x18xbf16>
    %290 = vector.shape_cast %289 : vector<1x1x4x1x18xbf16> to vector<4x18xbf16>
    %291 = vector.extract_strided_slice %290 {offsets = [0, 0], sizes = [4, 16], strides = [1, 1]} : vector<4x18xbf16> to vector<4x16xbf16>
    %cst_199 = arith.constant dense<0.000000e+00> : vector<8x16xf32>
    %292 = tpu.matmul %4, %291, %cst_199 {dimension_numbers = #tpu.dot_dimension_numbers<[1], [0], [0], [1], [0, 0, 1, 1], [], []>} : vector<8x4xbf16>, vector<4x16xbf16>, vector<8x16xf32> -> vector<8x16xf32>
    %293 = vector.extract_strided_slice %290 {offsets = [0, 1], sizes = [4, 16], strides = [1, 1]} : vector<4x18xbf16> to vector<4x16xbf16>
    %cst_200 = arith.constant dense<0.000000e+00> : vector<8x16xf32>
    %294 = tpu.matmul %6, %293, %cst_200 {dimension_numbers = #tpu.dot_dimension_numbers<[1], [0], [0], [1], [0, 0, 1, 1], [], []>} : vector<8x4xbf16>, vector<4x16xbf16>, vector<8x16xf32> -> vector<8x16xf32>
    %295 = arith.addf %292, %294 : vector<8x16xf32>
    %296 = vector.extract_strided_slice %290 {offsets = [0, 2], sizes = [4, 16], strides = [1, 1]} : vector<4x18xbf16> to vector<4x16xbf16>
    %cst_201 = arith.constant dense<0.000000e+00> : vector<8x16xf32>
    %297 = tpu.matmul %8, %296, %cst_201 {dimension_numbers = #tpu.dot_dimension_numbers<[1], [0], [0], [1], [0, 0, 1, 1], [], []>} : vector<8x4xbf16>, vector<4x16xbf16>, vector<8x16xf32> -> vector<8x16xf32>
    %298 = arith.addf %295, %297 : vector<8x16xf32>
    %c0_202 = arith.constant 0 : index
    %c0_203 = arith.constant 0 : index
    %c0_204 = arith.constant 0 : index
    %c7_205 = arith.constant 7 : index
    %c0_206 = arith.constant 0 : index
    %299 = vector.load %arg3[%c0_202, %c0_203, %c0_204, %c7_205, %c0_206] : memref<1x1x4x10x18xbf16, #tpu.memory_space<vmem>>, vector<1x1x4x1x18xbf16>
    %300 = vector.shape_cast %299 : vector<1x1x4x1x18xbf16> to vector<4x18xbf16>
    %301 = vector.extract_strided_slice %300 {offsets = [0, 0], sizes = [4, 16], strides = [1, 1]} : vector<4x18xbf16> to vector<4x16xbf16>
    %cst_207 = arith.constant dense<0.000000e+00> : vector<8x16xf32>
    %302 = tpu.matmul %10, %301, %cst_207 {dimension_numbers = #tpu.dot_dimension_numbers<[1], [0], [0], [1], [0, 0, 1, 1], [], []>} : vector<8x4xbf16>, vector<4x16xbf16>, vector<8x16xf32> -> vector<8x16xf32>
    %303 = arith.addf %298, %302 : vector<8x16xf32>
    %304 = vector.extract_strided_slice %300 {offsets = [0, 1], sizes = [4, 16], strides = [1, 1]} : vector<4x18xbf16> to vector<4x16xbf16>
    %cst_208 = arith.constant dense<0.000000e+00> : vector<8x16xf32>
    %305 = tpu.matmul %12, %304, %cst_208 {dimension_numbers = #tpu.dot_dimension_numbers<[1], [0], [0], [1], [0, 0, 1, 1], [], []>} : vector<8x4xbf16>, vector<4x16xbf16>, vector<8x16xf32> -> vector<8x16xf32>
    %306 = arith.addf %303, %305 : vector<8x16xf32>
    %307 = vector.extract_strided_slice %300 {offsets = [0, 2], sizes = [4, 16], strides = [1, 1]} : vector<4x18xbf16> to vector<4x16xbf16>
    %cst_209 = arith.constant dense<0.000000e+00> : vector<8x16xf32>
    %308 = tpu.matmul %14, %307, %cst_209 {dimension_numbers = #tpu.dot_dimension_numbers<[1], [0], [0], [1], [0, 0, 1, 1], [], []>} : vector<8x4xbf16>, vector<4x16xbf16>, vector<8x16xf32> -> vector<8x16xf32>
    %309 = arith.addf %306, %308 : vector<8x16xf32>
    %c0_210 = arith.constant 0 : index
    %c0_211 = arith.constant 0 : index
    %c0_212 = arith.constant 0 : index
    %c8_213 = arith.constant 8 : index
    %c0_214 = arith.constant 0 : index
    %310 = vector.load %arg3[%c0_210, %c0_211, %c0_212, %c8_213, %c0_214] : memref<1x1x4x10x18xbf16, #tpu.memory_space<vmem>>, vector<1x1x4x1x18xbf16>
    %311 = vector.shape_cast %310 : vector<1x1x4x1x18xbf16> to vector<4x18xbf16>
    %312 = vector.extract_strided_slice %311 {offsets = [0, 0], sizes = [4, 16], strides = [1, 1]} : vector<4x18xbf16> to vector<4x16xbf16>
    %cst_215 = arith.constant dense<0.000000e+00> : vector<8x16xf32>
    %313 = tpu.matmul %16, %312, %cst_215 {dimension_numbers = #tpu.dot_dimension_numbers<[1], [0], [0], [1], [0, 0, 1, 1], [], []>} : vector<8x4xbf16>, vector<4x16xbf16>, vector<8x16xf32> -> vector<8x16xf32>
    %314 = arith.addf %309, %313 : vector<8x16xf32>
    %315 = vector.extract_strided_slice %311 {offsets = [0, 1], sizes = [4, 16], strides = [1, 1]} : vector<4x18xbf16> to vector<4x16xbf16>
    %cst_216 = arith.constant dense<0.000000e+00> : vector<8x16xf32>
    %316 = tpu.matmul %18, %315, %cst_216 {dimension_numbers = #tpu.dot_dimension_numbers<[1], [0], [0], [1], [0, 0, 1, 1], [], []>} : vector<8x4xbf16>, vector<4x16xbf16>, vector<8x16xf32> -> vector<8x16xf32>
    %317 = arith.addf %314, %316 : vector<8x16xf32>
    %318 = vector.extract_strided_slice %311 {offsets = [0, 2], sizes = [4, 16], strides = [1, 1]} : vector<4x18xbf16> to vector<4x16xbf16>
    %cst_217 = arith.constant dense<0.000000e+00> : vector<8x16xf32>
    %319 = tpu.matmul %20, %318, %cst_217 {dimension_numbers = #tpu.dot_dimension_numbers<[1], [0], [0], [1], [0, 0, 1, 1], [], []>} : vector<8x4xbf16>, vector<4x16xbf16>, vector<8x16xf32> -> vector<8x16xf32>
    %320 = arith.addf %317, %319 : vector<8x16xf32>
    %321 = vector.broadcast %0 : vector<8x1xf32> to vector<8x16xf32>
    %322 = arith.addf %320, %321 : vector<8x16xf32>
    %cst_218 = arith.constant 0.000000e+00 : f32
    %323 = vector.broadcast %cst_218 : f32 to vector<8x16xf32>
    %324 = arith.maximumf %322, %323 : vector<8x16xf32>
    %325 = arith.truncf %324 : vector<8x16xf32> to vector<8x16xbf16>
    %c0_219 = arith.constant 0 : index
    %c0_220 = arith.constant 0 : index
    %c6_221 = arith.constant 6 : index
    %c0_222 = arith.constant 0 : index
    %326 = vector.load %arg6[%c0_219, %c0_220, %c6_221, %c0_222] : memref<1x8x8x16xbf16, #tpu.memory_space<vmem>>, vector<1x8x1x16xbf16>
    %327 = vector.shape_cast %326 : vector<1x8x1x16xbf16> to vector<8x16xbf16>
    %328 = vector.shape_cast %325 : vector<8x16xbf16> to vector<1x8x1x16xbf16>
    tpu.vector_store %arg6[%c0_219, %c0_220, %c6_221, %c0_222], %328 {strides = array<i32>} : memref<1x8x8x16xbf16, #tpu.memory_space<vmem>>, vector<1x8x1x16xbf16>,
    %329 = vector.broadcast %2 : vector<8x1xf32> to vector<8x16xf32>
    %330 = arith.subf %324, %329 : vector<8x16xf32>
    %331 = arith.addf %286, %330 : vector<8x16xf32>
    %332 = arith.mulf %330, %330 : vector<8x16xf32>
    %333 = arith.addf %288, %332 : vector<8x16xf32>
    %c0_223 = arith.constant 0 : index
    %c0_224 = arith.constant 0 : index
    %c0_225 = arith.constant 0 : index
    %c7_226 = arith.constant 7 : index
    %c0_227 = arith.constant 0 : index
    %334 = vector.load %arg3[%c0_223, %c0_224, %c0_225, %c7_226, %c0_227] : memref<1x1x4x10x18xbf16, #tpu.memory_space<vmem>>, vector<1x1x4x1x18xbf16>
    %335 = vector.shape_cast %334 : vector<1x1x4x1x18xbf16> to vector<4x18xbf16>
    %336 = vector.extract_strided_slice %335 {offsets = [0, 0], sizes = [4, 16], strides = [1, 1]} : vector<4x18xbf16> to vector<4x16xbf16>
    %cst_228 = arith.constant dense<0.000000e+00> : vector<8x16xf32>
    %337 = tpu.matmul %4, %336, %cst_228 {dimension_numbers = #tpu.dot_dimension_numbers<[1], [0], [0], [1], [0, 0, 1, 1], [], []>} : vector<8x4xbf16>, vector<4x16xbf16>, vector<8x16xf32> -> vector<8x16xf32>
    %338 = vector.extract_strided_slice %335 {offsets = [0, 1], sizes = [4, 16], strides = [1, 1]} : vector<4x18xbf16> to vector<4x16xbf16>
    %cst_229 = arith.constant dense<0.000000e+00> : vector<8x16xf32>
    %339 = tpu.matmul %6, %338, %cst_229 {dimension_numbers = #tpu.dot_dimension_numbers<[1], [0], [0], [1], [0, 0, 1, 1], [], []>} : vector<8x4xbf16>, vector<4x16xbf16>, vector<8x16xf32> -> vector<8x16xf32>
    %340 = arith.addf %337, %339 : vector<8x16xf32>
    %341 = vector.extract_strided_slice %335 {offsets = [0, 2], sizes = [4, 16], strides = [1, 1]} : vector<4x18xbf16> to vector<4x16xbf16>
    %cst_230 = arith.constant dense<0.000000e+00> : vector<8x16xf32>
    %342 = tpu.matmul %8, %341, %cst_230 {dimension_numbers = #tpu.dot_dimension_numbers<[1], [0], [0], [1], [0, 0, 1, 1], [], []>} : vector<8x4xbf16>, vector<4x16xbf16>, vector<8x16xf32> -> vector<8x16xf32>
    %343 = arith.addf %340, %342 : vector<8x16xf32>
    %c0_231 = arith.constant 0 : index
    %c0_232 = arith.constant 0 : index
    %c0_233 = arith.constant 0 : index
    %c8_234 = arith.constant 8 : index
    %c0_235 = arith.constant 0 : index
    %344 = vector.load %arg3[%c0_231, %c0_232, %c0_233, %c8_234, %c0_235] : memref<1x1x4x10x18xbf16, #tpu.memory_space<vmem>>, vector<1x1x4x1x18xbf16>
    %345 = vector.shape_cast %344 : vector<1x1x4x1x18xbf16> to vector<4x18xbf16>
    %346 = vector.extract_strided_slice %345 {offsets = [0, 0], sizes = [4, 16], strides = [1, 1]} : vector<4x18xbf16> to vector<4x16xbf16>
    %cst_236 = arith.constant dense<0.000000e+00> : vector<8x16xf32>
    %347 = tpu.matmul %10, %346, %cst_236 {dimension_numbers = #tpu.dot_dimension_numbers<[1], [0], [0], [1], [0, 0, 1, 1], [], []>} : vector<8x4xbf16>, vector<4x16xbf16>, vector<8x16xf32> -> vector<8x16xf32>
    %348 = arith.addf %343, %347 : vector<8x16xf32>
    %349 = vector.extract_strided_slice %345 {offsets = [0, 1], sizes = [4, 16], strides = [1, 1]} : vector<4x18xbf16> to vector<4x16xbf16>
    %cst_237 = arith.constant dense<0.000000e+00> : vector<8x16xf32>
    %350 = tpu.matmul %12, %349, %cst_237 {dimension_numbers = #tpu.dot_dimension_numbers<[1], [0], [0], [1], [0, 0, 1, 1], [], []>} : vector<8x4xbf16>, vector<4x16xbf16>, vector<8x16xf32> -> vector<8x16xf32>
    %351 = arith.addf %348, %350 : vector<8x16xf32>
    %352 = vector.extract_strided_slice %345 {offsets = [0, 2], sizes = [4, 16], strides = [1, 1]} : vector<4x18xbf16> to vector<4x16xbf16>
    %cst_238 = arith.constant dense<0.000000e+00> : vector<8x16xf32>
    %353 = tpu.matmul %14, %352, %cst_238 {dimension_numbers = #tpu.dot_dimension_numbers<[1], [0], [0], [1], [0, 0, 1, 1], [], []>} : vector<8x4xbf16>, vector<4x16xbf16>, vector<8x16xf32> -> vector<8x16xf32>
    %354 = arith.addf %351, %353 : vector<8x16xf32>
    %c0_239 = arith.constant 0 : index
    %c0_240 = arith.constant 0 : index
    %c0_241 = arith.constant 0 : index
    %c9 = arith.constant 9 : index
    %c0_242 = arith.constant 0 : index
    %355 = vector.load %arg3[%c0_239, %c0_240, %c0_241, %c9, %c0_242] : memref<1x1x4x10x18xbf16, #tpu.memory_space<vmem>>, vector<1x1x4x1x18xbf16>
    %356 = vector.shape_cast %355 : vector<1x1x4x1x18xbf16> to vector<4x18xbf16>
    %357 = vector.extract_strided_slice %356 {offsets = [0, 0], sizes = [4, 16], strides = [1, 1]} : vector<4x18xbf16> to vector<4x16xbf16>
    %cst_243 = arith.constant dense<0.000000e+00> : vector<8x16xf32>
    %358 = tpu.matmul %16, %357, %cst_243 {dimension_numbers = #tpu.dot_dimension_numbers<[1], [0], [0], [1], [0, 0, 1, 1], [], []>} : vector<8x4xbf16>, vector<4x16xbf16>, vector<8x16xf32> -> vector<8x16xf32>
    %359 = arith.addf %354, %358 : vector<8x16xf32>
    %360 = vector.extract_strided_slice %356 {offsets = [0, 1], sizes = [4, 16], strides = [1, 1]} : vector<4x18xbf16> to vector<4x16xbf16>
    %cst_244 = arith.constant dense<0.000000e+00> : vector<8x16xf32>
    %361 = tpu.matmul %18, %360, %cst_244 {dimension_numbers = #tpu.dot_dimension_numbers<[1], [0], [0], [1], [0, 0, 1, 1], [], []>} : vector<8x4xbf16>, vector<4x16xbf16>, vector<8x16xf32> -> vector<8x16xf32>
    %362 = arith.addf %359, %361 : vector<8x16xf32>
    %363 = vector.extract_strided_slice %356 {offsets = [0, 2], sizes = [4, 16], strides = [1, 1]} : vector<4x18xbf16> to vector<4x16xbf16>
    %cst_245 = arith.constant dense<0.000000e+00> : vector<8x16xf32>
    %364 = tpu.matmul %20, %363, %cst_245 {dimension_numbers = #tpu.dot_dimension_numbers<[1], [0], [0], [1], [0, 0, 1, 1], [], []>} : vector<8x4xbf16>, vector<4x16xbf16>, vector<8x16xf32> -> vector<8x16xf32>
    %365 = arith.addf %362, %364 : vector<8x16xf32>
    %366 = vector.broadcast %0 : vector<8x1xf32> to vector<8x16xf32>
    %367 = arith.addf %365, %366 : vector<8x16xf32>
    %cst_246 = arith.constant 0.000000e+00 : f32
    %368 = vector.broadcast %cst_246 : f32 to vector<8x16xf32>
    %369 = arith.maximumf %367, %368 : vector<8x16xf32>
    %370 = arith.truncf %369 : vector<8x16xf32> to vector<8x16xbf16>
    %c0_247 = arith.constant 0 : index
    %c0_248 = arith.constant 0 : index
    %c7_249 = arith.constant 7 : index
    %c0_250 = arith.constant 0 : index
    %371 = vector.load %arg6[%c0_247, %c0_248, %c7_249, %c0_250] : memref<1x8x8x16xbf16, #tpu.memory_space<vmem>>, vector<1x8x1x16xbf16>
    %372 = vector.shape_cast %371 : vector<1x8x1x16xbf16> to vector<8x16xbf16>
    %373 = vector.shape_cast %370 : vector<8x16xbf16> to vector<1x8x1x16xbf16>
    tpu.vector_store %arg6[%c0_247, %c0_248, %c7_249, %c0_250], %373 {strides = array<i32>} : memref<1x8x8x16xbf16, #tpu.memory_space<vmem>>, vector<1x8x1x16xbf16>,
    %374 = vector.broadcast %2 : vector<8x1xf32> to vector<8x16xf32>
    %375 = arith.subf %369, %374 : vector<8x16xf32>
    %376 = arith.addf %331, %375 : vector<8x16xf32>
    %377 = arith.mulf %375, %375 : vector<8x16xf32>
    %378 = arith.addf %333, %377 : vector<8x16xf32>
    %cst_251 = arith.constant dense<0.000000e+00> : vector<8xf32>
    %379 = vector.multi_reduction <add>, %376, %cst_251 [1] : vector<8x16xf32> to vector<8xf32>
    %380 = vector.shape_cast %379 : vector<8xf32> to vector<1x8xf32>
    %c0_252 = arith.constant 0 : index
    %c0_253 = arith.constant 0 : index
    %c0_254 = arith.constant 0 : index
    %c0_255 = arith.constant 0 : index
    %c0_256 = arith.constant 0 : index
    %381 = vector.load %arg7[%c0_252, %c0_253, %c0_254, %c0_255, %c0_256] : memref<1x1x1x1x8xf32, #tpu.memory_space<vmem>>, vector<1x1x1x1x8xf32>
    %382 = vector.shape_cast %381 : vector<1x1x1x1x8xf32> to vector<1x8xf32>
    %383 = vector.shape_cast %380 : vector<1x8xf32> to vector<1x1x1x1x8xf32>
    tpu.vector_store %arg7[%c0_252, %c0_253, %c0_254, %c0_255, %c0_256], %383 {strides = array<i32>} : memref<1x1x1x1x8xf32, #tpu.memory_space<vmem>>, vector<1x1x1x1x8xf32>,
    %cst_257 = arith.constant dense<0.000000e+00> : vector<8xf32>
    %384 = vector.multi_reduction <add>, %378, %cst_257 [1] : vector<8x16xf32> to vector<8xf32>
    %385 = vector.shape_cast %384 : vector<8xf32> to vector<1x8xf32>
    %c0_258 = arith.constant 0 : index
    %c0_259 = arith.constant 0 : index
    %c0_260 = arith.constant 0 : index
    %c0_261 = arith.constant 0 : index
    %c0_262 = arith.constant 0 : index
    %386 = vector.load %arg8[%c0_258, %c0_259, %c0_260, %c0_261, %c0_262] : memref<1x1x1x1x8xf32, #tpu.memory_space<vmem>>, vector<1x1x1x1x8xf32>
    %387 = vector.shape_cast %386 : vector<1x1x1x1x8xf32> to vector<1x8xf32>
    %388 = vector.shape_cast %385 : vector<1x8xf32> to vector<1x1x1x1x8xf32>
    tpu.vector_store %arg8[%c0_258, %c0_259, %c0_260, %c0_261, %c0_262], %388 {strides = array<i32>} : memref<1x1x1x1x8xf32, #tpu.memory_space<vmem>>, vector<1x1x1x1x8xf32>,
    return
  }
  func.func @transform_0(%arg0: i32, %arg1: i32, %arg2: i32) -> (i32, i32, i32, i32, i32) {
    %c0_i32 = arith.constant 0 : i32
    %c0_i32_0 = arith.constant 0 : i32
    %c0_i32_1 = arith.constant 0 : i32
    %c0_i32_2 = arith.constant 0 : i32
    return %arg0, %arg1, %c0_i32, %c0_i32_0, %c0_i32_1 : i32, i32, i32, i32, i32
  }
  func.func @transform_1(%arg0: i32, %arg1: i32, %arg2: i32) -> (i32, i32, i32) {
    %c0_i32 = arith.constant 0 : i32
    %c0_i32_0 = arith.constant 0 : i32
    %c0_i32_1 = arith.constant 0 : i32
    return %c0_i32, %arg2, %c0_i32_0 : i32, i32, i32
  }
  func.func @transform_2(%arg0: i32, %arg1: i32, %arg2: i32) -> (i32, i32) {
    %c0_i32 = arith.constant 0 : i32
    %c0_i32_0 = arith.constant 0 : i32
    return %arg2, %c0_i32 : i32, i32
  }
  func.func @transform_3(%arg0: i32, %arg1: i32, %arg2: i32) -> (i32, i32, i32, i32) {
    %c0_i32 = arith.constant 0 : i32
    %c0_i32_0 = arith.constant 0 : i32
    return %arg0, %arg2, %arg1, %c0_i32 : i32, i32, i32, i32
  }
  func.func @transform_4(%arg0: i32, %arg1: i32, %arg2: i32) -> (i32, i32, i32, i32, i32) {
    %c0_i32 = arith.constant 0 : i32
    %c0_i32_0 = arith.constant 0 : i32
    %c0_i32_1 = arith.constant 0 : i32
    return %arg0, %arg1, %arg2, %c0_i32, %c0_i32_0 : i32, i32, i32, i32, i32
  }
  func.func @transform_5(%arg0: i32, %arg1: i32, %arg2: i32) -> (i32, i32, i32, i32, i32) {
    %c0_i32 = arith.constant 0 : i32
    %c0_i32_0 = arith.constant 0 : i32
    %c0_i32_1 = arith.constant 0 : i32
    return %arg0, %arg1, %arg2, %c0_i32, %c0_i32_0 : i32, i32, i32, i32, i32
  }
}

module attributes {stable_mosaic.version = 11 : i64} {
  func.func @_bn_apply_kernel(%arg0: i32, %arg1: i32, %arg2: i32, %arg3: memref<1x8x8x16xbf16, #tpu.memory_space<vmem>>, %arg4: memref<8x1x1xf32, #tpu.memory_space<vmem>>, %arg5: memref<8x1x1xf32, #tpu.memory_space<vmem>>, %arg6: memref<1x8x8x16xf32, #tpu.memory_space<vmem>>) attributes {dimension_semantics = [#tpu.dimension_semantics<parallel>, #tpu.dimension_semantics<parallel>, #tpu.dimension_semantics<parallel>], iteration_bounds = array<i64: 2, 2, 1>, scalar_prefetch = 0 : i64, scratch_operands = 0 : i64, tpu.core_type = #tpu.core_type<tc>, window_params = [{transform_indices = @transform_0, window_bounds = array<i64: 1, 8, 8, 16>}, {transform_indices = @transform_1, window_bounds = array<i64: 8, 1, 1>}, {transform_indices = @transform_2, window_bounds = array<i64: 8, 1, 1>}, {transform_indices = @transform_3, window_bounds = array<i64: 1, 8, 8, 16>}]} {
    %c0 = arith.constant 0 : index
    %c0_0 = arith.constant 0 : index
    %c0_1 = arith.constant 0 : index
    %c0_2 = arith.constant 0 : index
    %0 = vector.load %arg3[%c0, %c0_0, %c0_1, %c0_2] : memref<1x8x8x16xbf16, #tpu.memory_space<vmem>>, vector<1x8x8x16xbf16>
    %1 = vector.shape_cast %0 : vector<1x8x8x16xbf16> to vector<8x8x16xbf16>
    %2 = arith.extf %1 : vector<8x8x16xbf16> to vector<8x8x16xf32>
    %c0_3 = arith.constant 0 : index
    %c0_4 = arith.constant 0 : index
    %c0_5 = arith.constant 0 : index
    %3 = vector.load %arg4[%c0_3, %c0_4, %c0_5] : memref<8x1x1xf32, #tpu.memory_space<vmem>>, vector<8x1x1xf32>
    %4 = vector.broadcast %3 : vector<8x1x1xf32> to vector<8x8x16xf32>
    %5 = arith.mulf %2, %4 : vector<8x8x16xf32>
    %c0_6 = arith.constant 0 : index
    %c0_7 = arith.constant 0 : index
    %c0_8 = arith.constant 0 : index
    %6 = vector.load %arg5[%c0_6, %c0_7, %c0_8] : memref<8x1x1xf32, #tpu.memory_space<vmem>>, vector<8x1x1xf32>
    %7 = vector.broadcast %6 : vector<8x1x1xf32> to vector<8x8x16xf32>
    %8 = arith.addf %5, %7 : vector<8x8x16xf32>
    %c0_9 = arith.constant 0 : index
    %c0_10 = arith.constant 0 : index
    %c0_11 = arith.constant 0 : index
    %c0_12 = arith.constant 0 : index
    %9 = vector.load %arg6[%c0_9, %c0_10, %c0_11, %c0_12] : memref<1x8x8x16xf32, #tpu.memory_space<vmem>>, vector<1x8x8x16xf32>
    %10 = vector.shape_cast %9 : vector<1x8x8x16xf32> to vector<8x8x16xf32>
    %11 = vector.shape_cast %8 : vector<8x8x16xf32> to vector<1x8x8x16xf32>
    tpu.vector_store %arg6[%c0_9, %c0_10, %c0_11, %c0_12], %11 {strides = array<i32>} : memref<1x8x8x16xf32, #tpu.memory_space<vmem>>, vector<1x8x8x16xf32>,
    return
  }
  func.func @transform_0(%arg0: i32, %arg1: i32, %arg2: i32) -> (i32, i32, i32, i32) {
    %c0_i32 = arith.constant 0 : i32
    %c0_i32_0 = arith.constant 0 : i32
    return %arg0, %arg2, %arg1, %c0_i32 : i32, i32, i32, i32
  }
  func.func @transform_1(%arg0: i32, %arg1: i32, %arg2: i32) -> (i32, i32, i32) {
    %c0_i32 = arith.constant 0 : i32
    %c0_i32_0 = arith.constant 0 : i32
    %c0_i32_1 = arith.constant 0 : i32
    return %arg2, %c0_i32, %c0_i32_0 : i32, i32, i32
  }
  func.func @transform_2(%arg0: i32, %arg1: i32, %arg2: i32) -> (i32, i32, i32) {
    %c0_i32 = arith.constant 0 : i32
    %c0_i32_0 = arith.constant 0 : i32
    %c0_i32_1 = arith.constant 0 : i32
    return %arg2, %c0_i32, %c0_i32_0 : i32, i32, i32
  }
  func.func @transform_3(%arg0: i32, %arg1: i32, %arg2: i32) -> (i32, i32, i32, i32) {
    %c0_i32 = arith.constant 0 : i32
    %c0_i32_0 = arith.constant 0 : i32
    return %arg0, %arg2, %arg1, %c0_i32 : i32, i32, i32, i32
  }
}

</mosaic_0001>

<llo_original>
// kernel: crb2d_forward.3
$region0: #{crb2d_forward.3}
  #allocation0 [shape = 'u32[]', space=smem, size = 0x4, offset = 0x4, fixed_abs, tag = 'smem constant byte address 0x4 - core index']
  #allocation1 [shape = 'u32[72,128]{1,0:T(1,128)}', space=vmem, size = 0x9000, scoped, tag = 'internal scratch']
  %s0 = inlined_call_operand.vmem [shape: bf16[2,8,16,16], index: 0, kind: input, shape index: {}]
  %s1 = inlined_call_operand.vmem [shape: f32[8,1,1], index: 1, kind: input, shape index: {}]
  %s2 = inlined_call_operand.vmem [shape: f32[8,1,1], index: 2, kind: input, shape index: {}]
  %s3 = inlined_call_operand.hbm [shape: f32[2,8,16,16], index: 3, kind: output, shape index: {}]
  %s4 = sld [smem:[#allocation0]]
  $region86: #{crb2d_forward.3} parent=0
    _
  %s6 = ssub.s32 1, %s4
  %s7 = scalar_select 0, %s6, %s4
  $region1: #{crb2d_forward.3} parent=0
    #allocation2 [shape = 'u8[32768]{0}', space=vmem, size = 0x8000, scoped, tag = 'input window, operand 0']
    #allocation3 [shape = 'u8[65536]{0}', space=vmem, size = 0x10000, scoped, tag = 'output window, operand 0']
    #allocation4 [shape = 's32[2]{0}', space=sflag, size = 0x8, scoped, tag = 'scoped memory for crb2d_forward.3']
    %8 = vsyncpa [#allocation4], 0
    %s9 = scalar_lea.sflag [#allocation4], 1
    %10 = vsyncpa %s9, 0
    loop: start=0, step=1, limit=6
    $region2: #{crb2d_forward.3} parent=1 // loop_pre_header
      _
    $region3: #{crb2d_forward.3} parent=1 // loop_header
      %s12 = sphi 0, %s16
      %p13 = scmp.ge.s32.totalorder %s12, 6
      %s19 = sphi 0, %s38
      %s20 = sphi 0, %s34
      %s21 = sphi 0, %s30
      %s22 = sphi 0, %s19
      %s23 = sphi 0, %s20
      %s24 = sphi 0, %s21
      %s25 = sphi 0, %s22
      %s26 = sphi 0, %s23
      %s27 = sphi 0, %s24
      %s45 = sphi 0, %s47
      %s48 = sphi 0, %s45
      %s49 = sphi 0, %s48
      %s65 = sphi 0, %s49
      %s71 = sphi 0, %s73
      %s74 = sphi 0, %s71
      %s75 = sphi 0, %s74
      %s91 = sphi 0, %s75
      %s97 = sphi 0, %s99
      %s100 = sphi 0, %s97
      %s101 = sphi 0, %s100
      %s117 = sphi 0, %s101
      %s127 = sphi 0, %s129
      %s130 = sphi 0, %s127
      %s131 = sphi 0, %s130
      %s147 = sphi 0, %s131
    $region4: #{crb2d_forward.3} parent=1 // loop_header_branch
      %15 = sbr.rel (%p13) target = $region8
    $region5: #{crb2d_forward.3} parent=1 // loop_body
      %s17 = ssub.s32 %s12, 1
      %s18 = ssub.s32 %s12, 2
      %s28 = sadd.s32 1, %s21
      %p29 = scmp.ge.s32.totalorder %s28, 1
      %s30 = scalar_select %p29, 0, %s28
      %s31 = sadd.s32 1, %s20
      %s32 = scalar_select %p29, %s31, %s20
      %p33 = scmp.ge.s32.totalorder %s32, 2
      %s34 = scalar_select %p33, 0, %s32
      %s35 = sadd.s32 1, %s19
      %s36 = scalar_select %p33, %s35, %s19
      %p37 = scmp.ge.s32.totalorder %s36, 2
      %s38 = scalar_select %p37, 0, %s36
      %s39 = ssub.s32 %s19, %s38
      %s40 = ssub.s32 %s21, %s30
      %s41 = sor.u32 %s39, %s40
      %s42 = ssub.s32 %s20, %s34
      %s43 = sor.u32 %s41, %s42
      %p44 = scmp.eq.s32.totalorder %s43, 0
      %s46 = sadd.s32 %s45, 1
      %s47 = scalar_select %p44, %s45, %s46
      %p50 = pneg %p44
      %p51 = scmp.eq.s32.totalorder %s12, 3
      %p52 = por %p50, %p51
      %p53 = scmp.ne.s32.totalorder %s45, %s48
      %p54 = scmp.eq.s32.totalorder %s12, 0
      %p55 = por %p53, %p54
      %p56 = scmp.ne.s32.totalorder %s45, %s48
      %p57 = scmp.eq.s32.totalorder %s17, 3
      %p58 = por %p56, %p57
      %p59 = scmp.ne.s32.totalorder %s48, %s49
      %p60 = scmp.eq.s32.totalorder %s17, 0
      %p61 = por %p59, %p60
      %p62 = scmp.ne.s32.totalorder %s48, %s49
      %p63 = scmp.eq.s32.totalorder %s18, 3
      %p64 = por %p62, %p63
      %p66 = scmp.ne.s32.totalorder %s49, %s65
      %p67 = scmp.eq.s32.totalorder %s18, 0
      %p68 = por %p66, %p67
      %s69 = ssub.s32 %s21, %s30
      %p70 = scmp.eq.s32.totalorder %s69, 0
      %s72 = sadd.s32 %s71, 1
      %s73 = scalar_select %p70, %s71, %s72
      %p76 = pneg %p70
      %p77 = scmp.eq.s32.totalorder %s12, 3
      %p78 = por %p76, %p77
      %p79 = scmp.ne.s32.totalorder %s71, %s74
      %p80 = scmp.eq.s32.totalorder %s12, 0
      %p81 = por %p79, %p80
      %p82 = scmp.ne.s32.totalorder %s71, %s74
      %p83 = scmp.eq.s32.totalorder %s17, 3
      %p84 = por %p82, %p83
      %p85 = scmp.ne.s32.totalorder %s74, %s75
      %p86 = scmp.eq.s32.totalorder %s17, 0
      %p87 = por %p85, %p86
      %p88 = scmp.ne.s32.totalorder %s74, %s75
      %p89 = scmp.eq.s32.totalorder %s18, 3
      %p90 = por %p88, %p89
      %p92 = scmp.ne.s32.totalorder %s75, %s91
      %p93 = scmp.eq.s32.totalorder %s18, 0
      %p94 = por %p92, %p93
      %s95 = ssub.s32 %s21, %s30
      %p96 = scmp.eq.s32.totalorder %s95, 0
      %s98 = sadd.s32 %s97, 1
      %s99 = scalar_select %p96, %s97, %s98
      %p102 = pneg %p96
      %p103 = scmp.eq.s32.totalorder %s12, 3
      %p104 = por %p102, %p103
      %p105 = scmp.ne.s32.totalorder %s97, %s100
      %p106 = scmp.eq.s32.totalorder %s12, 0
      %p107 = por %p105, %p106
      %p108 = scmp.ne.s32.totalorder %s97, %s100
      %p109 = scmp.eq.s32.totalorder %s17, 3
      %p110 = por %p108, %p109
      %p111 = scmp.ne.s32.totalorder %s100, %s101
      %p112 = scmp.eq.s32.totalorder %s17, 0
      %p113 = por %p111, %p112
      %p114 = scmp.ne.s32.totalorder %s100, %s101
      %p115 = scmp.eq.s32.totalorder %s18, 3
      %p116 = por %p114, %p115
      %p118 = scmp.ne.s32.totalorder %s101, %s117
      %p119 = scmp.eq.s32.totalorder %s18, 0
      %p120 = por %p118, %p119
      %s121 = ssub.s32 %s19, %s38
      %s122 = ssub.s32 %s21, %s30
      %s123 = sor.u32 %s121, %s122
      %s124 = ssub.s32 %s20, %s34
      %s125 = sor.u32 %s123, %s124
      %p126 = scmp.eq.s32.totalorder %s125, 0
      %s128 = sadd.s32 %s127, 1
      %s129 = scalar_select %p126, %s127, %s128
      %p132 = pneg %p126
      %p133 = scmp.eq.s32.totalorder %s12, 3
      %p134 = por %p132, %p133
      %p135 = scmp.ne.s32.totalorder %s127, %s130
      %p136 = scmp.eq.s32.totalorder %s12, 0
      %p137 = por %p135, %p136
      %p138 = scmp.ne.s32.totalorder %s127, %s130
      %p139 = scmp.eq.s32.totalorder %s17, 3
      %p140 = por %p138, %p139
      %p141 = scmp.ne.s32.totalorder %s130, %s131
      %p142 = scmp.eq.s32.totalorder %s17, 0
      %p143 = por %p141, %p142
      %p144 = scmp.ne.s32.totalorder %s130, %s131
      %p145 = scmp.eq.s32.totalorder %s18, 3
      %p146 = por %p144, %p145
      %p148 = scmp.ne.s32.totalorder %s131, %s147
      %p149 = scmp.eq.s32.totalorder %s18, 0
      %p150 = por %p148, %p149
      %p151 = scmp.le.s32.totalorder 1, %s12
      %p152 = scmp.lt.s32.totalorder %s12, 5
      %p153 = pnand %p151, %p152
      %p154 = pneg %p153
      // Predicated region
      $region9: #{crb2d_forward.3} parent=5 // pred_check
        _
      $region10: #{crb2d_forward.3} parent=5 // pred_check_branch
        %156 = sbr.rel (%p153) target = $region12
      $region11: #{crb2d_forward.3} parent=5 // pred_region
        %s157 = ssub.s32 %s12, 1
        // Predicated region
        $region13: #{crb2d_forward.3} parent=11 // pred_check
          %p158 = pneg %p87
        $region14: #{crb2d_forward.3} parent=11 // pred_check_branch
          %160 = sbr.rel (%p158) target = $region16
        $region15: #{crb2d_forward.3} parent=11 // pred_region
          %s161 = smul.u32 8, %s24
          %p162 = scmp.lt.s32.totalorder %s161, 7
          %s163 = scalar_select %p162, %s161, 7
          %s164 = scalar_lea.vmem %s1, %s163
          %s165 = smul.u32 8, %s24
        $region16: #{crb2d_forward.3} parent=11 // pred_fallthru
          _
        // Predicated region
        $region17: #{crb2d_forward.3} parent=11 // pred_check
          %p166 = pneg %p113
        $region18: #{crb2d_forward.3} parent=11 // pred_check_branch
          %168 = sbr.rel (%p166) target = $region20
        $region19: #{crb2d_forward.3} parent=11 // pred_region
          %s169 = smul.u32 8, %s24
          %p170 = scmp.lt.s32.totalorder %s169, 7
          %s171 = scalar_select %p170, %s169, 7
          %s172 = scalar_lea.vmem %s2, %s171
          %s173 = smul.u32 8, %s24
        $region20: #{crb2d_forward.3} parent=11 // pred_fallthru
          _
      $region12: #{crb2d_forward.3} parent=5 // pred_fallthru
        _
      %p174 = scmp.lt.s32.totalorder %s12, 4
      // Predicated region
      $region21: #{crb2d_forward.3} parent=5 // pred_check
        %p175 = pneg %p174
      $region22: #{crb2d_forward.3} parent=5 // pred_check_branch
        %177 = sbr.rel (%p175) target = $region24
      $region23: #{crb2d_forward.3} parent=5 // pred_region
        // Predicated region
        $region25: #{crb2d_forward.3} parent=23 // pred_check
          %p178 = pneg %p55
        $region26: #{crb2d_forward.3} parent=23 // pred_check_branch
          %180 = sbr.rel (%p178) target = $region28
        $region27: #{crb2d_forward.3} parent=23 // pred_region
          %s181 = sand.u32 %s45, 1
          %s182 = sand.u32 %s45, 1
          %s183 = smul.addr %s182, 32
          %s184 = scalar_lea.vmem [#allocation2], %s183
          %s185 = smul.u32 8, %s21
          %s186 = smul.addr %s185, 2
          %s187 = sadd.s32 %s20, %s186
          %s188 = smul.addr %s19, 16
          %s189 = sadd.s32 %s187, %s188
          %s190 = smul.addr %s189, 4
          %s191 = scalar_lea.vmem %s0, %s190
          // Predicated region
          $region29: #{crb2d_forward.3} parent=27 // pred_check
            _
          $region30: #{crb2d_forward.3} parent=27 // pred_check_branch
            %193 = sbr.rel (0) target = $region32
          $region31: #{crb2d_forward.3} parent=27 // pred_region
            // Predicated region
            $region33: #{crb2d_forward.3} parent=31 // pred_check
              _
            $region34: #{crb2d_forward.3} parent=31 // pred_check_branch
              %195 = sbr.rel target = $region36
            $region35: #{crb2d_forward.3} parent=31 // pred_region
              // Predicated region
              $region48: #{crb2d_forward.3} parent=35 // pred_check
                _
              $region49: #{crb2d_forward.3} parent=35 // pred_check_branch
                %225 = sbr.rel (0) target = $region51
              $region50: #{crb2d_forward.3} parent=35 // pred_region
                loop: start=0, step=1, limit=1
                $region52: #{crb2d_forward.3} parent=50 // loop_pre_header
                  _
                $region53: #{crb2d_forward.3} parent=50 // loop_header
                  %s227 = sphi 0, %s231
                  %p228 = scmp.ge.s32.totalorder %s227, 1
                  %s232 = sphi %s191, %s191
                  %s233 = sphi %s184, %s184
                $region54: #{crb2d_forward.3} parent=50 // loop_header_branch
                  %230 = sbr.rel (%p228) target = $region58
                $region55: #{crb2d_forward.3} parent=50 // loop_body
                  _
                $region56: #{crb2d_forward.3} parent=50 // loop_footer
                  %s231 = sadd.s32 1, %s227
                $region57: #{crb2d_forward.3} parent=50 // loop_footer_branch
                  %226 = sbr.rel target = $region53
                $region58: #{crb2d_forward.3} parent=50 // loop_exit
                  _
                %s235 = ssub.s32 16, 1
                loop: start=0, step=1, limit=1
                $region59: #{crb2d_forward.3} parent=50 // loop_pre_header
                  _
                $region60: #{crb2d_forward.3} parent=50 // loop_header
                  %s237 = sphi 0, %s241
                  %p238 = scmp.ge.s32.totalorder %s237, 1
                  %s242 = sphi %s191, %s191
                  %s243 = sphi %s184, %s184
                $region61: #{crb2d_forward.3} parent=50 // loop_header_branch
                  %240 = sbr.rel (%p238) target = $region65
                $region62: #{crb2d_forward.3} parent=50 // loop_body
                  %v244 = vld [vmem:[%s242] sm:%s235]
                  %245 = vst [vmem:[%s243] sm:%s235] %v244
                  %v246 = vld [vmem:[%s242 + $0x8] sm:%s235]
                  %247 = vst [vmem:[%s243 + $0x4] sm:%s235] %v246
                  %v248 = vld [vmem:[%s242 + $0x10] sm:%s235]
                  %249 = vst [vmem:[%s243 + $0x8] sm:%s235] %v248
                  %v250 = vld [vmem:[%s242 + $0x18] sm:%s235]
                  %251 = vst [vmem:[%s243 + $0xc] sm:%s235] %v250
                  %v252 = vld [vmem:[%s242 + $0x20] sm:%s235]
                  %253 = vst [vmem:[%s243 + $0x10] sm:%s235] %v252
                  %v254 = vld [vmem:[%s242 + $0x28] sm:%s235]
                  %255 = vst [vmem:[%s243 + $0x14] sm:%s235] %v254
                  %v256 = vld [vmem:[%s242 + $0x30] sm:%s235]
                  %257 = vst [vmem:[%s243 + $0x18] sm:%s235] %v256
                  %v258 = vld [vmem:[%s242 + $0x38] sm:%s235]
                  %259 = vst [vmem:[%s243 + $0x1c] sm:%s235] %v258
                $region63: #{crb2d_forward.3} parent=50 // loop_footer
                  %s241 = sadd.s32 1, %s237
                $region64: #{crb2d_forward.3} parent=50 // loop_footer_branch
                  %236 = sbr.rel target = $region60
                $region65: #{crb2d_forward.3} parent=50 // loop_exit
                  _
              $region51: #{crb2d_forward.3} parent=35 // pred_fallthru
                _
            $region36: #{crb2d_forward.3} parent=31 // pred_fallthru
              _
            // Predicated region
            $region37: #{crb2d_forward.3} parent=31 // pred_check
              _
            $region38: #{crb2d_forward.3} parent=31 // pred_check_branch
              %197 = sbr.rel (0) target = $region40
            $region39: #{crb2d_forward.3} parent=31 // pred_region
              %s199 = ssub.s32 16, 1
              loop: start=0, step=1, limit=1
              $region41: #{crb2d_forward.3} parent=39 // loop_pre_header
                _
              $region42: #{crb2d_forward.3} parent=39 // loop_header
                %s201 = sphi 0, %s205
                %p202 = scmp.ge.s32.totalorder %s201, 1
                %s206 = sphi %s191, %s191
                %s207 = sphi %s184, %s184
              $region43: #{crb2d_forward.3} parent=39 // loop_header_branch
                %204 = sbr.rel (%p202) target = $region47
              $region44: #{crb2d_forward.3} parent=39 // loop_body
                %v208 = vld [vmem:[%s206] sm:%s199]
                %209 = vst [vmem:[%s207] sm:%s199] %v208
                %v210 = vld [vmem:[%s206 + $0x8] sm:%s199]
                %211 = vst [vmem:[%s207 + $0x4] sm:%s199] %v210
                %v212 = vld [vmem:[%s206 + $0x10] sm:%s199]
                %213 = vst [vmem:[%s207 + $0x8] sm:%s199] %v212
                %v214 = vld [vmem:[%s206 + $0x18] sm:%s199]
                %215 = vst [vmem:[%s207 + $0xc] sm:%s199] %v214
                %v216 = vld [vmem:[%s206 + $0x20] sm:%s199]
                %217 = vst [vmem:[%s207 + $0x10] sm:%s199] %v216
                %v218 = vld [vmem:[%s206 + $0x28] sm:%s199]
                %219 = vst [vmem:[%s207 + $0x14] sm:%s199] %v218
                %v220 = vld [vmem:[%s206 + $0x30] sm:%s199]
                %221 = vst [vmem:[%s207 + $0x18] sm:%s199] %v220
                %v222 = vld [vmem:[%s206 + $0x38] sm:%s199]
                %223 = vst [vmem:[%s207 + $0x1c] sm:%s199] %v222
              $region45: #{crb2d_forward.3} parent=39 // loop_footer
                %s205 = sadd.s32 1, %s201
              $region46: #{crb2d_forward.3} parent=39 // loop_footer_branch
                %200 = sbr.rel target = $region42
              $region47: #{crb2d_forward.3} parent=39 // loop_exit
                _
            $region40: #{crb2d_forward.3} parent=31 // pred_fallthru
              _
          $region32: #{crb2d_forward.3} parent=27 // pred_fallthru
            _
          %260 = vnop
        $region28: #{crb2d_forward.3} parent=23 // pred_fallthru
          _
      $region24: #{crb2d_forward.3} parent=5 // pred_fallthru
        _
      %p261 = scmp.le.s32.totalorder 1, %s12
      %p262 = scmp.lt.s32.totalorder %s12, 5
      %p263 = pnand %p261, %p262
      %p264 = pneg %p263
      // Predicated region
      $region66: #{crb2d_forward.3} parent=5 // pred_check
        _
      $region67: #{crb2d_forward.3} parent=5 // pred_check_branch
        %266 = sbr.rel (%p263) target = $region69
      $region68: #{crb2d_forward.3} parent=5 // pred_region
        %s267 = ssub.s32 %s12, 1
        %s268 = sand.u32 %s48, 1
        %s269 = sand.u32 %s48, 1
        %s270 = smul.addr %s269, 32
        %s271 = scalar_lea.vmem [#allocation2], %s270
        // Predicated region
        $region70: #{crb2d_forward.3} parent=68 // pred_check
          %p272 = pneg %p61
        $region71: #{crb2d_forward.3} parent=68 // pred_check_branch
          %274 = sbr.rel (%p272) target = $region73
        $region72: #{crb2d_forward.3} parent=68 // pred_region
          _
        $region73: #{crb2d_forward.3} parent=68 // pred_fallthru
          _
        %s275 = sand.u32 %s48, 1
        %s276 = sand.u32 %s48, 1
        %s277 = smul.addr %s276, 32
        %s278 = scalar_lea.vmem [#allocation2], %s277
        %p279 = pneg %p61
        %p280 = pneg %p58
        %s281 = smul.u32 8, %s24
        %p282 = scmp.lt.s32.totalorder %s281, 7
        %s283 = scalar_select %p282, %s281, 7
        %s284 = scalar_lea.vmem %s1, %s283
        %p285 = pneg %p87
        %p286 = pneg %p84
        %s287 = smul.u32 8, %s24
        %p288 = scmp.lt.s32.totalorder %s287, 7
        %s289 = scalar_select %p288, %s287, 7
        %s290 = scalar_lea.vmem %s2, %s289
        %p291 = pneg %p113
        %p292 = pneg %p110
        %p293 = pneg %p143
        %p294 = pneg %p140
        %s295 = sand.u32 %s130, 1
        %s296 = scalar_lea.sflag [#allocation4], %s295
        %s297 = sand.u32 %s130, 1
        %s298 = smul.addr %s297, 64
        %s299 = scalar_lea.vmem [#allocation3], %s298
        %s300 = smul.u32 8, %s24
        %s301 = smul.u32 8, %s24
        %p302 = scmp.lt.s32.totalorder %s301, 7
        %s303 = scalar_select %p302, %s301, 7
        %s304 = scalar_lea.vmem %s1, %s303
        %s305 = smul.u32 8, %s24
        %s306 = smul.u32 8, %s24
        %p307 = scmp.lt.s32.totalorder %s306, 7
        %s308 = scalar_select %p307, %s306, 7
        %s309 = scalar_lea.vmem %s2, %s308
        %s310 = smul.u32 8, %s24
        %s311 = smul.u32 8, %s24
        %v312 = vld [vmem:[%s271] sm:$0xf]
        %v313 = vld [vmem:[%s271 + $0x4] sm:$0xf]
        %v314 = vld [vmem:[%s271 + $0x8] sm:$0xf]
        %v315 = vld [vmem:[%s271 + $0xc] sm:$0xf]
        %v316 = vld [vmem:[%s271 + $0x10] sm:$0xf]
        %v317 = vld [vmem:[%s271 + $0x14] sm:$0xf]
        %v318 = vld [vmem:[%s271 + $0x18] sm:$0xf]
        %v319 = vld [vmem:[%s271 + $0x1c] sm:$0xf]
        %v320 = vunpack.c.l.bf16 %v312
        %v321 = vunpack.c.l.bf16 %v313
        %v322 = vunpack.c.l.bf16 %v314
        %v323 = vunpack.c.l.bf16 %v315
        %v324 = vunpack.c.l.bf16 %v316
        %v325 = vunpack.c.l.bf16 %v317
        %v326 = vunpack.c.l.bf16 %v318
        %v327 = vunpack.c.l.bf16 %v319
        %v328 = vld [vmem:[%s304] sm:$0x1]
        %v329 = vld [vmem:[%s304 + $0x1] sm:$0x1]
        %v330 = vld [vmem:[%s304 + $0x2] sm:$0x1]
        %v331 = vld [vmem:[%s304 + $0x3] sm:$0x1]
        %v332 = vld [vmem:[%s304 + $0x4] sm:$0x1]
        %v333 = vld [vmem:[%s304 + $0x5] sm:$0x1]
        %v334 = vld [vmem:[%s304 + $0x6] sm:$0x1]
        %v335 = vld [vmem:[%s304 + $0x7] sm:$0x1]
        %v344 = vperm.slane %v328, 0
        %v345 = vperm.slane %v329, 0
        %v346 = vperm.slane %v330, 0
        %v347 = vperm.slane %v331, 0
        %v348 = vperm.slane %v332, 0
        %v349 = vperm.slane %v333, 0
        %v350 = vperm.slane %v334, 0
        %v351 = vperm.slane %v335, 0
        %352 = vset.pattern.permute.xlu0 0
        %353 = vperm.xlu0 %352, %v344
        %v354 = vpop.permute.xlu0 %353
        %356 = vset.pattern.permute.xlu0 0
        %357 = vperm.xlu0 %356, %v345
        %v358 = vpop.permute.xlu0 %357
        %360 = vset.pattern.permute.xlu0 0
        %361 = vperm.xlu0 %360, %v346
        %v362 = vpop.permute.xlu0 %361
        %364 = vset.pattern.permute.xlu0 0
        %365 = vperm.xlu0 %364, %v347
        %v366 = vpop.permute.xlu0 %365
        %368 = vset.pattern.permute.xlu0 0
        %369 = vperm.xlu0 %368, %v348
        %v370 = vpop.permute.xlu0 %369
        %372 = vset.pattern.permute.xlu0 0
        %373 = vperm.xlu0 %372, %v349
        %v374 = vpop.permute.xlu0 %373
        %376 = vset.pattern.permute.xlu0 0
        %377 = vperm.xlu0 %376, %v350
        %v378 = vpop.permute.xlu0 %377
        %380 = vset.pattern.permute.xlu0 0
        %381 = vperm.xlu0 %380, %v351
        %v382 = vpop.permute.xlu0 %381
        %v384 = vmul.f32 %v320, %v354
        %v385 = vmul.f32 %v321, %v358
        %v386 = vmul.f32 %v322, %v362
        %v387 = vmul.f32 %v323, %v366
        %v388 = vmul.f32 %v324, %v370
        %v389 = vmul.f32 %v325, %v374
        %v390 = vmul.f32 %v326, %v378
        %v391 = vmul.f32 %v327, %v382
        %v392 = vld [vmem:[%s309] sm:$0x1]
        %v393 = vld [vmem:[%s309 + $0x1] sm:$0x1]
        %v394 = vld [vmem:[%s309 + $0x2] sm:$0x1]
        %v395 = vld [vmem:[%s309 + $0x3] sm:$0x1]
        %v396 = vld [vmem:[%s309 + $0x4] sm:$0x1]
        %v397 = vld [vmem:[%s309 + $0x5] sm:$0x1]
        %v398 = vld [vmem:[%s309 + $0x6] sm:$0x1]
        %v399 = vld [vmem:[%s309 + $0x7] sm:$0x1]
        %v408 = vperm.slane %v392, 0
        %v409 = vperm.slane %v393, 0
        %v410 = vperm.slane %v394, 0
        %v411 = vperm.slane %v395, 0
        %v412 = vperm.slane %v396, 0
        %v413 = vperm.slane %v397, 0
        %v414 = vperm.slane %v398, 0
        %v415 = vperm.slane %v399, 0
        %416 = vset.pattern.permute.xlu0 0
        %417 = vperm.xlu0 %416, %v408
        %v418 = vpop.permute.xlu0 %417
        %420 = vset.pattern.permute.xlu0 0
        %421 = vperm.xlu0 %420, %v409
        %v422 = vpop.permute.xlu0 %421
        %424 = vset.pattern.permute.xlu0 0
        %425 = vperm.xlu0 %424, %v410
        %v426 = vpop.permute.xlu0 %425
        %428 = vset.pattern.permute.xlu0 0
        %429 = vperm.xlu0 %428, %v411
        %v430 = vpop.permute.xlu0 %429
        %432 = vset.pattern.permute.xlu0 0
        %433 = vperm.xlu0 %432, %v412
        %v434 = vpop.permute.xlu0 %433
        %436 = vset.pattern.permute.xlu0 0
        %437 = vperm.xlu0 %436, %v413
        %v438 = vpop.permute.xlu0 %437
        %440 = vset.pattern.permute.xlu0 0
        %441 = vperm.xlu0 %440, %v414
        %v442 = vpop.permute.xlu0 %441
        %444 = vset.pattern.permute.xlu0 0
        %445 = vperm.xlu0 %444, %v415
        %v446 = vpop.permute.xlu0 %445
        %v448 = vadd.f32 %v384, %v418
        %v449 = vadd.f32 %v385, %v422
        %v450 = vadd.f32 %v386, %v426
        %v451 = vadd.f32 %v387, %v430
        %v452 = vadd.f32 %v388, %v434
        %v453 = vadd.f32 %v389, %v438
        %v454 = vadd.f32 %v390, %v442
        %v455 = vadd.f32 %v391, %v446
        %vm456 = vcmask 130048
        %457 = vst.msk [vmem:[%s299] sm:$0xff] %vm456, %v448
        %458 = vst.msk [vmem:[%s299 + $0x8] sm:$0xff] %vm456, %v449
        %459 = vst.msk [vmem:[%s299 + $0x10] sm:$0xff] %vm456, %v450
        %460 = vst.msk [vmem:[%s299 + $0x18] sm:$0xff] %vm456, %v451
        %461 = vst.msk [vmem:[%s299 + $0x20] sm:$0xff] %vm456, %v452
        %462 = vst.msk [vmem:[%s299 + $0x28] sm:$0xff] %vm456, %v453
        %463 = vst.msk [vmem:[%s299 + $0x30] sm:$0xff] %vm456, %v454
        %464 = vst.msk [vmem:[%s299 + $0x38] sm:$0xff] %vm456, %v455
        %s465 = sand.u32 %s130, 1
        %s466 = scalar_lea.sflag [#allocation4], %s465
        %s467 = sand.u32 %s130, 1
        %s468 = smul.addr %s467, 64
        %s469 = scalar_lea.vmem [#allocation3], %s468
        // Predicated region
        $region74: #{crb2d_forward.3} parent=68 // pred_check
          %p470 = pneg %p140
        $region75: #{crb2d_forward.3} parent=68 // pred_check_branch
          %472 = sbr.rel (%p470) target = $region77
        $region76: #{crb2d_forward.3} parent=68 // pred_region
          %s473 = smul.u32 8, %s24
          %475 = vsyncadd %s466, 0
          %s476 = smul.addr %s473, 2
          %s477 = sadd.s32 %s23, %s476
          %s478 = smul.addr %s22, 16
          %s479 = sadd.s32 %s477, %s478
          %s480 = smul.addr %s479, 8
          %s481 = scalar_lea.hbm %s3, %s480
          %s482 = sshll.u32 %s469, 4
          %s483 = int_to_ptr.vmem [resolvable:$true] %s482
          %s484 = sshll.u32 %s481, 4
          %s485 = int_to_ptr.hbm [resolvable:$true] %s484
          %490 = dma.vmem_to_hbm [thread:$0]  %s483, 1024, %s485, %s466, 128, 256, 8
        $region77: #{crb2d_forward.3} parent=68 // pred_fallthru
          _
      $region69: #{crb2d_forward.3} parent=5 // pred_fallthru
        _
      %p491 = scmp.le.s32.totalorder 2, %s12
      // Predicated region
      $region78: #{crb2d_forward.3} parent=5 // pred_check
        %p492 = pneg %p491
      $region79: #{crb2d_forward.3} parent=5 // pred_check_branch
        %494 = sbr.rel (%p492) target = $region81
      $region80: #{crb2d_forward.3} parent=5 // pred_region
        %s495 = ssub.s32 %s12, 2
        // Predicated region
        $region82: #{crb2d_forward.3} parent=80 // pred_check
          %p496 = pneg %p146
        $region83: #{crb2d_forward.3} parent=80 // pred_check_branch
          %498 = sbr.rel (%p496) target = $region85
        $region84: #{crb2d_forward.3} parent=80 // pred_region
          %s499 = sand.u32 %s131, 1
          %s500 = scalar_lea.sflag [#allocation4], %s499
          %s501 = sand.u32 %s131, 1
          %s502 = smul.addr %s501, 64
          %s503 = scalar_lea.vmem [#allocation3], %s502
          %505 = dma.done %s500, 1024
        $region85: #{crb2d_forward.3} parent=80 // pred_fallthru
          _
      $region81: #{crb2d_forward.3} parent=5 // pred_fallthru
        _
    $region6: #{crb2d_forward.3} parent=1 // loop_footer
      %s16 = sadd.s32 1, %s12
    $region7: #{crb2d_forward.3} parent=1 // loop_footer_branch
      %11 = sbr.rel target = $region3
    $region8: #{crb2d_forward.3} parent=1 // loop_exit
      _
    %506 = vsyncpa [#allocation4], 1
    %s507 = scalar_lea.sflag [#allocation4], 1
    %508 = vsyncpa %s507, 1

// kernel: crb2d_forward.2
$region0: #{crb2d_forward.2}
  #allocation0 [shape = 'u32[]', space=smem, size = 0x4, offset = 0x4, fixed_abs, tag = 'smem constant byte address 0x4 - core index']
  #allocation1 [shape = 'u32[72,128]{1,0:T(1,128)}', space=vmem, size = 0x9000, scoped, tag = 'internal scratch']
  %s0 = inlined_call_operand.vmem [shape: bf16[2,2,4,10,18], index: 0, kind: input, shape index: {}]
  %s1 = inlined_call_operand.vmem [shape: bf16[9,8,4], index: 1, kind: input, shape index: {}]
  %s2 = inlined_call_operand.vmem [shape: f32[8,1], index: 2, kind: input, shape index: {}]
  %s3 = inlined_call_operand.vmem [shape: bf16[2,8,16,16], index: 3, kind: output, shape index: {0}]
  %s4 = inlined_call_operand.vmem [shape: f32[2,2,1,1,8], index: 4, kind: output, shape index: {1}]
  %s5 = inlined_call_operand.vmem [shape: f32[2,2,1,1,8], index: 5, kind: output, shape index: {2}]
  %6 = xla_tuple %s3, %s4, %s5
  %s7 = sld [smem:[#allocation0]]
  $region98: #{crb2d_forward.2} parent=0
    _
  %s9 = ssub.s32 1, %s7
  %s10 = scalar_select 0, %s9, %s7
  $region1: #{crb2d_forward.2} parent=0
    #allocation2 [shape = 'u8[32768]{0}', space=vmem, size = 0x8000, scoped, tag = 'output window, operand 0']
    loop: start=0, step=1, limit=6
    $region2: #{crb2d_forward.2} parent=1 // loop_pre_header
      _
    $region3: #{crb2d_forward.2} parent=1 // loop_header
      %s12 = sphi 0, %s16
      %p13 = scmp.ge.s32.totalorder %s12, 6
      %s19 = sphi 0, %s38
      %s20 = sphi 0, %s34
      %s21 = sphi 0, %s30
      %s22 = sphi 0, %s19
      %s23 = sphi 0, %s20
      %s24 = sphi 0, %s21
      %s25 = sphi 0, %s22
      %s26 = sphi 0, %s23
      %s27 = sphi 0, %s24
      %s43 = sphi 0, %s45
      %s46 = sphi 0, %s43
      %s47 = sphi 0, %s46
      %s63 = sphi 0, %s47
      %s69 = sphi 0, %s71
      %s72 = sphi 0, %s69
      %s73 = sphi 0, %s72
      %s89 = sphi 0, %s73
      %s95 = sphi 0, %s97
      %s98 = sphi 0, %s95
      %s99 = sphi 0, %s98
      %s115 = sphi 0, %s99
      %s125 = sphi 0, %s127
      %s128 = sphi 0, %s125
      %s129 = sphi 0, %s128
      %s145 = sphi 0, %s129
      %s155 = sphi 0, %s157
      %s158 = sphi 0, %s155
      %s159 = sphi 0, %s158
      %s175 = sphi 0, %s159
      %s185 = sphi 0, %s187
      %s188 = sphi 0, %s185
      %s189 = sphi 0, %s188
      %s205 = sphi 0, %s189
    $region4: #{crb2d_forward.2} parent=1 // loop_header_branch
      %15 = sbr.rel (%p13) target = $region8
    $region5: #{crb2d_forward.2} parent=1 // loop_body
      %s17 = ssub.s32 %s12, 1
      %s18 = ssub.s32 %s12, 2
      %s28 = sadd.s32 1, %s21
      %p29 = scmp.ge.s32.totalorder %s28, 1
      %s30 = scalar_select %p29, 0, %s28
      %s31 = sadd.s32 1, %s20
      %s32 = scalar_select %p29, %s31, %s20
      %p33 = scmp.ge.s32.totalorder %s32, 2
      %s34 = scalar_select %p33, 0, %s32
      %s35 = sadd.s32 1, %s19
      %s36 = scalar_select %p33, %s35, %s19
      %p37 = scmp.ge.s32.totalorder %s36, 2
      %s38 = scalar_select %p37, 0, %s36
      %s39 = ssub.s32 %s19, %s38
      %s40 = ssub.s32 %s20, %s34
      %s41 = sor.u32 %s39, %s40
      %p42 = scmp.eq.s32.totalorder %s41, 0
      %s44 = sadd.s32 %s43, 1
      %s45 = scalar_select %p42, %s43, %s44
      %p48 = pneg %p42
      %p49 = scmp.eq.s32.totalorder %s12, 3
      %p50 = por %p48, %p49
      %p51 = scmp.ne.s32.totalorder %s43, %s46
      %p52 = scmp.eq.s32.totalorder %s12, 0
      %p53 = por %p51, %p52
      %p54 = scmp.ne.s32.totalorder %s43, %s46
      %p55 = scmp.eq.s32.totalorder %s17, 3
      %p56 = por %p54, %p55
      %p57 = scmp.ne.s32.totalorder %s46, %s47
      %p58 = scmp.eq.s32.totalorder %s17, 0
      %p59 = por %p57, %p58
      %p60 = scmp.ne.s32.totalorder %s46, %s47
      %p61 = scmp.eq.s32.totalorder %s18, 3
      %p62 = por %p60, %p61
      %p64 = scmp.ne.s32.totalorder %s47, %s63
      %p65 = scmp.eq.s32.totalorder %s18, 0
      %p66 = por %p64, %p65
      %s67 = ssub.s32 %s21, %s30
      %p68 = scmp.eq.s32.totalorder %s67, 0
      %s70 = sadd.s32 %s69, 1
      %s71 = scalar_select %p68, %s69, %s70
      %p74 = pneg %p68
      %p75 = scmp.eq.s32.totalorder %s12, 3
      %p76 = por %p74, %p75
      %p77 = scmp.ne.s32.totalorder %s69, %s72
      %p78 = scmp.eq.s32.totalorder %s12, 0
      %p79 = por %p77, %p78
      %p80 = scmp.ne.s32.totalorder %s69, %s72
      %p81 = scmp.eq.s32.totalorder %s17, 3
      %p82 = por %p80, %p81
      %p83 = scmp.ne.s32.totalorder %s72, %s73
      %p84 = scmp.eq.s32.totalorder %s17, 0
      %p85 = por %p83, %p84
      %p86 = scmp.ne.s32.totalorder %s72, %s73
      %p87 = scmp.eq.s32.totalorder %s18, 3
      %p88 = por %p86, %p87
      %p90 = scmp.ne.s32.totalorder %s73, %s89
      %p91 = scmp.eq.s32.totalorder %s18, 0
      %p92 = por %p90, %p91
      %s93 = ssub.s32 %s21, %s30
      %p94 = scmp.eq.s32.totalorder %s93, 0
      %s96 = sadd.s32 %s95, 1
      %s97 = scalar_select %p94, %s95, %s96
      %p100 = pneg %p94
      %p101 = scmp.eq.s32.totalorder %s12, 3
      %p102 = por %p100, %p101
      %p103 = scmp.ne.s32.totalorder %s95, %s98
      %p104 = scmp.eq.s32.totalorder %s12, 0
      %p105 = por %p103, %p104
      %p106 = scmp.ne.s32.totalorder %s95, %s98
      %p107 = scmp.eq.s32.totalorder %s17, 3
      %p108 = por %p106, %p107
      %p109 = scmp.ne.s32.totalorder %s98, %s99
      %p110 = scmp.eq.s32.totalorder %s17, 0
      %p111 = por %p109, %p110
      %p112 = scmp.ne.s32.totalorder %s98, %s99
      %p113 = scmp.eq.s32.totalorder %s18, 3
      %p114 = por %p112, %p113
      %p116 = scmp.ne.s32.totalorder %s99, %s115
      %p117 = scmp.eq.s32.totalorder %s18, 0
      %p118 = por %p116, %p117
      %s119 = ssub.s32 %s19, %s38
      %s120 = ssub.s32 %s21, %s30
      %s121 = sor.u32 %s119, %s120
      %s122 = ssub.s32 %s20, %s34
      %s123 = sor.u32 %s121, %s122
      %p124 = scmp.eq.s32.totalorder %s123, 0
      %s126 = sadd.s32 %s125, 1
      %s127 = scalar_select %p124, %s125, %s126
      %p130 = pneg %p124
      %p131 = scmp.eq.s32.totalorder %s12, 3
      %p132 = por %p130, %p131
      %p133 = scmp.ne.s32.totalorder %s125, %s128
      %p134 = scmp.eq.s32.totalorder %s12, 0
      %p135 = por %p133, %p134
      %p136 = scmp.ne.s32.totalorder %s125, %s128
      %p137 = scmp.eq.s32.totalorder %s17, 3
      %p138 = por %p136, %p137
      %p139 = scmp.ne.s32.totalorder %s128, %s129
      %p140 = scmp.eq.s32.totalorder %s17, 0
      %p141 = por %p139, %p140
      %p142 = scmp.ne.s32.totalorder %s128, %s129
      %p143 = scmp.eq.s32.totalorder %s18, 3
      %p144 = por %p142, %p143
      %p146 = scmp.ne.s32.totalorder %s129, %s145
      %p147 = scmp.eq.s32.totalorder %s18, 0
      %p148 = por %p146, %p147
      %s149 = ssub.s32 %s19, %s38
      %s150 = ssub.s32 %s20, %s34
      %s151 = sor.u32 %s149, %s150
      %s152 = ssub.s32 %s21, %s30
      %s153 = sor.u32 %s151, %s152
      %p154 = scmp.eq.s32.totalorder %s153, 0
      %s156 = sadd.s32 %s155, 1
      %s157 = scalar_select %p154, %s155, %s156
      %p160 = pneg %p154
      %p161 = scmp.eq.s32.totalorder %s12, 3
      %p162 = por %p160, %p161
      %p163 = scmp.ne.s32.totalorder %s155, %s158
      %p164 = scmp.eq.s32.totalorder %s12, 0
      %p165 = por %p163, %p164
      %p166 = scmp.ne.s32.totalorder %s155, %s158
      %p167 = scmp.eq.s32.totalorder %s17, 3
      %p168 = por %p166, %p167
      %p169 = scmp.ne.s32.totalorder %s158, %s159
      %p170 = scmp.eq.s32.totalorder %s17, 0
      %p171 = por %p169, %p170
      %p172 = scmp.ne.s32.totalorder %s158, %s159
      %p173 = scmp.eq.s32.totalorder %s18, 3
      %p174 = por %p172, %p173
      %p176 = scmp.ne.s32.totalorder %s159, %s175
      %p177 = scmp.eq.s32.totalorder %s18, 0
      %p178 = por %p176, %p177
      %s179 = ssub.s32 %s19, %s38
      %s180 = ssub.s32 %s20, %s34
      %s181 = sor.u32 %s179, %s180
      %s182 = ssub.s32 %s21, %s30
      %s183 = sor.u32 %s181, %s182
      %p184 = scmp.eq.s32.totalorder %s183, 0
      %s186 = sadd.s32 %s185, 1
      %s187 = scalar_select %p184, %s185, %s186
      %p190 = pneg %p184
      %p191 = scmp.eq.s32.totalorder %s12, 3
      %p192 = por %p190, %p191
      %p193 = scmp.ne.s32.totalorder %s185, %s188
      %p194 = scmp.eq.s32.totalorder %s12, 0
      %p195 = por %p193, %p194
      %p196 = scmp.ne.s32.totalorder %s185, %s188
      %p197 = scmp.eq.s32.totalorder %s17, 3
      %p198 = por %p196, %p197
      %p199 = scmp.ne.s32.totalorder %s188, %s189
      %p200 = scmp.eq.s32.totalorder %s17, 0
      %p201 = por %p199, %p200
      %p202 = scmp.ne.s32.totalorder %s188, %s189
      %p203 = scmp.eq.s32.totalorder %s18, 3
      %p204 = por %p202, %p203
      %p206 = scmp.ne.s32.totalorder %s189, %s205
      %p207 = scmp.eq.s32.totalorder %s18, 0
      %p208 = por %p206, %p207
      %p209 = scmp.le.s32.totalorder 1, %s12
      %p210 = scmp.lt.s32.totalorder %s12, 5
      %p211 = pnand %p209, %p210
      %p212 = pneg %p211
      // Predicated region
      $region9: #{crb2d_forward.2} parent=5 // pred_check
        _
      $region10: #{crb2d_forward.2} parent=5 // pred_check_branch
        %214 = sbr.rel (%p211) target = $region12
      $region11: #{crb2d_forward.2} parent=5 // pred_region
        %s215 = ssub.s32 %s12, 1
        // Predicated region
        $region13: #{crb2d_forward.2} parent=11 // pred_check
          %p216 = pneg %p85
        $region14: #{crb2d_forward.2} parent=11 // pred_check_branch
          %218 = sbr.rel (%p216) target = $region16
        $region15: #{crb2d_forward.2} parent=11 // pred_region
          %p219 = scmp.lt.s32.totalorder %s24, 0
          %s220 = scalar_select %p219, %s24, 0
          %s221 = smul.addr %s220, 4
          %s222 = scalar_lea.vmem %s1, %s221
        $region16: #{crb2d_forward.2} parent=11 // pred_fallthru
          _
        // Predicated region
        $region17: #{crb2d_forward.2} parent=11 // pred_check
          %p223 = pneg %p111
        $region18: #{crb2d_forward.2} parent=11 // pred_check_branch
          %225 = sbr.rel (%p223) target = $region20
        $region19: #{crb2d_forward.2} parent=11 // pred_region
          %p226 = scmp.lt.s32.totalorder %s24, 0
          %s227 = scalar_select %p226, %s24, 0
          %s228 = smul.addr %s227, 8
          %s229 = scalar_lea.vmem %s2, %s228
        $region20: #{crb2d_forward.2} parent=11 // pred_fallthru
          _
      $region12: #{crb2d_forward.2} parent=5 // pred_fallthru
        _
      %p230 = scmp.lt.s32.totalorder %s12, 4
      // Predicated region
      $region21: #{crb2d_forward.2} parent=5 // pred_check
        %p231 = pneg %p230
      $region22: #{crb2d_forward.2} parent=5 // pred_check_branch
        %233 = sbr.rel (%p231) target = $region24
      $region23: #{crb2d_forward.2} parent=5 // pred_region
        // Predicated region
        $region25: #{crb2d_forward.2} parent=23 // pred_check
          %p234 = pneg %p53
        $region26: #{crb2d_forward.2} parent=23 // pred_check_branch
          %236 = sbr.rel (%p234) target = $region28
        $region27: #{crb2d_forward.2} parent=23 // pred_region
          %p237 = scmp.lt.s32.totalorder %s19, 1
          %s238 = scalar_select %p237, %s19, 1
          %p239 = scmp.lt.s32.totalorder %s20, 1
          %s240 = scalar_select %p239, %s20, 1
          %s241 = smul.addr %s240, 8
          %s242 = smul.addr %s238, 16
          %s243 = sadd.s32 %s241, %s242
          %s244 = smul.addr %s243, 4
          %s245 = scalar_lea.vmem %s0, %s244
        $region28: #{crb2d_forward.2} parent=23 // pred_fallthru
          _
      $region24: #{crb2d_forward.2} parent=5 // pred_fallthru
        _
      %p246 = scmp.le.s32.totalorder 1, %s12
      %p247 = scmp.lt.s32.totalorder %s12, 5
      %p248 = pnand %p246, %p247
      %p249 = pneg %p248
      // Predicated region
      $region29: #{crb2d_forward.2} parent=5 // pred_check
        _
      $region30: #{crb2d_forward.2} parent=5 // pred_check_branch
        %251 = sbr.rel (%p248) target = $region32
      $region31: #{crb2d_forward.2} parent=5 // pred_region
        %s252 = ssub.s32 %s12, 1
        %p253 = scmp.lt.s32.totalorder %s22, 1
        %s254 = scalar_select %p253, %s22, 1
        %p255 = scmp.lt.s32.totalorder %s23, 1
        %s256 = scalar_select %p255, %s23, 1
        %s257 = smul.addr %s256, 8
        %s258 = smul.addr %s254, 16
        %s259 = sadd.s32 %s257, %s258
        %s260 = smul.addr %s259, 4
        %s261 = scalar_lea.vmem %s0, %s260
        %p262 = pneg %p59
        %p263 = pneg %p56
        %p264 = scmp.lt.s32.totalorder %s24, 0
        %s265 = scalar_select %p264, %s24, 0
        %s266 = smul.addr %s265, 4
        %s267 = scalar_lea.vmem %s1, %s266
        %p268 = pneg %p85
        %p269 = pneg %p82
        %p270 = scmp.lt.s32.totalorder %s24, 0
        %s271 = scalar_select %p270, %s24, 0
        %s272 = smul.addr %s271, 8
        %s273 = scalar_lea.vmem %s2, %s272
        %p274 = pneg %p111
        %p275 = pneg %p108
        %p276 = pneg %p141
        %p277 = pneg %p138
        %s278 = sand.u32 %s128, 1
        %s279 = sand.u32 %s128, 1
        %s280 = smul.addr %s279, 32
        %s281 = scalar_lea.vmem [#allocation2], %s280
        %p282 = pneg %p171
        %p283 = pneg %p168
        %p284 = scmp.lt.s32.totalorder %s22, 1
        %s285 = scalar_select %p284, %s22, 1
        %p286 = scmp.lt.s32.totalorder %s23, 1
        %s287 = scalar_select %p286, %s23, 1
        %p288 = scmp.lt.s32.totalorder %s24, 0
        %s289 = scalar_select %p288, %s24, 0
        %s290 = sadd.s32 %s289, %s287
        %s291 = smul.addr %s285, 2
        %s292 = sadd.s32 %s290, %s291
        %s293 = scalar_lea.vmem %s4, %s292
        %p294 = pneg %p201
        %p295 = pneg %p198
        %p296 = scmp.lt.s32.totalorder %s22, 1
        %s297 = scalar_select %p296, %s22, 1
        %p298 = scmp.lt.s32.totalorder %s23, 1
        %s299 = scalar_select %p298, %s23, 1
        %p300 = scmp.lt.s32.totalorder %s24, 0
        %s301 = scalar_select %p300, %s24, 0
        %s302 = sadd.s32 %s301, %s299
        %s303 = smul.addr %s297, 2
        %s304 = sadd.s32 %s302, %s303
        %s305 = scalar_lea.vmem %s5, %s304
        %p306 = scmp.lt.s32.totalorder %s22, 1
        %s307 = scalar_select %p306, %s22, 1
        %p308 = scmp.lt.s32.totalorder %s23, 1
        %s309 = scalar_select %p308, %s23, 1
        %s310 = smul.addr %s309, 8
        %s311 = smul.addr %s307, 16
        %s312 = sadd.s32 %s310, %s311
        %s313 = smul.addr %s312, 4
        %s314 = scalar_lea.vmem %s0, %s313
        %p315 = scmp.lt.s32.totalorder %s24, 0
        %s316 = scalar_select %p315, %s24, 0
        %s317 = smul.addr %s316, 4
        %s318 = scalar_lea.vmem %s1, %s317
        %p319 = scmp.lt.s32.totalorder %s24, 0
        %s320 = scalar_select %p319, %s24, 0
        %s321 = smul.addr %s320, 8
        %s322 = scalar_lea.vmem %s2, %s321
        %s323 = smul.u32 8, %s24
        %p324 = scmp.lt.s32.totalorder %s22, 1
        %s325 = scalar_select %p324, %s22, 1
        %p326 = scmp.lt.s32.totalorder %s23, 1
        %s327 = scalar_select %p326, %s23, 1
        %p328 = scmp.lt.s32.totalorder %s24, 0
        %s329 = scalar_select %p328, %s24, 0
        %s330 = sadd.s32 %s329, %s327
        %s331 = smul.addr %s325, 2
        %s332 = sadd.s32 %s330, %s331
        %s333 = scalar_lea.vmem %s4, %s332
        %p334 = scmp.lt.s32.totalorder %s22, 1
        %s335 = scalar_select %p334, %s22, 1
        %p336 = scmp.lt.s32.totalorder %s23, 1
        %s337 = scalar_select %p336, %s23, 1
        %p338 = scmp.lt.s32.totalorder %s24, 0
        %s339 = scalar_select %p338, %s24, 0
        %s340 = sadd.s32 %s339, %s337
        %s341 = smul.addr %s335, 2
        %s342 = sadd.s32 %s340, %s341
        %s343 = scalar_lea.vmem %s5, %s342
        %v345 = vld [vmem:[%s322] sm:$0xff]
        %v346 = vmax.f32 %v345, 0.0
        %v347 = vld [vmem:[%s318] sm:$0xf]
        %s348 = scalar_lea.vmem %s318, 4
        %v349 = vld [vmem:[%s348] sm:$0xf]
        %s350 = scalar_lea.vmem %s318, 8
        %v351 = vld [vmem:[%s350] sm:$0xf]
        %s352 = scalar_lea.vmem %s318, 12
        %v353 = vld [vmem:[%s352] sm:$0xf]
        %s354 = scalar_lea.vmem %s318, 16
        %v355 = vld [vmem:[%s354] sm:$0xf]
        %s356 = scalar_lea.vmem %s318, 20
        %v357 = vld [vmem:[%s356] sm:$0xf]
        %s358 = scalar_lea.vmem %s318, 24
        %v359 = vld [vmem:[%s358] sm:$0xf]
        %s360 = scalar_lea.vmem %s318, 28
        %v361 = vld [vmem:[%s360] sm:$0xf]
        %s362 = scalar_lea.vmem %s318, 32
        %v363 = vld [vmem:[%s362] sm:$0xf]
        %v364 = vld [vmem:[%s314] sm:$0x1]
        %v365 = vld [vmem:[%s314 + $0x8] sm:$0x1]
        %v366 = vld [vmem:[%s314 + $0x10] sm:$0x1]
        %v367 = vld [vmem:[%s314 + $0x18] sm:$0x1]
        %v372 = vunpack.c.l.b16 %v364
        %v373 = vunpack.c.l.b16 %v365
        %v374 = vunpack.c.l.b16 %v366
        %v375 = vunpack.c.l.b16 %v367
        %v376 = vpack.c.b16 %v372, %v372
        %v377 = vpack.c.b16 %v373, %v373
        %v378 = vpack.c.b16 %v374, %v374
        %v379 = vpack.c.b16 %v375, %v375
        %v380 = vunpack.c.l.b16 %v376
        %v381 = vunpack.c.l.b16 %v377
        %v382 = vunpack.c.l.b16 %v378
        %v383 = vunpack.c.l.b16 %v379
        %v384 = vrot.slane %v381, 7
        %vm385 = vcmask 1041409
        %v386 = vsel %vm385, %v384, %v380
        %v387 = vrot.slane %v382, 6
        %vm388 = vcmask 1042434
        %v389 = vsel %vm388, %v387, %v386
        %v390 = vrot.slane %v383, 5
        %vm391 = vcmask 1043459
        %v392 = vsel %vm391, %v390, %v389
        %v393 = vpack.c.b16 %v392, %v392
        %394 = vrot.lane.b32.xlu0 %v393, 127
        %v395 = vpop.permute.xlu0 %394
        %vm396 = vcmask 31744
        %v398 = vsel %vm396, %v349, 0
        %vm400 = vcmask 1041408
        %v402 = vsel %vm400, %v395, 0
        %404 = vmatpush.bf16.msra.mxu0 0
        %405 = vmatpush.bf16.msra.mxu0 0
        %406 = vmatpush.bf16.msra.mxu0 0
        %407 = vmatpush.bf16.msra.mxu0 0
        %408 = vmatpush.bf16.msra.mxu0 0
        %409 = vmatpush.bf16.msra.mxu0 0
        %410 = vmatpush.bf16.msra.mxu0 0
        %411 = vmatpush.bf16.msra.mxu0 %v402
        %412 = vmatmul.bf16.gmra.mxu0 %v398
        %v413 = vpop.f32.mrf.mxu0
        %v414 = vadd.f32 0.0, %v413
        %v415 = vpop.f32.mrf.mxu0
        %416 = vdwg.mxu0
        %v418 = vsel %vm396, %v347, 0
        %v421 = vsel %vm400, %v393, 0
        %423 = vmatpush.bf16.msra.mxu0 0
        %424 = vmatpush.bf16.msra.mxu0 0
        %425 = vmatpush.bf16.msra.mxu0 0
        %426 = vmatpush.bf16.msra.mxu0 0
        %427 = vmatpush.bf16.msra.mxu0 0
        %428 = vmatpush.bf16.msra.mxu0 0
        %429 = vmatpush.bf16.msra.mxu0 0
        %430 = vmatpush.bf16.msra.mxu0 %v421
        %431 = vmatmul.bf16.gmra.mxu0 %v418
        %v432 = vpop.f32.mrf.mxu0
        %v433 = vadd.f32 %v414, %v432
        %v434 = vpop.f32.mrf.mxu0
        %435 = vdwg.mxu0
        %436 = vrot.lane.b32.xlu0 %v393, 126
        %v437 = vpop.permute.xlu0 %436
        %v439 = vsel %vm396, %v351, 0
        %v442 = vsel %vm400, %v437, 0
        %444 = vmatpush.bf16.msra.mxu0 0
        %445 = vmatpush.bf16.msra.mxu0 0
        %446 = vmatpush.bf16.msra.mxu0 0
        %447 = vmatpush.bf16.msra.mxu0 0
        %448 = vmatpush.bf16.msra.mxu0 0
        %449 = vmatpush.bf16.msra.mxu0 0
        %450 = vmatpush.bf16.msra.mxu0 0
        %451 = vmatpush.bf16.msra.mxu0 %v442
        %452 = vmatmul.bf16.gmra.mxu0 %v439
        %v453 = vpop.f32.mrf.mxu0
        %v454 = vadd.f32 0.0, %v453
        %v455 = vpop.f32.mrf.mxu0
        %456 = vdwg.mxu0
        %v457 = vadd.f32 %v433, %v454
        %v458 = vrot.slane %v380, 1
        %v459 = vsel %vm385, %v381, %v458
        %v460 = vrot.slane %v382, 7
        %v461 = vsel %vm388, %v460, %v459
        %v462 = vrot.slane %v383, 6
        %v463 = vsel %vm391, %v462, %v461
        %v464 = vpack.c.b16 %v463, %v463
        %v466 = vsel %vm396, %v353, 0
        %v469 = vsel %vm400, %v464, 0
        %471 = vmatpush.bf16.msra.mxu0 0
        %472 = vmatpush.bf16.msra.mxu0 0
        %473 = vmatpush.bf16.msra.mxu0 0
        %474 = vmatpush.bf16.msra.mxu0 0
        %475 = vmatpush.bf16.msra.mxu0 0
        %476 = vmatpush.bf16.msra.mxu0 0
        %477 = vmatpush.bf16.msra.mxu0 0
        %478 = vmatpush.bf16.msra.mxu0 %v469
        %479 = vmatmul.bf16.gmra.mxu0 %v466
        %v480 = vpop.f32.mrf.mxu0
        %v481 = vadd.f32 0.0, %v480
        %v482 = vpop.f32.mrf.mxu0
        %483 = vdwg.mxu0
        %v484 = vadd.f32 %v457, %v481
        %485 = vrot.lane.b32.xlu0 %v464, 127
        %v486 = vpop.permute.xlu0 %485
        %v488 = vsel %vm396, %v355, 0
        %v491 = vsel %vm400, %v486, 0
        %493 = vmatpush.bf16.msra.mxu0 0
        %494 = vmatpush.bf16.msra.mxu0 0
        %495 = vmatpush.bf16.msra.mxu0 0
        %496 = vmatpush.bf16.msra.mxu0 0
        %497 = vmatpush.bf16.msra.mxu0 0
        %498 = vmatpush.bf16.msra.mxu0 0
        %499 = vmatpush.bf16.msra.mxu0 0
        %500 = vmatpush.bf16.msra.mxu0 %v491
        %501 = vmatmul.bf16.gmra.mxu0 %v488
        %v502 = vpop.f32.mrf.mxu0
        %v503 = vadd.f32 0.0, %v502
        %v504 = vpop.f32.mrf.mxu0
        %505 = vdwg.mxu0
        %v506 = vadd.f32 %v484, %v503
        %507 = vrot.lane.b32.xlu0 %v464, 126
        %v508 = vpop.permute.xlu0 %507
        %v510 = vsel %vm396, %v357, 0
        %v513 = vsel %vm400, %v508, 0
        %515 = vmatpush.bf16.msra.mxu0 0
        %516 = vmatpush.bf16.msra.mxu0 0
        %517 = vmatpush.bf16.msra.mxu0 0
        %518 = vmatpush.bf16.msra.mxu0 0
        %519 = vmatpush.bf16.msra.mxu0 0
        %520 = vmatpush.bf16.msra.mxu0 0
        %521 = vmatpush.bf16.msra.mxu0 0
        %522 = vmatpush.bf16.msra.mxu0 %v513
        %523 = vmatmul.bf16.gmra.mxu0 %v510
        %v524 = vpop.f32.mrf.mxu0
        %v525 = vadd.f32 0.0, %v524
        %v526 = vpop.f32.mrf.mxu0
        %527 = vdwg.mxu0
        %v528 = vadd.f32 %v506, %v525
        %v529 = vld [vmem:[%s314] sm:$0x2]
        %v530 = vld [vmem:[%s314 + $0x8] sm:$0x2]
        %v531 = vld [vmem:[%s314 + $0x10] sm:$0x2]
        %v532 = vld [vmem:[%s314 + $0x18] sm:$0x2]
        %v537 = vunpack.c.l.b16 %v529
        %v538 = vunpack.c.l.b16 %v530
        %v539 = vunpack.c.l.b16 %v531
        %v540 = vunpack.c.l.b16 %v532
        %v541 = vpack.c.b16 %v537, %v537
        %v542 = vpack.c.b16 %v538, %v538
        %v543 = vpack.c.b16 %v539, %v539
        %v544 = vpack.c.b16 %v540, %v540
        %v545 = vunpack.c.l.b16 %v541
        %v546 = vunpack.c.l.b16 %v542
        %v547 = vunpack.c.l.b16 %v543
        %v548 = vunpack.c.l.b16 %v544
        %v549 = vrot.slane %v545, 2
        %v550 = vrot.slane %v546, 1
        %v551 = vsel %vm385, %v550, %v549
        %v552 = vsel %vm388, %v547, %v551
        %v553 = vrot.slane %v548, 7
        %v554 = vsel %vm391, %v553, %v552
        %v555 = vpack.c.b16 %v554, %v554
        %v557 = vsel %vm396, %v359, 0
        %v560 = vsel %vm400, %v555, 0
        %562 = vmatpush.bf16.msra.mxu0 0
        %563 = vmatpush.bf16.msra.mxu0 0
        %564 = vmatpush.bf16.msra.mxu0 0
        %565 = vmatpush.bf16.msra.mxu0 0
        %566 = vmatpush.bf16.msra.mxu0 0
        %567 = vmatpush.bf16.msra.mxu0 0
        %568 = vmatpush.bf16.msra.mxu0 0
        %569 = vmatpush.bf16.msra.mxu0 %v560
        %570 = vmatmul.bf16.gmra.mxu0 %v557
        %v571 = vpop.f32.mrf.mxu0
        %v572 = vadd.f32 0.0, %v571
        %v573 = vpop.f32.mrf.mxu0
        %574 = vdwg.mxu0
        %v575 = vadd.f32 %v528, %v572
        %576 = vrot.lane.b32.xlu0 %v555, 127
        %v577 = vpop.permute.xlu0 %576
        %v579 = vsel %vm396, %v361, 0
        %v582 = vsel %vm400, %v577, 0
        %584 = vmatpush.bf16.msra.mxu0 0
        %585 = vmatpush.bf16.msra.mxu0 0
        %586 = vmatpush.bf16.msra.mxu0 0
        %587 = vmatpush.bf16.msra.mxu0 0
        %588 = vmatpush.bf16.msra.mxu0 0
        %589 = vmatpush.bf16.msra.mxu0 0
        %590 = vmatpush.bf16.msra.mxu0 0
        %591 = vmatpush.bf16.msra.mxu0 %v582
        %592 = vmatmul.bf16.gmra.mxu0 %v579
        %v593 = vpop.f32.mrf.mxu0
        %v594 = vadd.f32 0.0, %v593
        %v595 = vpop.f32.mrf.mxu0
        %596 = vdwg.mxu0
        %v597 = vadd.f32 %v575, %v594
        %598 = vrot.lane.b32.xlu0 %v555, 126
        %v599 = vpop.permute.xlu0 %598
        %v601 = vsel %vm396, %v363, 0
        %v604 = vsel %vm400, %v599, 0
        %606 = vmatpush.bf16.msra.mxu0 0
        %607 = vmatpush.bf16.msra.mxu0 0
        %608 = vmatpush.bf16.msra.mxu0 0
        %609 = vmatpush.bf16.msra.mxu0 0
        %610 = vmatpush.bf16.msra.mxu0 0
        %611 = vmatpush.bf16.msra.mxu0 0
        %612 = vmatpush.bf16.msra.mxu0 0
        %613 = vmatpush.bf16.msra.mxu0 %v604
        %614 = vmatmul.bf16.gmra.mxu0 %v601
        %v615 = vpop.f32.mrf.mxu0
        %v616 = vadd.f32 0.0, %v615
        %v617 = vpop.f32.mrf.mxu0
        %618 = vdwg.mxu0
        %v619 = vadd.f32 %v597, %v616
        %621 = vset.pattern.permute.xlu0 0
        %622 = vperm.xlu0 %621, %v345
        %v623 = vpop.permute.xlu0 %622
        %v625 = vadd.f32 %v619, %v623
        %v626 = vmax.f32 %v625, 0.0
        %v627 = vpack.c.bf16 %v626, %v626
        %v629 = vrot.slane %v627, 3
        %vm630 = vcmask 1040384
        %v633 = vsel %vm630, %v627, %v629
        %v635 = vsel %vm385, %v627, %v629
        %v637 = vrot.slane %v635, 1
        %v638 = vsel %vm388, %v627, %v629
        %v640 = vrot.slane %v638, 2
        %v641 = vsel %vm391, %v627, %v629
        %v643 = vrot.slane %v641, 3
        %v644 = vunpack.i.l.s16 %v633
        %v645 = vunpack.i.h.s16 %v633
        %v646 = vunpack.i.l.s16 %v637
        %v647 = vunpack.i.h.s16 %v637
        %v648 = vunpack.i.l.s16 %v640
        %v649 = vunpack.i.h.s16 %v640
        %v650 = vunpack.i.l.s16 %v643
        %v651 = vunpack.i.h.s16 %v643
        %v652 = vpack.i.b16 %v644, %v644
        %v653 = vpack.i.b16 %v645, %v645
        %v654 = vpack.i.b16 %v646, %v646
        %v655 = vpack.i.b16 %v647, %v647
        %v656 = vpack.i.b16 %v648, %v648
        %v657 = vpack.i.b16 %v649, %v649
        %v658 = vpack.i.b16 %v650, %v650
        %v659 = vpack.i.b16 %v651, %v651
        %v661 = vunpack.c.l.s4 286326784
        %v662 = vunpack.c.0.s8 %v661
        %v663 = vperm.slane %v652, %v662
        %v665 = vunpack.c.l.s4 286326784
        %v666 = vunpack.c.0.s8 %v665
        %v667 = vperm.slane %v653, %v666
        %v669 = vunpack.c.l.s4 286326784
        %v670 = vunpack.c.0.s8 %v669
        %v671 = vperm.slane %v654, %v670
        %v673 = vunpack.c.l.s4 286326784
        %v674 = vunpack.c.0.s8 %v673
        %v675 = vperm.slane %v655, %v674
        %v677 = vunpack.c.l.s4 286326784
        %v678 = vunpack.c.0.s8 %v677
        %v679 = vperm.slane %v656, %v678
        %v681 = vunpack.c.l.s4 286326784
        %v682 = vunpack.c.0.s8 %v681
        %v683 = vperm.slane %v657, %v682
        %v685 = vunpack.c.l.s4 286326784
        %v686 = vunpack.c.0.s8 %v685
        %v687 = vperm.slane %v658, %v686
        %v689 = vunpack.c.l.s4 286326784
        %v690 = vunpack.c.0.s8 %v689
        %v691 = vperm.slane %v659, %v690
        %vm700 = vcmask 122880
        %vm701 = vsmask.f32 256
        %vm702 = vmand %vm700, %vm701
        %v703 = vld [vmem:[%s281] sm:$0x1]
        %v704 = vsel %vm702, %v663, %v703
        %705 = vst [vmem:[%s281] sm:$0x1] %v704
        %v706 = vld [vmem:[%s281 + $0x4] sm:$0x1]
        %v707 = vsel %vm702, %v667, %v706
        %708 = vst [vmem:[%s281 + $0x4] sm:$0x1] %v707
        %v709 = vld [vmem:[%s281 + $0x8] sm:$0x1]
        %v710 = vsel %vm702, %v671, %v709
        %711 = vst [vmem:[%s281 + $0x8] sm:$0x1] %v710
        %v712 = vld [vmem:[%s281 + $0xc] sm:$0x1]
        %v713 = vsel %vm702, %v675, %v712
        %714 = vst [vmem:[%s281 + $0xc] sm:$0x1] %v713
        %v715 = vld [vmem:[%s281 + $0x10] sm:$0x1]
        %v716 = vsel %vm702, %v679, %v715
        %717 = vst [vmem:[%s281 + $0x10] sm:$0x1] %v716
        %v718 = vld [vmem:[%s281 + $0x14] sm:$0x1]
        %v719 = vsel %vm702, %v683, %v718
        %720 = vst [vmem:[%s281 + $0x14] sm:$0x1] %v719
        %v721 = vld [vmem:[%s281 + $0x18] sm:$0x1]
        %v722 = vsel %vm702, %v687, %v721
        %723 = vst [vmem:[%s281 + $0x18] sm:$0x1] %v722
        %v724 = vld [vmem:[%s281 + $0x1c] sm:$0x1]
        %v725 = vsel %vm702, %v691, %v724
        %726 = vst [vmem:[%s281 + $0x1c] sm:$0x1] %v725
        %728 = vset.pattern.permute.xlu0 0
        %729 = vperm.xlu0 %728, %v346
        %v730 = vpop.permute.xlu0 %729
        %v732 = vsub.f32 %v626, %v730
        %v733 = vmul.f32 %v732, %v732
        %v734 = vld [vmem:[%s314] sm:$0x1]
        %v735 = vld [vmem:[%s314 + $0x8] sm:$0x1]
        %v736 = vld [vmem:[%s314 + $0x10] sm:$0x1]
        %v737 = vld [vmem:[%s314 + $0x18] sm:$0x1]
        %v742 = vunpack.c.l.b16 %v734
        %v743 = vunpack.c.l.b16 %v735
        %v744 = vunpack.c.l.b16 %v736
        %v745 = vunpack.c.l.b16 %v737
        %v746 = vpack.c.b16 %v742, %v742
        %v747 = vpack.c.b16 %v743, %v743
        %v748 = vpack.c.b16 %v744, %v744
        %v749 = vpack.c.b16 %v745, %v745
        %v750 = vunpack.c.l.b16 %v746
        %v751 = vunpack.c.l.b16 %v747
        %v752 = vunpack.c.l.b16 %v748
        %v753 = vunpack.c.l.b16 %v749
        %v754 = vrot.slane %v750, 1
        %v755 = vsel %vm385, %v751, %v754
        %v756 = vrot.slane %v752, 7
        %v757 = vsel %vm388, %v756, %v755
        %v758 = vrot.slane %v753, 6
        %v759 = vsel %vm391, %v758, %v757
        %v760 = vpack.c.b16 %v759, %v759
        %761 = vrot.lane.b32.xlu0 %v760, 127
        %v762 = vpop.permute.xlu0 %761
        %v764 = vsel %vm400, %v762, 0
        %766 = vmatpush.bf16.msra.mxu0 0
        %767 = vmatpush.bf16.msra.mxu0 0
        %768 = vmatpush.bf16.msra.mxu0 0
        %769 = vmatpush.bf16.msra.mxu0 0
        %770 = vmatpush.bf16.msra.mxu0 0
        %771 = vmatpush.bf16.msra.mxu0 0
        %772 = vmatpush.bf16.msra.mxu0 0
        %773 = vmatpush.bf16.msra.mxu0 %v764
        %774 = vmatmul.bf16.gmra.mxu0 %v398
        %v775 = vpop.f32.mrf.mxu0
        %v776 = vadd.f32 0.0, %v775
        %v777 = vpop.f32.mrf.mxu0
        %778 = vdwg.mxu0
        %v780 = vsel %vm400, %v760, 0
        %782 = vmatpush.bf16.msra.mxu0 0
        %783 = vmatpush.bf16.msra.mxu0 0
        %784 = vmatpush.bf16.msra.mxu0 0
        %785 = vmatpush.bf16.msra.mxu0 0
        %786 = vmatpush.bf16.msra.mxu0 0
        %787 = vmatpush.bf16.msra.mxu0 0
        %788 = vmatpush.bf16.msra.mxu0 0
        %789 = vmatpush.bf16.msra.mxu0 %v780
        %790 = vmatmul.bf16.gmra.mxu0 %v418
        %v791 = vpop.f32.mrf.mxu0
        %v792 = vadd.f32 %v776, %v791
        %v793 = vpop.f32.mrf.mxu0
        %794 = vdwg.mxu0
        %795 = vrot.lane.b32.xlu0 %v760, 126
        %v796 = vpop.permute.xlu0 %795
        %v798 = vsel %vm400, %v796, 0
        %800 = vmatpush.bf16.msra.mxu0 0
        %801 = vmatpush.bf16.msra.mxu0 0
        %802 = vmatpush.bf16.msra.mxu0 0
        %803 = vmatpush.bf16.msra.mxu0 0
        %804 = vmatpush.bf16.msra.mxu0 0
        %805 = vmatpush.bf16.msra.mxu0 0
        %806 = vmatpush.bf16.msra.mxu0 0
        %807 = vmatpush.bf16.msra.mxu0 %v798
        %808 = vmatmul.bf16.gmra.mxu0 %v439
        %v809 = vpop.f32.mrf.mxu0
        %v810 = vadd.f32 0.0, %v809
        %v811 = vpop.f32.mrf.mxu0
        %812 = vdwg.mxu0
        %v813 = vadd.f32 %v792, %v810
        %v814 = vld [vmem:[%s314] sm:$0x2]
        %v815 = vld [vmem:[%s314 + $0x8] sm:$0x2]
        %v816 = vld [vmem:[%s314 + $0x10] sm:$0x2]
        %v817 = vld [vmem:[%s314 + $0x18] sm:$0x2]
        %v822 = vunpack.c.l.b16 %v814
        %v823 = vunpack.c.l.b16 %v815
        %v824 = vunpack.c.l.b16 %v816
        %v825 = vunpack.c.l.b16 %v817
        %v826 = vpack.c.b16 %v822, %v822
        %v827 = vpack.c.b16 %v823, %v823
        %v828 = vpack.c.b16 %v824, %v824
        %v829 = vpack.c.b16 %v825, %v825
        %v830 = vunpack.c.l.b16 %v826
        %v831 = vunpack.c.l.b16 %v827
        %v832 = vunpack.c.l.b16 %v828
        %v833 = vunpack.c.l.b16 %v829
        %v834 = vrot.slane %v830, 2
        %v835 = vrot.slane %v831, 1
        %v836 = vsel %vm385, %v835, %v834
        %v837 = vsel %vm388, %v832, %v836
        %v838 = vrot.slane %v833, 7
        %v839 = vsel %vm391, %v838, %v837
        %v840 = vpack.c.b16 %v839, %v839
        %v842 = vsel %vm400, %v840, 0
        %844 = vmatpush.bf16.msra.mxu0 0
        %845 = vmatpush.bf16.msra.mxu0 0
        %846 = vmatpush.bf16.msra.mxu0 0
        %847 = vmatpush.bf16.msra.mxu0 0
        %848 = vmatpush.bf16.msra.mxu0 0
        %849 = vmatpush.bf16.msra.mxu0 0
        %850 = vmatpush.bf16.msra.mxu0 0
        %851 = vmatpush.bf16.msra.mxu0 %v842
        %852 = vmatmul.bf16.gmra.mxu0 %v466
        %v853 = vpop.f32.mrf.mxu0
        %v854 = vadd.f32 0.0, %v853
        %v855 = vpop.f32.mrf.mxu0
        %856 = vdwg.mxu0
        %v857 = vadd.f32 %v813, %v854
        %858 = vrot.lane.b32.xlu0 %v840, 127
        %v859 = vpop.permute.xlu0 %858
        %v861 = vsel %vm400, %v859, 0
        %863 = vmatpush.bf16.msra.mxu0 0
        %864 = vmatpush.bf16.msra.mxu0 0
        %865 = vmatpush.bf16.msra.mxu0 0
        %866 = vmatpush.bf16.msra.mxu0 0
        %867 = vmatpush.bf16.msra.mxu0 0
        %868 = vmatpush.bf16.msra.mxu0 0
        %869 = vmatpush.bf16.msra.mxu0 0
        %870 = vmatpush.bf16.msra.mxu0 %v861
        %871 = vmatmul.bf16.gmra.mxu0 %v488
        %v872 = vpop.f32.mrf.mxu0
        %v873 = vadd.f32 0.0, %v872
        %v874 = vpop.f32.mrf.mxu0
        %875 = vdwg.mxu0
        %v876 = vadd.f32 %v857, %v873
        %877 = vrot.lane.b32.xlu0 %v840, 126
        %v878 = vpop.permute.xlu0 %877
        %v880 = vsel %vm400, %v878, 0
        %882 = vmatpush.bf16.msra.mxu0 0
        %883 = vmatpush.bf16.msra.mxu0 0
        %884 = vmatpush.bf16.msra.mxu0 0
        %885 = vmatpush.bf16.msra.mxu0 0
        %886 = vmatpush.bf16.msra.mxu0 0
        %887 = vmatpush.bf16.msra.mxu0 0
        %888 = vmatpush.bf16.msra.mxu0 0
        %889 = vmatpush.bf16.msra.mxu0 %v880
        %890 = vmatmul.bf16.gmra.mxu0 %v510
        %v891 = vpop.f32.mrf.mxu0
        %v892 = vadd.f32 0.0, %v891
        %v893 = vpop.f32.mrf.mxu0
        %894 = vdwg.mxu0
        %v895 = vadd.f32 %v876, %v892
        %v896 = vrot.slane %v830, 3
        %v897 = vrot.slane %v831, 2
        %v898 = vsel %vm385, %v897, %v896
        %v899 = vrot.slane %v832, 1
        %v900 = vsel %vm388, %v899, %v898
        %v901 = vsel %vm391, %v833, %v900
        %v902 = vpack.c.b16 %v901, %v901
        %v904 = vsel %vm400, %v902, 0
        %906 = vmatpush.bf16.msra.mxu0 0
        %907 = vmatpush.bf16.msra.mxu0 0
        %908 = vmatpush.bf16.msra.mxu0 0
        %909 = vmatpush.bf16.msra.mxu0 0
        %910 = vmatpush.bf16.msra.mxu0 0
        %911 = vmatpush.bf16.msra.mxu0 0
        %912 = vmatpush.bf16.msra.mxu0 0
        %913 = vmatpush.bf16.msra.mxu0 %v904
        %914 = vmatmul.bf16.gmra.mxu0 %v557
        %v915 = vpop.f32.mrf.mxu0
        %v916 = vadd.f32 0.0, %v915
        %v917 = vpop.f32.mrf.mxu0
        %918 = vdwg.mxu0
        %v919 = vadd.f32 %v895, %v916
        %920 = vrot.lane.b32.xlu0 %v902, 127
        %v921 = vpop.permute.xlu0 %920
        %v923 = vsel %vm400, %v921, 0
        %925 = vmatpush.bf16.msra.mxu0 0
        %926 = vmatpush.bf16.msra.mxu0 0
        %927 = vmatpush.bf16.msra.mxu0 0
        %928 = vmatpush.bf16.msra.mxu0 0
        %929 = vmatpush.bf16.msra.mxu0 0
        %930 = vmatpush.bf16.msra.mxu0 0
        %931 = vmatpush.bf16.msra.mxu0 0
        %932 = vmatpush.bf16.msra.mxu0 %v923
        %933 = vmatmul.bf16.gmra.mxu0 %v579
        %v934 = vpop.f32.mrf.mxu0
        %v935 = vadd.f32 0.0, %v934
        %v936 = vpop.f32.mrf.mxu0
        %937 = vdwg.mxu0
        %v938 = vadd.f32 %v919, %v935
        %939 = vrot.lane.b32.xlu0 %v902, 126
        %v940 = vpop.permute.xlu0 %939
        %v942 = vsel %vm400, %v940, 0
        %944 = vmatpush.bf16.msra.mxu0 0
        %945 = vmatpush.bf16.msra.mxu0 0
        %946 = vmatpush.bf16.msra.mxu0 0
        %947 = vmatpush.bf16.msra.mxu0 0
        %948 = vmatpush.bf16.msra.mxu0 0
        %949 = vmatpush.bf16.msra.mxu0 0
        %950 = vmatpush.bf16.msra.mxu0 0
        %951 = vmatpush.bf16.msra.mxu0 %v942
        %952 = vmatmul.bf16.gmra.mxu0 %v601
        %v953 = vpop.f32.mrf.mxu0
        %v954 = vadd.f32 0.0, %v953
        %v955 = vpop.f32.mrf.mxu0
        %956 = vdwg.mxu0
        %v957 = vadd.f32 %v938, %v954
        %v958 = vadd.f32 %v957, %v623
        %v959 = vmax.f32 %v958, 0.0
        %v960 = vpack.c.bf16 %v959, %v959
        %v962 = vrot.slane %v960, 3
        %v965 = vsel %vm630, %v960, %v962
        %v967 = vsel %vm385, %v960, %v962
        %v969 = vrot.slane %v967, 1
        %v970 = vsel %vm388, %v960, %v962
        %v972 = vrot.slane %v970, 2
        %v973 = vsel %vm391, %v960, %v962
        %v975 = vrot.slane %v973, 3
        %v976 = vunpack.i.l.s16 %v965
        %v977 = vunpack.i.h.s16 %v965
        %v978 = vunpack.i.l.s16 %v969
        %v979 = vunpack.i.h.s16 %v969
        %v980 = vunpack.i.l.s16 %v972
        %v981 = vunpack.i.h.s16 %v972
        %v982 = vunpack.i.l.s16 %v975
        %v983 = vunpack.i.h.s16 %v975
        %v984 = vpack.i.b16 %v976, %v976
        %v985 = vpack.i.b16 %v977, %v977
        %v986 = vpack.i.b16 %v978, %v978
        %v987 = vpack.i.b16 %v979, %v979
        %v988 = vpack.i.b16 %v980, %v980
        %v989 = vpack.i.b16 %v981, %v981
        %v990 = vpack.i.b16 %v982, %v982
        %v991 = vpack.i.b16 %v983, %v983
        %v993 = vunpack.c.l.s4 286326784
        %v994 = vunpack.c.0.s8 %v993
        %v995 = vperm.slane %v984, %v994
        %v997 = vunpack.c.l.s4 286326784
        %v998 = vunpack.c.0.s8 %v997
        %v999 = vperm.slane %v985, %v998
        %v1001 = vunpack.c.l.s4 286326784
        %v1002 = vunpack.c.0.s8 %v1001
        %v1003 = vperm.slane %v986, %v1002
        %v1005 = vunpack.c.l.s4 286326784
        %v1006 = vunpack.c.0.s8 %v1005
        %v1007 = vperm.slane %v987, %v1006
        %v1009 = vunpack.c.l.s4 286326784
        %v1010 = vunpack.c.0.s8 %v1009
        %v1011 = vperm.slane %v988, %v1010
        %v1013 = vunpack.c.l.s4 286326784
        %v1014 = vunpack.c.0.s8 %v1013
        %v1015 = vperm.slane %v989, %v1014
        %v1017 = vunpack.c.l.s4 286326784
        %v1018 = vunpack.c.0.s8 %v1017
        %v1019 = vperm.slane %v990, %v1018
        %v1021 = vunpack.c.l.s4 286326784
        %v1022 = vunpack.c.0.s8 %v1021
        %v1023 = vperm.slane %v991, %v1022
        %vm1032 = vsmask.f32 7938
        %vm1033 = vmand %vm700, %vm1032
        %v1034 = vld [vmem:[%s281] sm:$0x1]
        %v1035 = vsel %vm1033, %v995, %v1034
        %1036 = vst [vmem:[%s281] sm:$0x1] %v1035
        %v1037 = vld [vmem:[%s281 + $0x4] sm:$0x1]
        %v1038 = vsel %vm1033, %v999, %v1037
        %1039 = vst [vmem:[%s281 + $0x4] sm:$0x1] %v1038
        %v1040 = vld [vmem:[%s281 + $0x8] sm:$0x1]
        %v1041 = vsel %vm1033, %v1003, %v1040
        %1042 = vst [vmem:[%s281 + $0x8] sm:$0x1] %v1041
        %v1043 = vld [vmem:[%s281 + $0xc] sm:$0x1]
        %v1044 = vsel %vm1033, %v1007, %v1043
        %1045 = vst [vmem:[%s281 + $0xc] sm:$0x1] %v1044
        %v1046 = vld [vmem:[%s281 + $0x10] sm:$0x1]
        %v1047 = vsel %vm1033, %v1011, %v1046
        %1048 = vst [vmem:[%s281 + $0x10] sm:$0x1] %v1047
        %v1049 = vld [vmem:[%s281 + $0x14] sm:$0x1]
        %v1050 = vsel %vm1033, %v1015, %v1049
        %1051 = vst [vmem:[%s281 + $0x14] sm:$0x1] %v1050
        %v1052 = vld [vmem:[%s281 + $0x18] sm:$0x1]
        %v1053 = vsel %vm1033, %v1019, %v1052
        %1054 = vst [vmem:[%s281 + $0x18] sm:$0x1] %v1053
        %v1055 = vld [vmem:[%s281 + $0x1c] sm:$0x1]
        %v1056 = vsel %vm1033, %v1023, %v1055
        %1057 = vst [vmem:[%s281 + $0x1c] sm:$0x1] %v1056
        %v1058 = vsub.f32 %v959, %v730
        %v1059 = vadd.f32 %v732, %v1058
        %v1060 = vmul.f32 %v1058, %v1058
        %v1061 = vadd.f32 %v733, %v1060
        %v1062 = vld [vmem:[%s314] sm:$0x2]
        %v1063 = vld [vmem:[%s314 + $0x8] sm:$0x2]
        %v1064 = vld [vmem:[%s314 + $0x10] sm:$0x2]
        %v1065 = vld [vmem:[%s314 + $0x18] sm:$0x2]
        %v1070 = vunpack.c.l.b16 %v1062
        %v1071 = vunpack.c.l.b16 %v1063
        %v1072 = vunpack.c.l.b16 %v1064
        %v1073 = vunpack.c.l.b16 %v1065
        %v1074 = vpack.c.b16 %v1070, %v1070
        %v1075 = vpack.c.b16 %v1071, %v1071
        %v1076 = vpack.c.b16 %v1072, %v1072
        %v1077 = vpack.c.b16 %v1073, %v1073
        %v1078 = vunpack.c.l.b16 %v1074
        %v1079 = vunpack.c.l.b16 %v1075
        %v1080 = vunpack.c.l.b16 %v1076
        %v1081 = vunpack.c.l.b16 %v1077
        %v1082 = vrot.slane %v1078, 2
        %v1083 = vrot.slane %v1079, 1
        %v1084 = vsel %vm385, %v1083, %v1082
        %v1085 = vsel %vm388, %v1080, %v1084
        %v1086 = vrot.slane %v1081, 7
        %v1087 = vsel %vm391, %v1086, %v1085
        %v1088 = vpack.c.b16 %v1087, %v1087
        %1089 = vrot.lane.b32.xlu0 %v1088, 127
        %v1090 = vpop.permute.xlu0 %1089
        %v1092 = vsel %vm400, %v1090, 0
        %1094 = vmatpush.bf16.msra.mxu0 0
        %1095 = vmatpush.bf16.msra.mxu0 0
        %1096 = vmatpush.bf16.msra.mxu0 0
        %1097 = vmatpush.bf16.msra.mxu0 0
        %1098 = vmatpush.bf16.msra.mxu0 0
        %1099 = vmatpush.bf16.msra.mxu0 0
        %1100 = vmatpush.bf16.msra.mxu0 0
        %1101 = vmatpush.bf16.msra.mxu0 %v1092
        %1102 = vmatmul.bf16.gmra.mxu0 %v398
        %v1103 = vpop.f32.mrf.mxu0
        %v1104 = vadd.f32 0.0, %v1103
        %v1105 = vpop.f32.mrf.mxu0
        %1106 = vdwg.mxu0
        %v1108 = vsel %vm400, %v1088, 0
        %1110 = vmatpush.bf16.msra.mxu0 0
        %1111 = vmatpush.bf16.msra.mxu0 0
        %1112 = vmatpush.bf16.msra.mxu0 0
        %1113 = vmatpush.bf16.msra.mxu0 0
        %1114 = vmatpush.bf16.msra.mxu0 0
        %1115 = vmatpush.bf16.msra.mxu0 0
        %1116 = vmatpush.bf16.msra.mxu0 0
        %1117 = vmatpush.bf16.msra.mxu0 %v1108
        %1118 = vmatmul.bf16.gmra.mxu0 %v418
        %v1119 = vpop.f32.mrf.mxu0
        %v1120 = vadd.f32 %v1104, %v1119
        %v1121 = vpop.f32.mrf.mxu0
        %1122 = vdwg.mxu0
        %1123 = vrot.lane.b32.xlu0 %v1088, 126
        %v1124 = vpop.permute.xlu0 %1123
        %v1126 = vsel %vm400, %v1124, 0
        %1128 = vmatpush.bf16.msra.mxu0 0
        %1129 = vmatpush.bf16.msra.mxu0 0
        %1130 = vmatpush.bf16.msra.mxu0 0
        %1131 = vmatpush.bf16.msra.mxu0 0
        %1132 = vmatpush.bf16.msra.mxu0 0
        %1133 = vmatpush.bf16.msra.mxu0 0
        %1134 = vmatpush.bf16.msra.mxu0 0
        %1135 = vmatpush.bf16.msra.mxu0 %v1126
        %1136 = vmatmul.bf16.gmra.mxu0 %v439
        %v1137 = vpop.f32.mrf.mxu0
        %v1138 = vadd.f32 0.0, %v1137
        %v1139 = vpop.f32.mrf.mxu0
        %1140 = vdwg.mxu0
        %v1141 = vadd.f32 %v1120, %v1138
        %v1142 = vrot.slane %v1078, 3
        %v1143 = vrot.slane %v1079, 2
        %v1144 = vsel %vm385, %v1143, %v1142
        %v1145 = vrot.slane %v1080, 1
        %v1146 = vsel %vm388, %v1145, %v1144
        %v1147 = vsel %vm391, %v1081, %v1146
        %v1148 = vpack.c.b16 %v1147, %v1147
        %v1150 = vsel %vm400, %v1148, 0
        %1152 = vmatpush.bf16.msra.mxu0 0
        %1153 = vmatpush.bf16.msra.mxu0 0
        %1154 = vmatpush.bf16.msra.mxu0 0
        %1155 = vmatpush.bf16.msra.mxu0 0
        %1156 = vmatpush.bf16.msra.mxu0 0
        %1157 = vmatpush.bf16.msra.mxu0 0
        %1158 = vmatpush.bf16.msra.mxu0 0
        %1159 = vmatpush.bf16.msra.mxu0 %v1150
        %1160 = vmatmul.bf16.gmra.mxu0 %v466
        %v1161 = vpop.f32.mrf.mxu0
        %v1162 = vadd.f32 0.0, %v1161
        %v1163 = vpop.f32.mrf.mxu0
        %1164 = vdwg.mxu0
        %v1165 = vadd.f32 %v1141, %v1162
        %1166 = vrot.lane.b32.xlu0 %v1148, 127
        %v1167 = vpop.permute.xlu0 %1166
        %v1169 = vsel %vm400, %v1167, 0
        %1171 = vmatpush.bf16.msra.mxu0 0
        %1172 = vmatpush.bf16.msra.mxu0 0
        %1173 = vmatpush.bf16.msra.mxu0 0
        %1174 = vmatpush.bf16.msra.mxu0 0
        %1175 = vmatpush.bf16.msra.mxu0 0
        %1176 = vmatpush.bf16.msra.mxu0 0
        %1177 = vmatpush.bf16.msra.mxu0 0
        %1178 = vmatpush.bf16.msra.mxu0 %v1169
        %1179 = vmatmul.bf16.gmra.mxu0 %v488
        %v1180 = vpop.f32.mrf.mxu0
        %v1181 = vadd.f32 0.0, %v1180
        %v1182 = vpop.f32.mrf.mxu0
        %1183 = vdwg.mxu0
        %v1184 = vadd.f32 %v1165, %v1181
        %1185 = vrot.lane.b32.xlu0 %v1148, 126
        %v1186 = vpop.permute.xlu0 %1185
        %v1188 = vsel %vm400, %v1186, 0
        %1190 = vmatpush.bf16.msra.mxu0 0
        %1191 = vmatpush.bf16.msra.mxu0 0
        %1192 = vmatpush.bf16.msra.mxu0 0
        %1193 = vmatpush.bf16.msra.mxu0 0
        %1194 = vmatpush.bf16.msra.mxu0 0
        %1195 = vmatpush.bf16.msra.mxu0 0
        %1196 = vmatpush.bf16.msra.mxu0 0
        %1197 = vmatpush.bf16.msra.mxu0 %v1188
        %1198 = vmatmul.bf16.gmra.mxu0 %v510
        %v1199 = vpop.f32.mrf.mxu0
        %v1200 = vadd.f32 0.0, %v1199
        %v1201 = vpop.f32.mrf.mxu0
        %1202 = vdwg.mxu0
        %v1203 = vadd.f32 %v1184, %v1200
        %v1204 = vld [vmem:[%s314] sm:$0x4]
        %v1205 = vld [vmem:[%s314 + $0x8] sm:$0x4]
        %v1206 = vld [vmem:[%s314 + $0x10] sm:$0x4]
        %v1207 = vld [vmem:[%s314 + $0x18] sm:$0x4]
        %v1212 = vunpack.c.l.b16 %v1204
        %v1213 = vunpack.c.l.b16 %v1205
        %v1214 = vunpack.c.l.b16 %v1206
        %v1215 = vunpack.c.l.b16 %v1207
        %v1216 = vpack.c.b16 %v1212, %v1212
        %v1217 = vpack.c.b16 %v1213, %v1213
        %v1218 = vpack.c.b16 %v1214, %v1214
        %v1219 = vpack.c.b16 %v1215, %v1215
        %v1220 = vunpack.c.l.b16 %v1216
        %v1221 = vunpack.c.l.b16 %v1217
        %v1222 = vunpack.c.l.b16 %v1218
        %v1223 = vunpack.c.l.b16 %v1219
        %v1224 = vrot.slane %v1220, 4
        %v1225 = vrot.slane %v1221, 3
        %v1226 = vsel %vm385, %v1225, %v1224
        %v1227 = vrot.slane %v1222, 2
        %v1228 = vsel %vm388, %v1227, %v1226
        %v1229 = vrot.slane %v1223, 1
        %v1230 = vsel %vm391, %v1229, %v1228
        %v1231 = vpack.c.b16 %v1230, %v1230
        %v1233 = vsel %vm400, %v1231, 0
        %1235 = vmatpush.bf16.msra.mxu0 0
        %1236 = vmatpush.bf16.msra.mxu0 0
        %1237 = vmatpush.bf16.msra.mxu0 0
        %1238 = vmatpush.bf16.msra.mxu0 0
        %1239 = vmatpush.bf16.msra.mxu0 0
        %1240 = vmatpush.bf16.msra.mxu0 0
        %1241 = vmatpush.bf16.msra.mxu0 0
        %1242 = vmatpush.bf16.msra.mxu0 %v1233
        %1243 = vmatmul.bf16.gmra.mxu0 %v557
        %v1244 = vpop.f32.mrf.mxu0
        %v1245 = vadd.f32 0.0, %v1244
        %v1246 = vpop.f32.mrf.mxu0
        %1247 = vdwg.mxu0
        %v1248 = vadd.f32 %v1203, %v1245
        %1249 = vrot.lane.b32.xlu0 %v1231, 127
        %v1250 = vpop.permute.xlu0 %1249
        %v1252 = vsel %vm400, %v1250, 0
        %1254 = vmatpush.bf16.msra.mxu0 0
        %1255 = vmatpush.bf16.msra.mxu0 0
        %1256 = vmatpush.bf16.msra.mxu0 0
        %1257 = vmatpush.bf16.msra.mxu0 0
        %1258 = vmatpush.bf16.msra.mxu0 0
        %1259 = vmatpush.bf16.msra.mxu0 0
        %1260 = vmatpush.bf16.msra.mxu0 0
        %1261 = vmatpush.bf16.msra.mxu0 %v1252
        %1262 = vmatmul.bf16.gmra.mxu0 %v579
        %v1263 = vpop.f32.mrf.mxu0
        %v1264 = vadd.f32 0.0, %v1263
        %v1265 = vpop.f32.mrf.mxu0
        %1266 = vdwg.mxu0
        %v1267 = vadd.f32 %v1248, %v1264
        %1268 = vrot.lane.b32.xlu0 %v1231, 126
        %v1269 = vpop.permute.xlu0 %1268
        %v1271 = vsel %vm400, %v1269, 0
        %1273 = vmatpush.bf16.msra.mxu0 0
        %1274 = vmatpush.bf16.msra.mxu0 0
        %1275 = vmatpush.bf16.msra.mxu0 0
        %1276 = vmatpush.bf16.msra.mxu0 0
        %1277 = vmatpush.bf16.msra.mxu0 0
        %1278 = vmatpush.bf16.msra.mxu0 0
        %1279 = vmatpush.bf16.msra.mxu0 0
        %1280 = vmatpush.bf16.msra.mxu0 %v1271
        %1281 = vmatmul.bf16.gmra.mxu0 %v601
        %v1282 = vpop.f32.mrf.mxu0
        %v1283 = vadd.f32 0.0, %v1282
        %v1284 = vpop.f32.mrf.mxu0
        %1285 = vdwg.mxu0
        %v1286 = vadd.f32 %v1267, %v1283
        %v1287 = vadd.f32 %v1286, %v623
        %v1288 = vmax.f32 %v1287, 0.0
        %v1289 = vpack.c.bf16 %v1288, %v1288
        %v1291 = vrot.slane %v1289, 3
        %v1294 = vsel %vm630, %v1289, %v1291
        %v1296 = vsel %vm385, %v1289, %v1291
        %v1298 = vrot.slane %v1296, 1
        %v1299 = vsel %vm388, %v1289, %v1291
        %v1301 = vrot.slane %v1299, 2
        %v1302 = vsel %vm391, %v1289, %v1291
        %v1304 = vrot.slane %v1302, 3
        %v1305 = vunpack.i.l.s16 %v1294
        %v1306 = vunpack.i.h.s16 %v1294
        %v1307 = vunpack.i.l.s16 %v1298
        %v1308 = vunpack.i.h.s16 %v1298
        %v1309 = vunpack.i.l.s16 %v1301
        %v1310 = vunpack.i.h.s16 %v1301
        %v1311 = vunpack.i.l.s16 %v1304
        %v1312 = vunpack.i.h.s16 %v1304
        %v1313 = vpack.i.b16 %v1305, %v1305
        %v1314 = vpack.i.b16 %v1306, %v1306
        %v1315 = vpack.i.b16 %v1307, %v1307
        %v1316 = vpack.i.b16 %v1308, %v1308
        %v1317 = vpack.i.b16 %v1309, %v1309
        %v1318 = vpack.i.b16 %v1310, %v1310
        %v1319 = vpack.i.b16 %v1311, %v1311
        %v1320 = vpack.i.b16 %v1312, %v1312
        %v1322 = vunpack.c.l.s4 286326784
        %v1323 = vunpack.c.0.s8 %v1322
        %v1324 = vperm.slane %v1313, %v1323
        %v1326 = vunpack.c.l.s4 286326784
        %v1327 = vunpack.c.0.s8 %v1326
        %v1328 = vperm.slane %v1314, %v1327
        %v1330 = vunpack.c.l.s4 286326784
        %v1331 = vunpack.c.0.s8 %v1330
        %v1332 = vperm.slane %v1315, %v1331
        %v1334 = vunpack.c.l.s4 286326784
        %v1335 = vunpack.c.0.s8 %v1334
        %v1336 = vperm.slane %v1316, %v1335
        %v1338 = vunpack.c.l.s4 286326784
        %v1339 = vunpack.c.0.s8 %v1338
        %v1340 = vperm.slane %v1317, %v1339
        %v1342 = vunpack.c.l.s4 286326784
        %v1343 = vunpack.c.0.s8 %v1342
        %v1344 = vperm.slane %v1318, %v1343
        %v1346 = vunpack.c.l.s4 286326784
        %v1347 = vunpack.c.0.s8 %v1346
        %v1348 = vperm.slane %v1319, %v1347
        %v1350 = vunpack.c.l.s4 286326784
        %v1351 = vunpack.c.0.s8 %v1350
        %v1352 = vperm.slane %v1320, %v1351
        %vm1361 = vcmask 123905
        %vm1362 = vsmask.f32 1280
        %vm1363 = vmand %vm1361, %vm1362
        %v1364 = vld [vmem:[%s281] sm:$0x2]
        %v1365 = vsel %vm1363, %v1324, %v1364
        %1366 = vst [vmem:[%s281] sm:$0x2] %v1365
        %v1367 = vld [vmem:[%s281 + $0x4] sm:$0x2]
        %v1368 = vsel %vm1363, %v1328, %v1367
        %1369 = vst [vmem:[%s281 + $0x4] sm:$0x2] %v1368
        %v1370 = vld [vmem:[%s281 + $0x8] sm:$0x2]
        %v1371 = vsel %vm1363, %v1332, %v1370
        %1372 = vst [vmem:[%s281 + $0x8] sm:$0x2] %v1371
        %v1373 = vld [vmem:[%s281 + $0xc] sm:$0x2]
        %v1374 = vsel %vm1363, %v1336, %v1373
        %1375 = vst [vmem:[%s281 + $0xc] sm:$0x2] %v1374
        %v1376 = vld [vmem:[%s281 + $0x10] sm:$0x2]
        %v1377 = vsel %vm1363, %v1340, %v1376
        %1378 = vst [vmem:[%s281 + $0x10] sm:$0x2] %v1377
        %v1379 = vld [vmem:[%s281 + $0x14] sm:$0x2]
        %v1380 = vsel %vm1363, %v1344, %v1379
        %1381 = vst [vmem:[%s281 + $0x14] sm:$0x2] %v1380
        %v1382 = vld [vmem:[%s281 + $0x18] sm:$0x2]
        %v1383 = vsel %vm1363, %v1348, %v1382
        %1384 = vst [vmem:[%s281 + $0x18] sm:$0x2] %v1383
        %v1385 = vld [vmem:[%s281 + $0x1c] sm:$0x2]
        %v1386 = vsel %vm1363, %v1352, %v1385
        %1387 = vst [vmem:[%s281 + $0x1c] sm:$0x2] %v1386
        %v1388 = vsub.f32 %v1288, %v730
        %v1389 = vadd.f32 %v1059, %v1388
        %v1390 = vmul.f32 %v1388, %v1388
        %v1391 = vadd.f32 %v1061, %v1390
        %v1392 = vld [vmem:[%s314] sm:$0x2]
        %v1393 = vld [vmem:[%s314 + $0x8] sm:$0x2]
        %v1394 = vld [vmem:[%s314 + $0x10] sm:$0x2]
        %v1395 = vld [vmem:[%s314 + $0x18] sm:$0x2]
        %v1400 = vunpack.c.l.b16 %v1392
        %v1401 = vunpack.c.l.b16 %v1393
        %v1402 = vunpack.c.l.b16 %v1394
        %v1403 = vunpack.c.l.b16 %v1395
        %v1404 = vpack.c.b16 %v1400, %v1400
        %v1405 = vpack.c.b16 %v1401, %v1401
        %v1406 = vpack.c.b16 %v1402, %v1402
        %v1407 = vpack.c.b16 %v1403, %v1403
        %v1408 = vunpack.c.l.b16 %v1404
        %v1409 = vunpack.c.l.b16 %v1405
        %v1410 = vunpack.c.l.b16 %v1406
        %v1411 = vunpack.c.l.b16 %v1407
        %v1412 = vrot.slane %v1408, 3
        %v1413 = vrot.slane %v1409, 2
        %v1414 = vsel %vm385, %v1413, %v1412
        %v1415 = vrot.slane %v1410, 1
        %v1416 = vsel %vm388, %v1415, %v1414
        %v1417 = vsel %vm391, %v1411, %v1416
        %v1418 = vpack.c.b16 %v1417, %v1417
        %1419 = vrot.lane.b32.xlu0 %v1418, 127
        %v1420 = vpop.permute.xlu0 %1419
        %v1422 = vsel %vm400, %v1420, 0
        %1424 = vmatpush.bf16.msra.mxu0 0
        %1425 = vmatpush.bf16.msra.mxu0 0
        %1426 = vmatpush.bf16.msra.mxu0 0
        %1427 = vmatpush.bf16.msra.mxu0 0
        %1428 = vmatpush.bf16.msra.mxu0 0
        %1429 = vmatpush.bf16.msra.mxu0 0
        %1430 = vmatpush.bf16.msra.mxu0 0
        %1431 = vmatpush.bf16.msra.mxu0 %v1422
        %1432 = vmatmul.bf16.gmra.mxu0 %v398
        %v1433 = vpop.f32.mrf.mxu0
        %v1434 = vadd.f32 0.0, %v1433
        %v1435 = vpop.f32.mrf.mxu0
        %1436 = vdwg.mxu0
        %v1438 = vsel %vm400, %v1418, 0
        %1440 = vmatpush.bf16.msra.mxu0 0
        %1441 = vmatpush.bf16.msra.mxu0 0
        %1442 = vmatpush.bf16.msra.mxu0 0
        %1443 = vmatpush.bf16.msra.mxu0 0
        %1444 = vmatpush.bf16.msra.mxu0 0
        %1445 = vmatpush.bf16.msra.mxu0 0
        %1446 = vmatpush.bf16.msra.mxu0 0
        %1447 = vmatpush.bf16.msra.mxu0 %v1438
        %1448 = vmatmul.bf16.gmra.mxu0 %v418
        %v1449 = vpop.f32.mrf.mxu0
        %v1450 = vadd.f32 %v1434, %v1449
        %v1451 = vpop.f32.mrf.mxu0
        %1452 = vdwg.mxu0
        %1453 = vrot.lane.b32.xlu0 %v1418, 126
        %v1454 = vpop.permute.xlu0 %1453
        %v1456 = vsel %vm400, %v1454, 0
        %1458 = vmatpush.bf16.msra.mxu0 0
        %1459 = vmatpush.bf16.msra.mxu0 0
        %1460 = vmatpush.bf16.msra.mxu0 0
        %1461 = vmatpush.bf16.msra.mxu0 0
        %1462 = vmatpush.bf16.msra.mxu0 0
        %1463 = vmatpush.bf16.msra.mxu0 0
        %1464 = vmatpush.bf16.msra.mxu0 0
        %1465 = vmatpush.bf16.msra.mxu0 %v1456
        %1466 = vmatmul.bf16.gmra.mxu0 %v439
        %v1467 = vpop.f32.mrf.mxu0
        %v1468 = vadd.f32 0.0, %v1467
        %v1469 = vpop.f32.mrf.mxu0
        %1470 = vdwg.mxu0
        %v1471 = vadd.f32 %v1450, %v1468
        %v1472 = vld [vmem:[%s314] sm:$0x4]
        %v1473 = vld [vmem:[%s314 + $0x8] sm:$0x4]
        %v1474 = vld [vmem:[%s314 + $0x10] sm:$0x4]
        %v1475 = vld [vmem:[%s314 + $0x18] sm:$0x4]
        %v1480 = vunpack.c.l.b16 %v1472
        %v1481 = vunpack.c.l.b16 %v1473
        %v1482 = vunpack.c.l.b16 %v1474
        %v1483 = vunpack.c.l.b16 %v1475
        %v1484 = vpack.c.b16 %v1480, %v1480
        %v1485 = vpack.c.b16 %v1481, %v1481
        %v1486 = vpack.c.b16 %v1482, %v1482
        %v1487 = vpack.c.b16 %v1483, %v1483
        %v1488 = vunpack.c.l.b16 %v1484
        %v1489 = vunpack.c.l.b16 %v1485
        %v1490 = vunpack.c.l.b16 %v1486
        %v1491 = vunpack.c.l.b16 %v1487
        %v1492 = vrot.slane %v1488, 4
        %v1493 = vrot.slane %v1489, 3
        %v1494 = vsel %vm385, %v1493, %v1492
        %v1495 = vrot.slane %v1490, 2
        %v1496 = vsel %vm388, %v1495, %v1494
        %v1497 = vrot.slane %v1491, 1
        %v1498 = vsel %vm391, %v1497, %v1496
        %v1499 = vpack.c.b16 %v1498, %v1498
        %v1501 = vsel %vm400, %v1499, 0
        %1503 = vmatpush.bf16.msra.mxu0 0
        %1504 = vmatpush.bf16.msra.mxu0 0
        %1505 = vmatpush.bf16.msra.mxu0 0
        %1506 = vmatpush.bf16.msra.mxu0 0
        %1507 = vmatpush.bf16.msra.mxu0 0
        %1508 = vmatpush.bf16.msra.mxu0 0
        %1509 = vmatpush.bf16.msra.mxu0 0
        %1510 = vmatpush.bf16.msra.mxu0 %v1501
        %1511 = vmatmul.bf16.gmra.mxu0 %v466
        %v1512 = vpop.f32.mrf.mxu0
        %v1513 = vadd.f32 0.0, %v1512
        %v1514 = vpop.f32.mrf.mxu0
        %1515 = vdwg.mxu0
        %v1516 = vadd.f32 %v1471, %v1513
        %1517 = vrot.lane.b32.xlu0 %v1499, 127
        %v1518 = vpop.permute.xlu0 %1517
        %v1520 = vsel %vm400, %v1518, 0
        %1522 = vmatpush.bf16.msra.mxu0 0
        %1523 = vmatpush.bf16.msra.mxu0 0
        %1524 = vmatpush.bf16.msra.mxu0 0
        %1525 = vmatpush.bf16.msra.mxu0 0
        %1526 = vmatpush.bf16.msra.mxu0 0
        %1527 = vmatpush.bf16.msra.mxu0 0
        %1528 = vmatpush.bf16.msra.mxu0 0
        %1529 = vmatpush.bf16.msra.mxu0 %v1520
        %1530 = vmatmul.bf16.gmra.mxu0 %v488
        %v1531 = vpop.f32.mrf.mxu0
        %v1532 = vadd.f32 0.0, %v1531
        %v1533 = vpop.f32.mrf.mxu0
        %1534 = vdwg.mxu0
        %v1535 = vadd.f32 %v1516, %v1532
        %1536 = vrot.lane.b32.xlu0 %v1499, 126
        %v1537 = vpop.permute.xlu0 %1536
        %v1539 = vsel %vm400, %v1537, 0
        %1541 = vmatpush.bf16.msra.mxu0 0
        %1542 = vmatpush.bf16.msra.mxu0 0
        %1543 = vmatpush.bf16.msra.mxu0 0
        %1544 = vmatpush.bf16.msra.mxu0 0
        %1545 = vmatpush.bf16.msra.mxu0 0
        %1546 = vmatpush.bf16.msra.mxu0 0
        %1547 = vmatpush.bf16.msra.mxu0 0
        %1548 = vmatpush.bf16.msra.mxu0 %v1539
        %1549 = vmatmul.bf16.gmra.mxu0 %v510
        %v1550 = vpop.f32.mrf.mxu0
        %v1551 = vadd.f32 0.0, %v1550
        %v1552 = vpop.f32.mrf.mxu0
        %1553 = vdwg.mxu0
        %v1554 = vadd.f32 %v1535, %v1551
        %v1555 = vrot.slane %v1488, 5
        %v1556 = vrot.slane %v1489, 4
        %v1557 = vsel %vm385, %v1556, %v1555
        %v1558 = vrot.slane %v1490, 3
        %v1559 = vsel %vm388, %v1558, %v1557
        %v1560 = vrot.slane %v1491, 2
        %v1561 = vsel %vm391, %v1560, %v1559
        %v1562 = vpack.c.b16 %v1561, %v1561
        %v1564 = vsel %vm400, %v1562, 0
        %1566 = vmatpush.bf16.msra.mxu0 0
        %1567 = vmatpush.bf16.msra.mxu0 0
        %1568 = vmatpush.bf16.msra.mxu0 0
        %1569 = vmatpush.bf16.msra.mxu0 0
        %1570 = vmatpush.bf16.msra.mxu0 0
        %1571 = vmatpush.bf16.msra.mxu0 0
        %1572 = vmatpush.bf16.msra.mxu0 0
        %1573 = vmatpush.bf16.msra.mxu0 %v1564
        %1574 = vmatmul.bf16.gmra.mxu0 %v557
        %v1575 = vpop.f32.mrf.mxu0
        %v1576 = vadd.f32 0.0, %v1575
        %v1577 = vpop.f32.mrf.mxu0
        %1578 = vdwg.mxu0
        %v1579 = vadd.f32 %v1554, %v1576
        %1580 = vrot.lane.b32.xlu0 %v1562, 127
        %v1581 = vpop.permute.xlu0 %1580
        %v1583 = vsel %vm400, %v1581, 0
        %1585 = vmatpush.bf16.msra.mxu0 0
        %1586 = vmatpush.bf16.msra.mxu0 0
        %1587 = vmatpush.bf16.msra.mxu0 0
        %1588 = vmatpush.bf16.msra.mxu0 0
        %1589 = vmatpush.bf16.msra.mxu0 0
        %1590 = vmatpush.bf16.msra.mxu0 0
        %1591 = vmatpush.bf16.msra.mxu0 0
        %1592 = vmatpush.bf16.msra.mxu0 %v1583
        %1593 = vmatmul.bf16.gmra.mxu0 %v579
        %v1594 = vpop.f32.mrf.mxu0
        %v1595 = vadd.f32 0.0, %v1594
        %v1596 = vpop.f32.mrf.mxu0
        %1597 = vdwg.mxu0
        %v1598 = vadd.f32 %v1579, %v1595
        %1599 = vrot.lane.b32.xlu0 %v1562, 126
        %v1600 = vpop.permute.xlu0 %1599
        %v1602 = vsel %vm400, %v1600, 0
        %1604 = vmatpush.bf16.msra.mxu0 0
        %1605 = vmatpush.bf16.msra.mxu0 0
        %1606 = vmatpush.bf16.msra.mxu0 0
        %1607 = vmatpush.bf16.msra.mxu0 0
        %1608 = vmatpush.bf16.msra.mxu0 0
        %1609 = vmatpush.bf16.msra.mxu0 0
        %1610 = vmatpush.bf16.msra.mxu0 0
        %1611 = vmatpush.bf16.msra.mxu0 %v1602
        %1612 = vmatmul.bf16.gmra.mxu0 %v601
        %v1613 = vpop.f32.mrf.mxu0
        %v1614 = vadd.f32 0.0, %v1613
        %v1615 = vpop.f32.mrf.mxu0
        %1616 = vdwg.mxu0
        %v1617 = vadd.f32 %v1598, %v1614
        %v1618 = vadd.f32 %v1617, %v623
        %v1619 = vmax.f32 %v1618, 0.0
        %v1620 = vpack.c.bf16 %v1619, %v1619
        %v1622 = vrot.slane %v1620, 3
        %v1625 = vsel %vm630, %v1620, %v1622
        %v1627 = vsel %vm385, %v1620, %v1622
        %v1629 = vrot.slane %v1627, 1
        %v1630 = vsel %vm388, %v1620, %v1622
        %v1632 = vrot.slane %v1630, 2
        %v1633 = vsel %vm391, %v1620, %v1622
        %v1635 = vrot.slane %v1633, 3
        %v1636 = vunpack.i.l.s16 %v1625
        %v1637 = vunpack.i.h.s16 %v1625
        %v1638 = vunpack.i.l.s16 %v1629
        %v1639 = vunpack.i.h.s16 %v1629
        %v1640 = vunpack.i.l.s16 %v1632
        %v1641 = vunpack.i.h.s16 %v1632
        %v1642 = vunpack.i.l.s16 %v1635
        %v1643 = vunpack.i.h.s16 %v1635
        %v1644 = vpack.i.b16 %v1636, %v1636
        %v1645 = vpack.i.b16 %v1637, %v1637
        %v1646 = vpack.i.b16 %v1638, %v1638
        %v1647 = vpack.i.b16 %v1639, %v1639
        %v1648 = vpack.i.b16 %v1640, %v1640
        %v1649 = vpack.i.b16 %v1641, %v1641
        %v1650 = vpack.i.b16 %v1642, %v1642
        %v1651 = vpack.i.b16 %v1643, %v1643
        %v1653 = vunpack.c.l.s4 286326784
        %v1654 = vunpack.c.0.s8 %v1653
        %v1655 = vperm.slane %v1644, %v1654
        %v1657 = vunpack.c.l.s4 286326784
        %v1658 = vunpack.c.0.s8 %v1657
        %v1659 = vperm.slane %v1645, %v1658
        %v1661 = vunpack.c.l.s4 286326784
        %v1662 = vunpack.c.0.s8 %v1661
        %v1663 = vperm.slane %v1646, %v1662
        %v1665 = vunpack.c.l.s4 286326784
        %v1666 = vunpack.c.0.s8 %v1665
        %v1667 = vperm.slane %v1647, %v1666
        %v1669 = vunpack.c.l.s4 286326784
        %v1670 = vunpack.c.0.s8 %v1669
        %v1671 = vperm.slane %v1648, %v1670
        %v1673 = vunpack.c.l.s4 286326784
        %v1674 = vunpack.c.0.s8 %v1673
        %v1675 = vperm.slane %v1649, %v1674
        %v1677 = vunpack.c.l.s4 286326784
        %v1678 = vunpack.c.0.s8 %v1677
        %v1679 = vperm.slane %v1650, %v1678
        %v1681 = vunpack.c.l.s4 286326784
        %v1682 = vunpack.c.0.s8 %v1681
        %v1683 = vperm.slane %v1651, %v1682
        %vm1692 = vsmask.f32 7942
        %vm1693 = vmand %vm1361, %vm1692
        %v1694 = vld [vmem:[%s281] sm:$0x2]
        %v1695 = vsel %vm1693, %v1655, %v1694
        %1696 = vst [vmem:[%s281] sm:$0x2] %v1695
        %v1697 = vld [vmem:[%s281 + $0x4] sm:$0x2]
        %v1698 = vsel %vm1693, %v1659, %v1697
        %1699 = vst [vmem:[%s281 + $0x4] sm:$0x2] %v1698
        %v1700 = vld [vmem:[%s281 + $0x8] sm:$0x2]
        %v1701 = vsel %vm1693, %v1663, %v1700
        %1702 = vst [vmem:[%s281 + $0x8] sm:$0x2] %v1701
        %v1703 = vld [vmem:[%s281 + $0xc] sm:$0x2]
        %v1704 = vsel %vm1693, %v1667, %v1703
        %1705 = vst [vmem:[%s281 + $0xc] sm:$0x2] %v1704
        %v1706 = vld [vmem:[%s281 + $0x10] sm:$0x2]
        %v1707 = vsel %vm1693, %v1671, %v1706
        %1708 = vst [vmem:[%s281 + $0x10] sm:$0x2] %v1707
        %v1709 = vld [vmem:[%s281 + $0x14] sm:$0x2]
        %v1710 = vsel %vm1693, %v1675, %v1709
        %1711 = vst [vmem:[%s281 + $0x14] sm:$0x2] %v1710
        %v1712 = vld [vmem:[%s281 + $0x18] sm:$0x2]
        %v1713 = vsel %vm1693, %v1679, %v1712
        %1714 = vst [vmem:[%s281 + $0x18] sm:$0x2] %v1713
        %v1715 = vld [vmem:[%s281 + $0x1c] sm:$0x2]
        %v1716 = vsel %vm1693, %v1683, %v1715
        %1717 = vst [vmem:[%s281 + $0x1c] sm:$0x2] %v1716
        %v1718 = vsub.f32 %v1619, %v730
        %v1719 = vadd.f32 %v1389, %v1718
        %v1720 = vmul.f32 %v1718, %v1718
        %v1721 = vadd.f32 %v1391, %v1720
        %v1722 = vld [vmem:[%s314] sm:$0x4]
        %v1723 = vld [vmem:[%s314 + $0x8] sm:$0x4]
        %v1724 = vld [vmem:[%s314 + $0x10] sm:$0x4]
        %v1725 = vld [vmem:[%s314 + $0x18] sm:$0x4]
        %v1730 = vunpack.c.l.b16 %v1722
        %v1731 = vunpack.c.l.b16 %v1723
        %v1732 = vunpack.c.l.b16 %v1724
        %v1733 = vunpack.c.l.b16 %v1725
        %v1734 = vpack.c.b16 %v1730, %v1730
        %v1735 = vpack.c.b16 %v1731, %v1731
        %v1736 = vpack.c.b16 %v1732, %v1732
        %v1737 = vpack.c.b16 %v1733, %v1733
        %v1738 = vunpack.c.l.b16 %v1734
        %v1739 = vunpack.c.l.b16 %v1735
        %v1740 = vunpack.c.l.b16 %v1736
        %v1741 = vunpack.c.l.b16 %v1737
        %v1742 = vrot.slane %v1738, 4
        %v1743 = vrot.slane %v1739, 3
        %v1744 = vsel %vm385, %v1743, %v1742
        %v1745 = vrot.slane %v1740, 2
        %v1746 = vsel %vm388, %v1745, %v1744
        %v1747 = vrot.slane %v1741, 1
        %v1748 = vsel %vm391, %v1747, %v1746
        %v1749 = vpack.c.b16 %v1748, %v1748
        %1750 = vrot.lane.b32.xlu0 %v1749, 127
        %v1751 = vpop.permute.xlu0 %1750
        %v1753 = vsel %vm400, %v1751, 0
        %1755 = vmatpush.bf16.msra.mxu0 0
        %1756 = vmatpush.bf16.msra.mxu0 0
        %1757 = vmatpush.bf16.msra.mxu0 0
        %1758 = vmatpush.bf16.msra.mxu0 0
        %1759 = vmatpush.bf16.msra.mxu0 0
        %1760 = vmatpush.bf16.msra.mxu0 0
        %1761 = vmatpush.bf16.msra.mxu0 0
        %1762 = vmatpush.bf16.msra.mxu0 %v1753
        %1763 = vmatmul.bf16.gmra.mxu0 %v398
        %v1764 = vpop.f32.mrf.mxu0
        %v1765 = vadd.f32 0.0, %v1764
        %v1766 = vpop.f32.mrf.mxu0
        %1767 = vdwg.mxu0
        %v1769 = vsel %vm400, %v1749, 0
        %1771 = vmatpush.bf16.msra.mxu0 0
        %1772 = vmatpush.bf16.msra.mxu0 0
        %1773 = vmatpush.bf16.msra.mxu0 0
        %1774 = vmatpush.bf16.msra.mxu0 0
        %1775 = vmatpush.bf16.msra.mxu0 0
        %1776 = vmatpush.bf16.msra.mxu0 0
        %1777 = vmatpush.bf16.msra.mxu0 0
        %1778 = vmatpush.bf16.msra.mxu0 %v1769
        %1779 = vmatmul.bf16.gmra.mxu0 %v418
        %v1780 = vpop.f32.mrf.mxu0
        %v1781 = vadd.f32 %v1765, %v1780
        %v1782 = vpop.f32.mrf.mxu0
        %1783 = vdwg.mxu0
        %1784 = vrot.lane.b32.xlu0 %v1749, 126
        %v1785 = vpop.permute.xlu0 %1784
        %v1787 = vsel %vm400, %v1785, 0
        %1789 = vmatpush.bf16.msra.mxu0 0
        %1790 = vmatpush.bf16.msra.mxu0 0
        %1791 = vmatpush.bf16.msra.mxu0 0
        %1792 = vmatpush.bf16.msra.mxu0 0
        %1793 = vmatpush.bf16.msra.mxu0 0
        %1794 = vmatpush.bf16.msra.mxu0 0
        %1795 = vmatpush.bf16.msra.mxu0 0
        %1796 = vmatpush.bf16.msra.mxu0 %v1787
        %1797 = vmatmul.bf16.gmra.mxu0 %v439
        %v1798 = vpop.f32.mrf.mxu0
        %v1799 = vadd.f32 0.0, %v1798
        %v1800 = vpop.f32.mrf.mxu0
        %1801 = vdwg.mxu0
        %v1802 = vadd.f32 %v1781, %v1799
        %v1803 = vrot.slane %v1738, 5
        %v1804 = vrot.slane %v1739, 4
        %v1805 = vsel %vm385, %v1804, %v1803
        %v1806 = vrot.slane %v1740, 3
        %v1807 = vsel %vm388, %v1806, %v1805
        %v1808 = vrot.slane %v1741, 2
        %v1809 = vsel %vm391, %v1808, %v1807
        %v1810 = vpack.c.b16 %v1809, %v1809
        %v1812 = vsel %vm400, %v1810, 0
        %1814 = vmatpush.bf16.msra.mxu0 0
        %1815 = vmatpush.bf16.msra.mxu0 0
        %1816 = vmatpush.bf16.msra.mxu0 0
        %1817 = vmatpush.bf16.msra.mxu0 0
        %1818 = vmatpush.bf16.msra.mxu0 0
        %1819 = vmatpush.bf16.msra.mxu0 0
        %1820 = vmatpush.bf16.msra.mxu0 0
        %1821 = vmatpush.bf16.msra.mxu0 %v1812
        %1822 = vmatmul.bf16.gmra.mxu0 %v466
        %v1823 = vpop.f32.mrf.mxu0
        %v1824 = vadd.f32 0.0, %v1823
        %v1825 = vpop.f32.mrf.mxu0
        %1826 = vdwg.mxu0
        %v1827 = vadd.f32 %v1802, %v1824
        %1828 = vrot.lane.b32.xlu0 %v1810, 127
        %v1829 = vpop.permute.xlu0 %1828
        %v1831 = vsel %vm400, %v1829, 0
        %1833 = vmatpush.bf16.msra.mxu0 0
        %1834 = vmatpush.bf16.msra.mxu0 0
        %1835 = vmatpush.bf16.msra.mxu0 0
        %1836 = vmatpush.bf16.msra.mxu0 0
        %1837 = vmatpush.bf16.msra.mxu0 0
        %1838 = vmatpush.bf16.msra.mxu0 0
        %1839 = vmatpush.bf16.msra.mxu0 0
        %1840 = vmatpush.bf16.msra.mxu0 %v1831
        %1841 = vmatmul.bf16.gmra.mxu0 %v488
        %v1842 = vpop.f32.mrf.mxu0
        %v1843 = vadd.f32 0.0, %v1842
        %v1844 = vpop.f32.mrf.mxu0
        %1845 = vdwg.mxu0
        %v1846 = vadd.f32 %v1827, %v1843
        %1847 = vrot.lane.b32.xlu0 %v1810, 126
        %v1848 = vpop.permute.xlu0 %1847
        %v1850 = vsel %vm400, %v1848, 0
        %1852 = vmatpush.bf16.msra.mxu0 0
        %1853 = vmatpush.bf16.msra.mxu0 0
        %1854 = vmatpush.bf16.msra.mxu0 0
        %1855 = vmatpush.bf16.msra.mxu0 0
        %1856 = vmatpush.bf16.msra.mxu0 0
        %1857 = vmatpush.bf16.msra.mxu0 0
        %1858 = vmatpush.bf16.msra.mxu0 0
        %1859 = vmatpush.bf16.msra.mxu0 %v1850
        %1860 = vmatmul.bf16.gmra.mxu0 %v510
        %v1861 = vpop.f32.mrf.mxu0
        %v1862 = vadd.f32 0.0, %v1861
        %v1863 = vpop.f32.mrf.mxu0
        %1864 = vdwg.mxu0
        %v1865 = vadd.f32 %v1846, %v1862
        %v1866 = vld [vmem:[%s314] sm:$0x8]
        %v1867 = vld [vmem:[%s314 + $0x8] sm:$0x8]
        %v1868 = vld [vmem:[%s314 + $0x10] sm:$0x8]
        %v1869 = vld [vmem:[%s314 + $0x18] sm:$0x8]
        %v1874 = vunpack.c.l.b16 %v1866
        %v1875 = vunpack.c.l.b16 %v1867
        %v1876 = vunpack.c.l.b16 %v1868
        %v1877 = vunpack.c.l.b16 %v1869
        %v1878 = vpack.c.b16 %v1874, %v1874
        %v1879 = vpack.c.b16 %v1875, %v1875
        %v1880 = vpack.c.b16 %v1876, %v1876
        %v1881 = vpack.c.b16 %v1877, %v1877
        %v1882 = vunpack.c.l.b16 %v1878
        %v1883 = vunpack.c.l.b16 %v1879
        %v1884 = vunpack.c.l.b16 %v1880
        %v1885 = vunpack.c.l.b16 %v1881
        %v1886 = vrot.slane %v1882, 6
        %v1887 = vrot.slane %v1883, 5
        %v1888 = vsel %vm385, %v1887, %v1886
        %v1889 = vrot.slane %v1884, 4
        %v1890 = vsel %vm388, %v1889, %v1888
        %v1891 = vrot.slane %v1885, 3
        %v1892 = vsel %vm391, %v1891, %v1890
        %v1893 = vpack.c.b16 %v1892, %v1892
        %v1895 = vsel %vm400, %v1893, 0
        %1897 = vmatpush.bf16.msra.mxu0 0
        %1898 = vmatpush.bf16.msra.mxu0 0
        %1899 = vmatpush.bf16.msra.mxu0 0
        %1900 = vmatpush.bf16.msra.mxu0 0
        %1901 = vmatpush.bf16.msra.mxu0 0
        %1902 = vmatpush.bf16.msra.mxu0 0
        %1903 = vmatpush.bf16.msra.mxu0 0
        %1904 = vmatpush.bf16.msra.mxu0 %v1895
        %1905 = vmatmul.bf16.gmra.mxu0 %v557
        %v1906 = vpop.f32.mrf.mxu0
        %v1907 = vadd.f32 0.0, %v1906
        %v1908 = vpop.f32.mrf.mxu0
        %1909 = vdwg.mxu0
        %v1910 = vadd.f32 %v1865, %v1907
        %1911 = vrot.lane.b32.xlu0 %v1893, 127
        %v1912 = vpop.permute.xlu0 %1911
        %v1914 = vsel %vm400, %v1912, 0
        %1916 = vmatpush.bf16.msra.mxu0 0
        %1917 = vmatpush.bf16.msra.mxu0 0
        %1918 = vmatpush.bf16.msra.mxu0 0
        %1919 = vmatpush.bf16.msra.mxu0 0
        %1920 = vmatpush.bf16.msra.mxu0 0
        %1921 = vmatpush.bf16.msra.mxu0 0
        %1922 = vmatpush.bf16.msra.mxu0 0
        %1923 = vmatpush.bf16.msra.mxu0 %v1914
        %1924 = vmatmul.bf16.gmra.mxu0 %v579
        %v1925 = vpop.f32.mrf.mxu0
        %v1926 = vadd.f32 0.0, %v1925
        %v1927 = vpop.f32.mrf.mxu0
        %1928 = vdwg.mxu0
        %v1929 = vadd.f32 %v1910, %v1926
        %1930 = vrot.lane.b32.xlu0 %v1893, 126
        %v1931 = vpop.permute.xlu0 %1930
        %v1933 = vsel %vm400, %v1931, 0
        %1935 = vmatpush.bf16.msra.mxu0 0
        %1936 = vmatpush.bf16.msra.mxu0 0
        %1937 = vmatpush.bf16.msra.mxu0 0
        %1938 = vmatpush.bf16.msra.mxu0 0
        %1939 = vmatpush.bf16.msra.mxu0 0
        %1940 = vmatpush.bf16.msra.mxu0 0
        %1941 = vmatpush.bf16.msra.mxu0 0
        %1942 = vmatpush.bf16.msra.mxu0 %v1933
        %1943 = vmatmul.bf16.gmra.mxu0 %v601
        %v1944 = vpop.f32.mrf.mxu0
        %v1945 = vadd.f32 0.0, %v1944
        %v1946 = vpop.f32.mrf.mxu0
        %1947 = vdwg.mxu0
        %v1948 = vadd.f32 %v1929, %v1945
        %v1949 = vadd.f32 %v1948, %v623
        %v1950 = vmax.f32 %v1949, 0.0
        %v1951 = vpack.c.bf16 %v1950, %v1950
        %v1953 = vrot.slane %v1951, 3
        %v1956 = vsel %vm630, %v1951, %v1953
        %v1958 = vsel %vm385, %v1951, %v1953
        %v1960 = vrot.slane %v1958, 1
        %v1961 = vsel %vm388, %v1951, %v1953
        %v1963 = vrot.slane %v1961, 2
        %v1964 = vsel %vm391, %v1951, %v1953
        %v1966 = vrot.slane %v1964, 3
        %v1967 = vunpack.i.l.s16 %v1956
        %v1968 = vunpack.i.h.s16 %v1956
        %v1969 = vunpack.i.l.s16 %v1960
        %v1970 = vunpack.i.h.s16 %v1960
        %v1971 = vunpack.i.l.s16 %v1963
        %v1972 = vunpack.i.h.s16 %v1963
        %v1973 = vunpack.i.l.s16 %v1966
        %v1974 = vunpack.i.h.s16 %v1966
        %v1975 = vpack.i.b16 %v1967, %v1967
        %v1976 = vpack.i.b16 %v1968, %v1968
        %v1977 = vpack.i.b16 %v1969, %v1969
        %v1978 = vpack.i.b16 %v1970, %v1970
        %v1979 = vpack.i.b16 %v1971, %v1971
        %v1980 = vpack.i.b16 %v1972, %v1972
        %v1981 = vpack.i.b16 %v1973, %v1973
        %v1982 = vpack.i.b16 %v1974, %v1974
        %v1984 = vunpack.c.l.s4 286326784
        %v1985 = vunpack.c.0.s8 %v1984
        %v1986 = vperm.slane %v1975, %v1985
        %v1988 = vunpack.c.l.s4 286326784
        %v1989 = vunpack.c.0.s8 %v1988
        %v1990 = vperm.slane %v1976, %v1989
        %v1992 = vunpack.c.l.s4 286326784
        %v1993 = vunpack.c.0.s8 %v1992
        %v1994 = vperm.slane %v1977, %v1993
        %v1996 = vunpack.c.l.s4 286326784
        %v1997 = vunpack.c.0.s8 %v1996
        %v1998 = vperm.slane %v1978, %v1997
        %v2000 = vunpack.c.l.s4 286326784
        %v2001 = vunpack.c.0.s8 %v2000
        %v2002 = vperm.slane %v1979, %v2001
        %v2004 = vunpack.c.l.s4 286326784
        %v2005 = vunpack.c.0.s8 %v2004
        %v2006 = vperm.slane %v1980, %v2005
        %v2008 = vunpack.c.l.s4 286326784
        %v2009 = vunpack.c.0.s8 %v2008
        %v2010 = vperm.slane %v1981, %v2009
        %v2012 = vunpack.c.l.s4 286326784
        %v2013 = vunpack.c.0.s8 %v2012
        %v2014 = vperm.slane %v1982, %v2013
        %vm2023 = vcmask 124930
        %vm2024 = vsmask.f32 2304
        %vm2025 = vmand %vm2023, %vm2024
        %v2026 = vld [vmem:[%s281] sm:$0x4]
        %v2027 = vsel %vm2025, %v1986, %v2026
        %2028 = vst [vmem:[%s281] sm:$0x4] %v2027
        %v2029 = vld [vmem:[%s281 + $0x4] sm:$0x4]
        %v2030 = vsel %vm2025, %v1990, %v2029
        %2031 = vst [vmem:[%s281 + $0x4] sm:$0x4] %v2030
        %v2032 = vld [vmem:[%s281 + $0x8] sm:$0x4]
        %v2033 = vsel %vm2025, %v1994, %v2032
        %2034 = vst [vmem:[%s281 + $0x8] sm:$0x4] %v2033
        %v2035 = vld [vmem:[%s281 + $0xc] sm:$0x4]
        %v2036 = vsel %vm2025, %v1998, %v2035
        %2037 = vst [vmem:[%s281 + $0xc] sm:$0x4] %v2036
        %v2038 = vld [vmem:[%s281 + $0x10] sm:$0x4]
        %v2039 = vsel %vm2025, %v2002, %v2038
        %2040 = vst [vmem:[%s281 + $0x10] sm:$0x4] %v2039
        %v2041 = vld [vmem:[%s281 + $0x14] sm:$0x4]
        %v2042 = vsel %vm2025, %v2006, %v2041
        %2043 = vst [vmem:[%s281 + $0x14] sm:$0x4] %v2042
        %v2044 = vld [vmem:[%s281 + $0x18] sm:$0x4]
        %v2045 = vsel %vm2025, %v2010, %v2044
        %2046 = vst [vmem:[%s281 + $0x18] sm:$0x4] %v2045
        %v2047 = vld [vmem:[%s281 + $0x1c] sm:$0x4]
        %v2048 = vsel %vm2025, %v2014, %v2047
        %2049 = vst [vmem:[%s281 + $0x1c] sm:$0x4] %v2048
        %v2050 = vsub.f32 %v1950, %v730
        %v2051 = vadd.f32 %v1719, %v2050
        %v2052 = vmul.f32 %v2050, %v2050
        %v2053 = vadd.f32 %v1721, %v2052
        %v2054 = vld [vmem:[%s314] sm:$0x4]
        %v2055 = vld [vmem:[%s314 + $0x8] sm:$0x4]
        %v2056 = vld [vmem:[%s314 + $0x10] sm:$0x4]
        %v2057 = vld [vmem:[%s314 + $0x18] sm:$0x4]
        %v2062 = vunpack.c.l.b16 %v2054
        %v2063 = vunpack.c.l.b16 %v2055
        %v2064 = vunpack.c.l.b16 %v2056
        %v2065 = vunpack.c.l.b16 %v2057
        %v2066 = vpack.c.b16 %v2062, %v2062
        %v2067 = vpack.c.b16 %v2063, %v2063
        %v2068 = vpack.c.b16 %v2064, %v2064
        %v2069 = vpack.c.b16 %v2065, %v2065
        %v2070 = vunpack.c.l.b16 %v2066
        %v2071 = vunpack.c.l.b16 %v2067
        %v2072 = vunpack.c.l.b16 %v2068
        %v2073 = vunpack.c.l.b16 %v2069
        %v2074 = vrot.slane %v2070, 5
        %v2075 = vrot.slane %v2071, 4
        %v2076 = vsel %vm385, %v2075, %v2074
        %v2077 = vrot.slane %v2072, 3
        %v2078 = vsel %vm388, %v2077, %v2076
        %v2079 = vrot.slane %v2073, 2
        %v2080 = vsel %vm391, %v2079, %v2078
        %v2081 = vpack.c.b16 %v2080, %v2080
        %2082 = vrot.lane.b32.xlu0 %v2081, 127
        %v2083 = vpop.permute.xlu0 %2082
        %v2085 = vsel %vm400, %v2083, 0
        %2087 = vmatpush.bf16.msra.mxu0 0
        %2088 = vmatpush.bf16.msra.mxu0 0
        %2089 = vmatpush.bf16.msra.mxu0 0
        %2090 = vmatpush.bf16.msra.mxu0 0
        %2091 = vmatpush.bf16.msra.mxu0 0
        %2092 = vmatpush.bf16.msra.mxu0 0
        %2093 = vmatpush.bf16.msra.mxu0 0
        %2094 = vmatpush.bf16.msra.mxu0 %v2085
        %2095 = vmatmul.bf16.gmra.mxu0 %v398
        %v2096 = vpop.f32.mrf.mxu0
        %v2097 = vadd.f32 0.0, %v2096
        %v2098 = vpop.f32.mrf.mxu0
        %2099 = vdwg.mxu0
        %v2101 = vsel %vm400, %v2081, 0
        %2103 = vmatpush.bf16.msra.mxu0 0
        %2104 = vmatpush.bf16.msra.mxu0 0
        %2105 = vmatpush.bf16.msra.mxu0 0
        %2106 = vmatpush.bf16.msra.mxu0 0
        %2107 = vmatpush.bf16.msra.mxu0 0
        %2108 = vmatpush.bf16.msra.mxu0 0
        %2109 = vmatpush.bf16.msra.mxu0 0
        %2110 = vmatpush.bf16.msra.mxu0 %v2101
        %2111 = vmatmul.bf16.gmra.mxu0 %v418
        %v2112 = vpop.f32.mrf.mxu0
        %v2113 = vadd.f32 %v2097, %v2112
        %v2114 = vpop.f32.mrf.mxu0
        %2115 = vdwg.mxu0
        %2116 = vrot.lane.b32.xlu0 %v2081, 126
        %v2117 = vpop.permute.xlu0 %2116
        %v2119 = vsel %vm400, %v2117, 0
        %2121 = vmatpush.bf16.msra.mxu0 0
        %2122 = vmatpush.bf16.msra.mxu0 0
        %2123 = vmatpush.bf16.msra.mxu0 0
        %2124 = vmatpush.bf16.msra.mxu0 0
        %2125 = vmatpush.bf16.msra.mxu0 0
        %2126 = vmatpush.bf16.msra.mxu0 0
        %2127 = vmatpush.bf16.msra.mxu0 0
        %2128 = vmatpush.bf16.msra.mxu0 %v2119
        %2129 = vmatmul.bf16.gmra.mxu0 %v439
        %v2130 = vpop.f32.mrf.mxu0
        %v2131 = vadd.f32 0.0, %v2130
        %v2132 = vpop.f32.mrf.mxu0
        %2133 = vdwg.mxu0
        %v2134 = vadd.f32 %v2113, %v2131
        %v2135 = vld [vmem:[%s314] sm:$0x8]
        %v2136 = vld [vmem:[%s314 + $0x8] sm:$0x8]
        %v2137 = vld [vmem:[%s314 + $0x10] sm:$0x8]
        %v2138 = vld [vmem:[%s314 + $0x18] sm:$0x8]
        %v2143 = vunpack.c.l.b16 %v2135
        %v2144 = vunpack.c.l.b16 %v2136
        %v2145 = vunpack.c.l.b16 %v2137
        %v2146 = vunpack.c.l.b16 %v2138
        %v2147 = vpack.c.b16 %v2143, %v2143
        %v2148 = vpack.c.b16 %v2144, %v2144
        %v2149 = vpack.c.b16 %v2145, %v2145
        %v2150 = vpack.c.b16 %v2146, %v2146
        %v2151 = vunpack.c.l.b16 %v2147
        %v2152 = vunpack.c.l.b16 %v2148
        %v2153 = vunpack.c.l.b16 %v2149
        %v2154 = vunpack.c.l.b16 %v2150
        %v2155 = vrot.slane %v2151, 6
        %v2156 = vrot.slane %v2152, 5
        %v2157 = vsel %vm385, %v2156, %v2155
        %v2158 = vrot.slane %v2153, 4
        %v2159 = vsel %vm388, %v2158, %v2157
        %v2160 = vrot.slane %v2154, 3
        %v2161 = vsel %vm391, %v2160, %v2159
        %v2162 = vpack.c.b16 %v2161, %v2161
        %v2164 = vsel %vm400, %v2162, 0
        %2166 = vmatpush.bf16.msra.mxu0 0
        %2167 = vmatpush.bf16.msra.mxu0 0
        %2168 = vmatpush.bf16.msra.mxu0 0
        %2169 = vmatpush.bf16.msra.mxu0 0
        %2170 = vmatpush.bf16.msra.mxu0 0
        %2171 = vmatpush.bf16.msra.mxu0 0
        %2172 = vmatpush.bf16.msra.mxu0 0
        %2173 = vmatpush.bf16.msra.mxu0 %v2164
        %2174 = vmatmul.bf16.gmra.mxu0 %v466
        %v2175 = vpop.f32.mrf.mxu0
        %v2176 = vadd.f32 0.0, %v2175
        %v2177 = vpop.f32.mrf.mxu0
        %2178 = vdwg.mxu0
        %v2179 = vadd.f32 %v2134, %v2176
        %2180 = vrot.lane.b32.xlu0 %v2162, 127
        %v2181 = vpop.permute.xlu0 %2180
        %v2183 = vsel %vm400, %v2181, 0
        %2185 = vmatpush.bf16.msra.mxu0 0
        %2186 = vmatpush.bf16.msra.mxu0 0
        %2187 = vmatpush.bf16.msra.mxu0 0
        %2188 = vmatpush.bf16.msra.mxu0 0
        %2189 = vmatpush.bf16.msra.mxu0 0
        %2190 = vmatpush.bf16.msra.mxu0 0
        %2191 = vmatpush.bf16.msra.mxu0 0
        %2192 = vmatpush.bf16.msra.mxu0 %v2183
        %2193 = vmatmul.bf16.gmra.mxu0 %v488
        %v2194 = vpop.f32.mrf.mxu0
        %v2195 = vadd.f32 0.0, %v2194
        %v2196 = vpop.f32.mrf.mxu0
        %2197 = vdwg.mxu0
        %v2198 = vadd.f32 %v2179, %v2195
        %2199 = vrot.lane.b32.xlu0 %v2162, 126
        %v2200 = vpop.permute.xlu0 %2199
        %v2202 = vsel %vm400, %v2200, 0
        %2204 = vmatpush.bf16.msra.mxu0 0
        %2205 = vmatpush.bf16.msra.mxu0 0
        %2206 = vmatpush.bf16.msra.mxu0 0
        %2207 = vmatpush.bf16.msra.mxu0 0
        %2208 = vmatpush.bf16.msra.mxu0 0
        %2209 = vmatpush.bf16.msra.mxu0 0
        %2210 = vmatpush.bf16.msra.mxu0 0
        %2211 = vmatpush.bf16.msra.mxu0 %v2202
        %2212 = vmatmul.bf16.gmra.mxu0 %v510
        %v2213 = vpop.f32.mrf.mxu0
        %v2214 = vadd.f32 0.0, %v2213
        %v2215 = vpop.f32.mrf.mxu0
        %2216 = vdwg.mxu0
        %v2217 = vadd.f32 %v2198, %v2214
        %v2218 = vrot.slane %v2151, 7
        %v2219 = vrot.slane %v2152, 6
        %v2220 = vsel %vm385, %v2219, %v2218
        %v2221 = vrot.slane %v2153, 5
        %v2222 = vsel %vm388, %v2221, %v2220
        %v2223 = vrot.slane %v2154, 4
        %v2224 = vsel %vm391, %v2223, %v2222
        %v2225 = vpack.c.b16 %v2224, %v2224
        %v2227 = vsel %vm400, %v2225, 0
        %2229 = vmatpush.bf16.msra.mxu0 0
        %2230 = vmatpush.bf16.msra.mxu0 0
        %2231 = vmatpush.bf16.msra.mxu0 0
        %2232 = vmatpush.bf16.msra.mxu0 0
        %2233 = vmatpush.bf16.msra.mxu0 0
        %2234 = vmatpush.bf16.msra.mxu0 0
        %2235 = vmatpush.bf16.msra.mxu0 0
        %2236 = vmatpush.bf16.msra.mxu0 %v2227
        %2237 = vmatmul.bf16.gmra.mxu0 %v557
        %v2238 = vpop.f32.mrf.mxu0
        %v2239 = vadd.f32 0.0, %v2238
        %v2240 = vpop.f32.mrf.mxu0
        %2241 = vdwg.mxu0
        %v2242 = vadd.f32 %v2217, %v2239
        %2243 = vrot.lane.b32.xlu0 %v2225, 127
        %v2244 = vpop.permute.xlu0 %2243
        %v2246 = vsel %vm400, %v2244, 0
        %2248 = vmatpush.bf16.msra.mxu0 0
        %2249 = vmatpush.bf16.msra.mxu0 0
        %2250 = vmatpush.bf16.msra.mxu0 0
        %2251 = vmatpush.bf16.msra.mxu0 0
        %2252 = vmatpush.bf16.msra.mxu0 0
        %2253 = vmatpush.bf16.msra.mxu0 0
        %2254 = vmatpush.bf16.msra.mxu0 0
        %2255 = vmatpush.bf16.msra.mxu0 %v2246
        %2256 = vmatmul.bf16.gmra.mxu0 %v579
        %v2257 = vpop.f32.mrf.mxu0
        %v2258 = vadd.f32 0.0, %v2257
        %v2259 = vpop.f32.mrf.mxu0
        %2260 = vdwg.mxu0
        %v2261 = vadd.f32 %v2242, %v2258
        %2262 = vrot.lane.b32.xlu0 %v2225, 126
        %v2263 = vpop.permute.xlu0 %2262
        %v2265 = vsel %vm400, %v2263, 0
        %2267 = vmatpush.bf16.msra.mxu0 0
        %2268 = vmatpush.bf16.msra.mxu0 0
        %2269 = vmatpush.bf16.msra.mxu0 0
        %2270 = vmatpush.bf16.msra.mxu0 0
        %2271 = vmatpush.bf16.msra.mxu0 0
        %2272 = vmatpush.bf16.msra.mxu0 0
        %2273 = vmatpush.bf16.msra.mxu0 0
        %2274 = vmatpush.bf16.msra.mxu0 %v2265
        %2275 = vmatmul.bf16.gmra.mxu0 %v601
        %v2276 = vpop.f32.mrf.mxu0
        %v2277 = vadd.f32 0.0, %v2276
        %v2278 = vpop.f32.mrf.mxu0
        %2279 = vdwg.mxu0
        %v2280 = vadd.f32 %v2261, %v2277
        %v2281 = vadd.f32 %v2280, %v623
        %v2282 = vmax.f32 %v2281, 0.0
        %v2283 = vpack.c.bf16 %v2282, %v2282
        %v2285 = vrot.slane %v2283, 3
        %v2288 = vsel %vm630, %v2283, %v2285
        %v2290 = vsel %vm385, %v2283, %v2285
        %v2292 = vrot.slane %v2290, 1
        %v2293 = vsel %vm388, %v2283, %v2285
        %v2295 = vrot.slane %v2293, 2
        %v2296 = vsel %vm391, %v2283, %v2285
        %v2298 = vrot.slane %v2296, 3
        %v2299 = vunpack.i.l.s16 %v2288
        %v2300 = vunpack.i.h.s16 %v2288
        %v2301 = vunpack.i.l.s16 %v2292
        %v2302 = vunpack.i.h.s16 %v2292
        %v2303 = vunpack.i.l.s16 %v2295
        %v2304 = vunpack.i.h.s16 %v2295
        %v2305 = vunpack.i.l.s16 %v2298
        %v2306 = vunpack.i.h.s16 %v2298
        %v2307 = vpack.i.b16 %v2299, %v2299
        %v2308 = vpack.i.b16 %v2300, %v2300
        %v2309 = vpack.i.b16 %v2301, %v2301
        %v2310 = vpack.i.b16 %v2302, %v2302
        %v2311 = vpack.i.b16 %v2303, %v2303
        %v2312 = vpack.i.b16 %v2304, %v2304
        %v2313 = vpack.i.b16 %v2305, %v2305
        %v2314 = vpack.i.b16 %v2306, %v2306
        %v2316 = vunpack.c.l.s4 286326784
        %v2317 = vunpack.c.0.s8 %v2316
        %v2318 = vperm.slane %v2307, %v2317
        %v2320 = vunpack.c.l.s4 286326784
        %v2321 = vunpack.c.0.s8 %v2320
        %v2322 = vperm.slane %v2308, %v2321
        %v2324 = vunpack.c.l.s4 286326784
        %v2325 = vunpack.c.0.s8 %v2324
        %v2326 = vperm.slane %v2309, %v2325
        %v2328 = vunpack.c.l.s4 286326784
        %v2329 = vunpack.c.0.s8 %v2328
        %v2330 = vperm.slane %v2310, %v2329
        %v2332 = vunpack.c.l.s4 286326784
        %v2333 = vunpack.c.0.s8 %v2332
        %v2334 = vperm.slane %v2311, %v2333
        %v2336 = vunpack.c.l.s4 286326784
        %v2337 = vunpack.c.0.s8 %v2336
        %v2338 = vperm.slane %v2312, %v2337
        %v2340 = vunpack.c.l.s4 286326784
        %v2341 = vunpack.c.0.s8 %v2340
        %v2342 = vperm.slane %v2313, %v2341
        %v2344 = vunpack.c.l.s4 286326784
        %v2345 = vunpack.c.0.s8 %v2344
        %v2346 = vperm.slane %v2314, %v2345
        %vm2355 = vsmask.f32 7946
        %vm2356 = vmand %vm2023, %vm2355
        %v2357 = vld [vmem:[%s281] sm:$0x4]
        %v2358 = vsel %vm2356, %v2318, %v2357
        %2359 = vst [vmem:[%s281] sm:$0x4] %v2358
        %v2360 = vld [vmem:[%s281 + $0x4] sm:$0x4]
        %v2361 = vsel %vm2356, %v2322, %v2360
        %2362 = vst [vmem:[%s281 + $0x4] sm:$0x4] %v2361
        %v2363 = vld [vmem:[%s281 + $0x8] sm:$0x4]
        %v2364 = vsel %vm2356, %v2326, %v2363
        %2365 = vst [vmem:[%s281 + $0x8] sm:$0x4] %v2364
        %v2366 = vld [vmem:[%s281 + $0xc] sm:$0x4]
        %v2367 = vsel %vm2356, %v2330, %v2366
        %2368 = vst [vmem:[%s281 + $0xc] sm:$0x4] %v2367
        %v2369 = vld [vmem:[%s281 + $0x10] sm:$0x4]
        %v2370 = vsel %vm2356, %v2334, %v2369
        %2371 = vst [vmem:[%s281 + $0x10] sm:$0x4] %v2370
        %v2372 = vld [vmem:[%s281 + $0x14] sm:$0x4]
        %v2373 = vsel %vm2356, %v2338, %v2372
        %2374 = vst [vmem:[%s281 + $0x14] sm:$0x4] %v2373
        %v2375 = vld [vmem:[%s281 + $0x18] sm:$0x4]
        %v2376 = vsel %vm2356, %v2342, %v2375
        %2377 = vst [vmem:[%s281 + $0x18] sm:$0x4] %v2376
        %v2378 = vld [vmem:[%s281 + $0x1c] sm:$0x4]
        %v2379 = vsel %vm2356, %v2346, %v2378
        %2380 = vst [vmem:[%s281 + $0x1c] sm:$0x4] %v2379
        %v2381 = vsub.f32 %v2282, %v730
        %v2382 = vadd.f32 %v2051, %v2381
        %v2383 = vmul.f32 %v2381, %v2381
        %v2384 = vadd.f32 %v2053, %v2383
        %v2385 = vld [vmem:[%s314] sm:$0x8]
        %v2386 = vld [vmem:[%s314 + $0x8] sm:$0x8]
        %v2387 = vld [vmem:[%s314 + $0x10] sm:$0x8]
        %v2388 = vld [vmem:[%s314 + $0x18] sm:$0x8]
        %v2393 = vunpack.c.l.b16 %v2385
        %v2394 = vunpack.c.l.b16 %v2386
        %v2395 = vunpack.c.l.b16 %v2387
        %v2396 = vunpack.c.l.b16 %v2388
        %v2397 = vpack.c.b16 %v2393, %v2393
        %v2398 = vpack.c.b16 %v2394, %v2394
        %v2399 = vpack.c.b16 %v2395, %v2395
        %v2400 = vpack.c.b16 %v2396, %v2396
        %v2401 = vunpack.c.l.b16 %v2397
        %v2402 = vunpack.c.l.b16 %v2398
        %v2403 = vunpack.c.l.b16 %v2399
        %v2404 = vunpack.c.l.b16 %v2400
        %v2405 = vrot.slane %v2401, 6
        %v2406 = vrot.slane %v2402, 5
        %v2407 = vsel %vm385, %v2406, %v2405
        %v2408 = vrot.slane %v2403, 4
        %v2409 = vsel %vm388, %v2408, %v2407
        %v2410 = vrot.slane %v2404, 3
        %v2411 = vsel %vm391, %v2410, %v2409
        %v2412 = vpack.c.b16 %v2411, %v2411
        %2413 = vrot.lane.b32.xlu0 %v2412, 127
        %v2414 = vpop.permute.xlu0 %2413
        %v2416 = vsel %vm400, %v2414, 0
        %2418 = vmatpush.bf16.msra.mxu0 0
        %2419 = vmatpush.bf16.msra.mxu0 0
        %2420 = vmatpush.bf16.msra.mxu0 0
        %2421 = vmatpush.bf16.msra.mxu0 0
        %2422 = vmatpush.bf16.msra.mxu0 0
        %2423 = vmatpush.bf16.msra.mxu0 0
        %2424 = vmatpush.bf16.msra.mxu0 0
        %2425 = vmatpush.bf16.msra.mxu0 %v2416
        %2426 = vmatmul.bf16.gmra.mxu0 %v398
        %v2427 = vpop.f32.mrf.mxu0
        %v2428 = vadd.f32 0.0, %v2427
        %v2429 = vpop.f32.mrf.mxu0
        %2430 = vdwg.mxu0
        %v2432 = vsel %vm400, %v2412, 0
        %2434 = vmatpush.bf16.msra.mxu0 0
        %2435 = vmatpush.bf16.msra.mxu0 0
        %2436 = vmatpush.bf16.msra.mxu0 0
        %2437 = vmatpush.bf16.msra.mxu0 0
        %2438 = vmatpush.bf16.msra.mxu0 0
        %2439 = vmatpush.bf16.msra.mxu0 0
        %2440 = vmatpush.bf16.msra.mxu0 0
        %2441 = vmatpush.bf16.msra.mxu0 %v2432
        %2442 = vmatmul.bf16.gmra.mxu0 %v418
        %v2443 = vpop.f32.mrf.mxu0
        %v2444 = vadd.f32 %v2428, %v2443
        %v2445 = vpop.f32.mrf.mxu0
        %2446 = vdwg.mxu0
        %2447 = vrot.lane.b32.xlu0 %v2412, 126
        %v2448 = vpop.permute.xlu0 %2447
        %v2450 = vsel %vm400, %v2448, 0
        %2452 = vmatpush.bf16.msra.mxu0 0
        %2453 = vmatpush.bf16.msra.mxu0 0
        %2454 = vmatpush.bf16.msra.mxu0 0
        %2455 = vmatpush.bf16.msra.mxu0 0
        %2456 = vmatpush.bf16.msra.mxu0 0
        %2457 = vmatpush.bf16.msra.mxu0 0
        %2458 = vmatpush.bf16.msra.mxu0 0
        %2459 = vmatpush.bf16.msra.mxu0 %v2450
        %2460 = vmatmul.bf16.gmra.mxu0 %v439
        %v2461 = vpop.f32.mrf.mxu0
        %v2462 = vadd.f32 0.0, %v2461
        %v2463 = vpop.f32.mrf.mxu0
        %2464 = vdwg.mxu0
        %v2465 = vadd.f32 %v2444, %v2462
        %v2466 = vrot.slane %v2401, 7
        %v2467 = vrot.slane %v2402, 6
        %v2468 = vsel %vm385, %v2467, %v2466
        %v2469 = vrot.slane %v2403, 5
        %v2470 = vsel %vm388, %v2469, %v2468
        %v2471 = vrot.slane %v2404, 4
        %v2472 = vsel %vm391, %v2471, %v2470
        %v2473 = vpack.c.b16 %v2472, %v2472
        %v2475 = vsel %vm400, %v2473, 0
        %2477 = vmatpush.bf16.msra.mxu0 0
        %2478 = vmatpush.bf16.msra.mxu0 0
        %2479 = vmatpush.bf16.msra.mxu0 0
        %2480 = vmatpush.bf16.msra.mxu0 0
        %2481 = vmatpush.bf16.msra.mxu0 0
        %2482 = vmatpush.bf16.msra.mxu0 0
        %2483 = vmatpush.bf16.msra.mxu0 0
        %2484 = vmatpush.bf16.msra.mxu0 %v2475
        %2485 = vmatmul.bf16.gmra.mxu0 %v466
        %v2486 = vpop.f32.mrf.mxu0
        %v2487 = vadd.f32 0.0, %v2486
        %v2488 = vpop.f32.mrf.mxu0
        %2489 = vdwg.mxu0
        %v2490 = vadd.f32 %v2465, %v2487
        %2491 = vrot.lane.b32.xlu0 %v2473, 127
        %v2492 = vpop.permute.xlu0 %2491
        %v2494 = vsel %vm400, %v2492, 0
        %2496 = vmatpush.bf16.msra.mxu0 0
        %2497 = vmatpush.bf16.msra.mxu0 0
        %2498 = vmatpush.bf16.msra.mxu0 0
        %2499 = vmatpush.bf16.msra.mxu0 0
        %2500 = vmatpush.bf16.msra.mxu0 0
        %2501 = vmatpush.bf16.msra.mxu0 0
        %2502 = vmatpush.bf16.msra.mxu0 0
        %2503 = vmatpush.bf16.msra.mxu0 %v2494
        %2504 = vmatmul.bf16.gmra.mxu0 %v488
        %v2505 = vpop.f32.mrf.mxu0
        %v2506 = vadd.f32 0.0, %v2505
        %v2507 = vpop.f32.mrf.mxu0
        %2508 = vdwg.mxu0
        %v2509 = vadd.f32 %v2490, %v2506
        %2510 = vrot.lane.b32.xlu0 %v2473, 126
        %v2511 = vpop.permute.xlu0 %2510
        %v2513 = vsel %vm400, %v2511, 0
        %2515 = vmatpush.bf16.msra.mxu0 0
        %2516 = vmatpush.bf16.msra.mxu0 0
        %2517 = vmatpush.bf16.msra.mxu0 0
        %2518 = vmatpush.bf16.msra.mxu0 0
        %2519 = vmatpush.bf16.msra.mxu0 0
        %2520 = vmatpush.bf16.msra.mxu0 0
        %2521 = vmatpush.bf16.msra.mxu0 0
        %2522 = vmatpush.bf16.msra.mxu0 %v2513
        %2523 = vmatmul.bf16.gmra.mxu0 %v510
        %v2524 = vpop.f32.mrf.mxu0
        %v2525 = vadd.f32 0.0, %v2524
        %v2526 = vpop.f32.mrf.mxu0
        %2527 = vdwg.mxu0
        %v2528 = vadd.f32 %v2509, %v2525
        %v2529 = vld [vmem:[%s314 + $0x4] sm:$0x1]
        %v2530 = vld [vmem:[%s314 + $0xc] sm:$0x1]
        %v2531 = vld [vmem:[%s314 + $0x14] sm:$0x1]
        %v2532 = vld [vmem:[%s314 + $0x1c] sm:$0x1]
        %v2537 = vunpack.c.l.b16 %v2529
        %v2538 = vunpack.c.l.b16 %v2530
        %v2539 = vunpack.c.l.b16 %v2531
        %v2540 = vunpack.c.l.b16 %v2532
        %v2541 = vpack.c.b16 %v2537, %v2537
        %v2542 = vpack.c.b16 %v2538, %v2538
        %v2543 = vpack.c.b16 %v2539, %v2539
        %v2544 = vpack.c.b16 %v2540, %v2540
        %v2545 = vunpack.c.l.b16 %v2541
        %v2546 = vunpack.c.l.b16 %v2542
        %v2547 = vunpack.c.l.b16 %v2543
        %v2548 = vunpack.c.l.b16 %v2544
        %v2549 = vrot.slane %v2546, 7
        %v2550 = vsel %vm385, %v2549, %v2545
        %v2551 = vrot.slane %v2547, 6
        %v2552 = vsel %vm388, %v2551, %v2550
        %v2553 = vrot.slane %v2548, 5
        %v2554 = vsel %vm391, %v2553, %v2552
        %v2555 = vpack.c.b16 %v2554, %v2554
        %v2557 = vsel %vm400, %v2555, 0
        %2559 = vmatpush.bf16.msra.mxu0 0
        %2560 = vmatpush.bf16.msra.mxu0 0
        %2561 = vmatpush.bf16.msra.mxu0 0
        %2562 = vmatpush.bf16.msra.mxu0 0
        %2563 = vmatpush.bf16.msra.mxu0 0
        %2564 = vmatpush.bf16.msra.mxu0 0
        %2565 = vmatpush.bf16.msra.mxu0 0
        %2566 = vmatpush.bf16.msra.mxu0 %v2557
        %2567 = vmatmul.bf16.gmra.mxu0 %v557
        %v2568 = vpop.f32.mrf.mxu0
        %v2569 = vadd.f32 0.0, %v2568
        %v2570 = vpop.f32.mrf.mxu0
        %2571 = vdwg.mxu0
        %v2572 = vadd.f32 %v2528, %v2569
        %2573 = vrot.lane.b32.xlu0 %v2555, 127
        %v2574 = vpop.permute.xlu0 %2573
        %v2576 = vsel %vm400, %v2574, 0
        %2578 = vmatpush.bf16.msra.mxu0 0
        %2579 = vmatpush.bf16.msra.mxu0 0
        %2580 = vmatpush.bf16.msra.mxu0 0
        %2581 = vmatpush.bf16.msra.mxu0 0
        %2582 = vmatpush.bf16.msra.mxu0 0
        %2583 = vmatpush.bf16.msra.mxu0 0
        %2584 = vmatpush.bf16.msra.mxu0 0
        %2585 = vmatpush.bf16.msra.mxu0 %v2576
        %2586 = vmatmul.bf16.gmra.mxu0 %v579
        %v2587 = vpop.f32.mrf.mxu0
        %v2588 = vadd.f32 0.0, %v2587
        %v2589 = vpop.f32.mrf.mxu0
        %2590 = vdwg.mxu0
        %v2591 = vadd.f32 %v2572, %v2588
        %2592 = vrot.lane.b32.xlu0 %v2555, 126
        %v2593 = vpop.permute.xlu0 %2592
        %v2595 = vsel %vm400, %v2593, 0
        %2597 = vmatpush.bf16.msra.mxu0 0
        %2598 = vmatpush.bf16.msra.mxu0 0
        %2599 = vmatpush.bf16.msra.mxu0 0
        %2600 = vmatpush.bf16.msra.mxu0 0
        %2601 = vmatpush.bf16.msra.mxu0 0
        %2602 = vmatpush.bf16.msra.mxu0 0
        %2603 = vmatpush.bf16.msra.mxu0 0
        %2604 = vmatpush.bf16.msra.mxu0 %v2595
        %2605 = vmatmul.bf16.gmra.mxu0 %v601
        %v2606 = vpop.f32.mrf.mxu0
        %v2607 = vadd.f32 0.0, %v2606
        %v2608 = vpop.f32.mrf.mxu0
        %2609 = vdwg.mxu0
        %v2610 = vadd.f32 %v2591, %v2607
        %v2611 = vadd.f32 %v2610, %v623
        %v2612 = vmax.f32 %v2611, 0.0
        %v2613 = vpack.c.bf16 %v2612, %v2612
        %v2615 = vrot.slane %v2613, 3
        %v2618 = vsel %vm630, %v2613, %v2615
        %v2620 = vsel %vm385, %v2613, %v2615
        %v2622 = vrot.slane %v2620, 1
        %v2623 = vsel %vm388, %v2613, %v2615
        %v2625 = vrot.slane %v2623, 2
        %v2626 = vsel %vm391, %v2613, %v2615
        %v2628 = vrot.slane %v2626, 3
        %v2629 = vunpack.i.l.s16 %v2618
        %v2630 = vunpack.i.h.s16 %v2618
        %v2631 = vunpack.i.l.s16 %v2622
        %v2632 = vunpack.i.h.s16 %v2622
        %v2633 = vunpack.i.l.s16 %v2625
        %v2634 = vunpack.i.h.s16 %v2625
        %v2635 = vunpack.i.l.s16 %v2628
        %v2636 = vunpack.i.h.s16 %v2628
        %v2637 = vpack.i.b16 %v2629, %v2629
        %v2638 = vpack.i.b16 %v2630, %v2630
        %v2639 = vpack.i.b16 %v2631, %v2631
        %v2640 = vpack.i.b16 %v2632, %v2632
        %v2641 = vpack.i.b16 %v2633, %v2633
        %v2642 = vpack.i.b16 %v2634, %v2634
        %v2643 = vpack.i.b16 %v2635, %v2635
        %v2644 = vpack.i.b16 %v2636, %v2636
        %v2646 = vunpack.c.l.s4 286326784
        %v2647 = vunpack.c.0.s8 %v2646
        %v2648 = vperm.slane %v2637, %v2647
        %v2650 = vunpack.c.l.s4 286326784
        %v2651 = vunpack.c.0.s8 %v2650
        %v2652 = vperm.slane %v2638, %v2651
        %v2654 = vunpack.c.l.s4 286326784
        %v2655 = vunpack.c.0.s8 %v2654
        %v2656 = vperm.slane %v2639, %v2655
        %v2658 = vunpack.c.l.s4 286326784
        %v2659 = vunpack.c.0.s8 %v2658
        %v2660 = vperm.slane %v2640, %v2659
        %v2662 = vunpack.c.l.s4 286326784
        %v2663 = vunpack.c.0.s8 %v2662
        %v2664 = vperm.slane %v2641, %v2663
        %v2666 = vunpack.c.l.s4 286326784
        %v2667 = vunpack.c.0.s8 %v2666
        %v2668 = vperm.slane %v2642, %v2667
        %v2670 = vunpack.c.l.s4 286326784
        %v2671 = vunpack.c.0.s8 %v2670
        %v2672 = vperm.slane %v2643, %v2671
        %v2674 = vunpack.c.l.s4 286326784
        %v2675 = vunpack.c.0.s8 %v2674
        %v2676 = vperm.slane %v2644, %v2675
        %vm2685 = vcmask 125955
        %vm2686 = vsmask.f32 3328
        %vm2687 = vmand %vm2685, %vm2686
        %v2688 = vld [vmem:[%s281] sm:$0x8]
        %v2689 = vsel %vm2687, %v2648, %v2688
        %2690 = vst [vmem:[%s281] sm:$0x8] %v2689
        %v2691 = vld [vmem:[%s281 + $0x4] sm:$0x8]
        %v2692 = vsel %vm2687, %v2652, %v2691
        %2693 = vst [vmem:[%s281 + $0x4] sm:$0x8] %v2692
        %v2694 = vld [vmem:[%s281 + $0x8] sm:$0x8]
        %v2695 = vsel %vm2687, %v2656, %v2694
        %2696 = vst [vmem:[%s281 + $0x8] sm:$0x8] %v2695
        %v2697 = vld [vmem:[%s281 + $0xc] sm:$0x8]
        %v2698 = vsel %vm2687, %v2660, %v2697
        %2699 = vst [vmem:[%s281 + $0xc] sm:$0x8] %v2698
        %v2700 = vld [vmem:[%s281 + $0x10] sm:$0x8]
        %v2701 = vsel %vm2687, %v2664, %v2700
        %2702 = vst [vmem:[%s281 + $0x10] sm:$0x8] %v2701
        %v2703 = vld [vmem:[%s281 + $0x14] sm:$0x8]
        %v2704 = vsel %vm2687, %v2668, %v2703
        %2705 = vst [vmem:[%s281 + $0x14] sm:$0x8] %v2704
        %v2706 = vld [vmem:[%s281 + $0x18] sm:$0x8]
        %v2707 = vsel %vm2687, %v2672, %v2706
        %2708 = vst [vmem:[%s281 + $0x18] sm:$0x8] %v2707
        %v2709 = vld [vmem:[%s281 + $0x1c] sm:$0x8]
        %v2710 = vsel %vm2687, %v2676, %v2709
        %2711 = vst [vmem:[%s281 + $0x1c] sm:$0x8] %v2710
        %v2712 = vsub.f32 %v2612, %v730
        %v2713 = vadd.f32 %v2382, %v2712
        %v2714 = vmul.f32 %v2712, %v2712
        %v2715 = vadd.f32 %v2384, %v2714
        %v2716 = vld [vmem:[%s314] sm:$0x8]
        %v2717 = vld [vmem:[%s314 + $0x8] sm:$0x8]
        %v2718 = vld [vmem:[%s314 + $0x10] sm:$0x8]
        %v2719 = vld [vmem:[%s314 + $0x18] sm:$0x8]
        %v2724 = vunpack.c.l.b16 %v2716
        %v2725 = vunpack.c.l.b16 %v2717
        %v2726 = vunpack.c.l.b16 %v2718
        %v2727 = vunpack.c.l.b16 %v2719
        %v2728 = vpack.c.b16 %v2724, %v2724
        %v2729 = vpack.c.b16 %v2725, %v2725
        %v2730 = vpack.c.b16 %v2726, %v2726
        %v2731 = vpack.c.b16 %v2727, %v2727
        %v2732 = vunpack.c.l.b16 %v2728
        %v2733 = vunpack.c.l.b16 %v2729
        %v2734 = vunpack.c.l.b16 %v2730
        %v2735 = vunpack.c.l.b16 %v2731
        %v2736 = vrot.slane %v2732, 7
        %v2737 = vrot.slane %v2733, 6
        %v2738 = vsel %vm385, %v2737, %v2736
        %v2739 = vrot.slane %v2734, 5
        %v2740 = vsel %vm388, %v2739, %v2738
        %v2741 = vrot.slane %v2735, 4
        %v2742 = vsel %vm391, %v2741, %v2740
        %v2743 = vpack.c.b16 %v2742, %v2742
        %2744 = vrot.lane.b32.xlu0 %v2743, 127
        %v2745 = vpop.permute.xlu0 %2744
        %v2747 = vsel %vm400, %v2745, 0
        %2749 = vmatpush.bf16.msra.mxu0 0
        %2750 = vmatpush.bf16.msra.mxu0 0
        %2751 = vmatpush.bf16.msra.mxu0 0
        %2752 = vmatpush.bf16.msra.mxu0 0
        %2753 = vmatpush.bf16.msra.mxu0 0
        %2754 = vmatpush.bf16.msra.mxu0 0
        %2755 = vmatpush.bf16.msra.mxu0 0
        %2756 = vmatpush.bf16.msra.mxu0 %v2747
        %2757 = vmatmul.bf16.gmra.mxu0 %v398
        %v2758 = vpop.f32.mrf.mxu0
        %v2759 = vadd.f32 0.0, %v2758
        %v2760 = vpop.f32.mrf.mxu0
        %2761 = vdwg.mxu0
        %v2763 = vsel %vm400, %v2743, 0
        %2765 = vmatpush.bf16.msra.mxu0 0
        %2766 = vmatpush.bf16.msra.mxu0 0
        %2767 = vmatpush.bf16.msra.mxu0 0
        %2768 = vmatpush.bf16.msra.mxu0 0
        %2769 = vmatpush.bf16.msra.mxu0 0
        %2770 = vmatpush.bf16.msra.mxu0 0
        %2771 = vmatpush.bf16.msra.mxu0 0
        %2772 = vmatpush.bf16.msra.mxu0 %v2763
        %2773 = vmatmul.bf16.gmra.mxu0 %v418
        %v2774 = vpop.f32.mrf.mxu0
        %v2775 = vadd.f32 %v2759, %v2774
        %v2776 = vpop.f32.mrf.mxu0
        %2777 = vdwg.mxu0
        %2778 = vrot.lane.b32.xlu0 %v2743, 126
        %v2779 = vpop.permute.xlu0 %2778
        %v2781 = vsel %vm400, %v2779, 0
        %2783 = vmatpush.bf16.msra.mxu0 0
        %2784 = vmatpush.bf16.msra.mxu0 0
        %2785 = vmatpush.bf16.msra.mxu0 0
        %2786 = vmatpush.bf16.msra.mxu0 0
        %2787 = vmatpush.bf16.msra.mxu0 0
        %2788 = vmatpush.bf16.msra.mxu0 0
        %2789 = vmatpush.bf16.msra.mxu0 0
        %2790 = vmatpush.bf16.msra.mxu0 %v2781
        %2791 = vmatmul.bf16.gmra.mxu0 %v439
        %v2792 = vpop.f32.mrf.mxu0
        %v2793 = vadd.f32 0.0, %v2792
        %v2794 = vpop.f32.mrf.mxu0
        %2795 = vdwg.mxu0
        %v2796 = vadd.f32 %v2775, %v2793
        %v2797 = vld [vmem:[%s314 + $0x4] sm:$0x1]
        %v2798 = vld [vmem:[%s314 + $0xc] sm:$0x1]
        %v2799 = vld [vmem:[%s314 + $0x14] sm:$0x1]
        %v2800 = vld [vmem:[%s314 + $0x1c] sm:$0x1]
        %v2805 = vunpack.c.l.b16 %v2797
        %v2806 = vunpack.c.l.b16 %v2798
        %v2807 = vunpack.c.l.b16 %v2799
        %v2808 = vunpack.c.l.b16 %v2800
        %v2809 = vpack.c.b16 %v2805, %v2805
        %v2810 = vpack.c.b16 %v2806, %v2806
        %v2811 = vpack.c.b16 %v2807, %v2807
        %v2812 = vpack.c.b16 %v2808, %v2808
        %v2813 = vunpack.c.l.b16 %v2809
        %v2814 = vunpack.c.l.b16 %v2810
        %v2815 = vunpack.c.l.b16 %v2811
        %v2816 = vunpack.c.l.b16 %v2812
        %v2817 = vrot.slane %v2814, 7
        %v2818 = vsel %vm385, %v2817, %v2813
        %v2819 = vrot.slane %v2815, 6
        %v2820 = vsel %vm388, %v2819, %v2818
        %v2821 = vrot.slane %v2816, 5
        %v2822 = vsel %vm391, %v2821, %v2820
        %v2823 = vpack.c.b16 %v2822, %v2822
        %v2825 = vsel %vm400, %v2823, 0
        %2827 = vmatpush.bf16.msra.mxu0 0
        %2828 = vmatpush.bf16.msra.mxu0 0
        %2829 = vmatpush.bf16.msra.mxu0 0
        %2830 = vmatpush.bf16.msra.mxu0 0
        %2831 = vmatpush.bf16.msra.mxu0 0
        %2832 = vmatpush.bf16.msra.mxu0 0
        %2833 = vmatpush.bf16.msra.mxu0 0
        %2834 = vmatpush.bf16.msra.mxu0 %v2825
        %2835 = vmatmul.bf16.gmra.mxu0 %v466
        %v2836 = vpop.f32.mrf.mxu0
        %v2837 = vadd.f32 0.0, %v2836
        %v2838 = vpop.f32.mrf.mxu0
        %2839 = vdwg.mxu0
        %v2840 = vadd.f32 %v2796, %v2837
        %2841 = vrot.lane.b32.xlu0 %v2823, 127
        %v2842 = vpop.permute.xlu0 %2841
        %v2844 = vsel %vm400, %v2842, 0
        %2846 = vmatpush.bf16.msra.mxu0 0
        %2847 = vmatpush.bf16.msra.mxu0 0
        %2848 = vmatpush.bf16.msra.mxu0 0
        %2849 = vmatpush.bf16.msra.mxu0 0
        %2850 = vmatpush.bf16.msra.mxu0 0
        %2851 = vmatpush.bf16.msra.mxu0 0
        %2852 = vmatpush.bf16.msra.mxu0 0
        %2853 = vmatpush.bf16.msra.mxu0 %v2844
        %2854 = vmatmul.bf16.gmra.mxu0 %v488
        %v2855 = vpop.f32.mrf.mxu0
        %v2856 = vadd.f32 0.0, %v2855
        %v2857 = vpop.f32.mrf.mxu0
        %2858 = vdwg.mxu0
        %v2859 = vadd.f32 %v2840, %v2856
        %2860 = vrot.lane.b32.xlu0 %v2823, 126
        %v2861 = vpop.permute.xlu0 %2860
        %v2863 = vsel %vm400, %v2861, 0
        %2865 = vmatpush.bf16.msra.mxu0 0
        %2866 = vmatpush.bf16.msra.mxu0 0
        %2867 = vmatpush.bf16.msra.mxu0 0
        %2868 = vmatpush.bf16.msra.mxu0 0
        %2869 = vmatpush.bf16.msra.mxu0 0
        %2870 = vmatpush.bf16.msra.mxu0 0
        %2871 = vmatpush.bf16.msra.mxu0 0
        %2872 = vmatpush.bf16.msra.mxu0 %v2863
        %2873 = vmatmul.bf16.gmra.mxu0 %v510
        %v2874 = vpop.f32.mrf.mxu0
        %v2875 = vadd.f32 0.0, %v2874
        %v2876 = vpop.f32.mrf.mxu0
        %2877 = vdwg.mxu0
        %v2878 = vadd.f32 %v2859, %v2875
        %v2879 = vrot.slane %v2813, 1
        %v2880 = vsel %vm385, %v2814, %v2879
        %v2881 = vrot.slane %v2815, 7
        %v2882 = vsel %vm388, %v2881, %v2880
        %v2883 = vrot.slane %v2816, 6
        %v2884 = vsel %vm391, %v2883, %v2882
        %v2885 = vpack.c.b16 %v2884, %v2884
        %v2887 = vsel %vm400, %v2885, 0
        %2889 = vmatpush.bf16.msra.mxu0 0
        %2890 = vmatpush.bf16.msra.mxu0 0
        %2891 = vmatpush.bf16.msra.mxu0 0
        %2892 = vmatpush.bf16.msra.mxu0 0
        %2893 = vmatpush.bf16.msra.mxu0 0
        %2894 = vmatpush.bf16.msra.mxu0 0
        %2895 = vmatpush.bf16.msra.mxu0 0
        %2896 = vmatpush.bf16.msra.mxu0 %v2887
        %2897 = vmatmul.bf16.gmra.mxu0 %v557
        %v2898 = vpop.f32.mrf.mxu0
        %v2899 = vadd.f32 0.0, %v2898
        %v2900 = vpop.f32.mrf.mxu0
        %2901 = vdwg.mxu0
        %v2902 = vadd.f32 %v2878, %v2899
        %2903 = vrot.lane.b32.xlu0 %v2885, 127
        %v2904 = vpop.permute.xlu0 %2903
        %v2906 = vsel %vm400, %v2904, 0
        %2908 = vmatpush.bf16.msra.mxu0 0
        %2909 = vmatpush.bf16.msra.mxu0 0
        %2910 = vmatpush.bf16.msra.mxu0 0
        %2911 = vmatpush.bf16.msra.mxu0 0
        %2912 = vmatpush.bf16.msra.mxu0 0
        %2913 = vmatpush.bf16.msra.mxu0 0
        %2914 = vmatpush.bf16.msra.mxu0 0
        %2915 = vmatpush.bf16.msra.mxu0 %v2906
        %2916 = vmatmul.bf16.gmra.mxu0 %v579
        %v2917 = vpop.f32.mrf.mxu0
        %v2918 = vadd.f32 0.0, %v2917
        %v2919 = vpop.f32.mrf.mxu0
        %2920 = vdwg.mxu0
        %v2921 = vadd.f32 %v2902, %v2918
        %2922 = vrot.lane.b32.xlu0 %v2885, 126
        %v2923 = vpop.permute.xlu0 %2922
        %v2925 = vsel %vm400, %v2923, 0
        %2927 = vmatpush.bf16.msra.mxu0 0
        %2928 = vmatpush.bf16.msra.mxu0 0
        %2929 = vmatpush.bf16.msra.mxu0 0
        %2930 = vmatpush.bf16.msra.mxu0 0
        %2931 = vmatpush.bf16.msra.mxu0 0
        %2932 = vmatpush.bf16.msra.mxu0 0
        %2933 = vmatpush.bf16.msra.mxu0 0
        %2934 = vmatpush.bf16.msra.mxu0 %v2925
        %2935 = vmatmul.bf16.gmra.mxu0 %v601
        %v2936 = vpop.f32.mrf.mxu0
        %v2937 = vadd.f32 0.0, %v2936
        %v2938 = vpop.f32.mrf.mxu0
        %2939 = vdwg.mxu0
        %v2940 = vadd.f32 %v2921, %v2937
        %v2941 = vadd.f32 %v2940, %v623
        %v2942 = vmax.f32 %v2941, 0.0
        %v2943 = vpack.c.bf16 %v2942, %v2942
        %v2945 = vrot.slane %v2943, 3
        %v2948 = vsel %vm630, %v2943, %v2945
        %v2950 = vsel %vm385, %v2943, %v2945
        %v2952 = vrot.slane %v2950, 1
        %v2953 = vsel %vm388, %v2943, %v2945
        %v2955 = vrot.slane %v2953, 2
        %v2956 = vsel %vm391, %v2943, %v2945
        %v2958 = vrot.slane %v2956, 3
        %v2959 = vunpack.i.l.s16 %v2948
        %v2960 = vunpack.i.h.s16 %v2948
        %v2961 = vunpack.i.l.s16 %v2952
        %v2962 = vunpack.i.h.s16 %v2952
        %v2963 = vunpack.i.l.s16 %v2955
        %v2964 = vunpack.i.h.s16 %v2955
        %v2965 = vunpack.i.l.s16 %v2958
        %v2966 = vunpack.i.h.s16 %v2958
        %v2967 = vpack.i.b16 %v2959, %v2959
        %v2968 = vpack.i.b16 %v2960, %v2960
        %v2969 = vpack.i.b16 %v2961, %v2961
        %v2970 = vpack.i.b16 %v2962, %v2962
        %v2971 = vpack.i.b16 %v2963, %v2963
        %v2972 = vpack.i.b16 %v2964, %v2964
        %v2973 = vpack.i.b16 %v2965, %v2965
        %v2974 = vpack.i.b16 %v2966, %v2966
        %v2976 = vunpack.c.l.s4 286326784
        %v2977 = vunpack.c.0.s8 %v2976
        %v2978 = vperm.slane %v2967, %v2977
        %v2980 = vunpack.c.l.s4 286326784
        %v2981 = vunpack.c.0.s8 %v2980
        %v2982 = vperm.slane %v2968, %v2981
        %v2984 = vunpack.c.l.s4 286326784
        %v2985 = vunpack.c.0.s8 %v2984
        %v2986 = vperm.slane %v2969, %v2985
        %v2988 = vunpack.c.l.s4 286326784
        %v2989 = vunpack.c.0.s8 %v2988
        %v2990 = vperm.slane %v2970, %v2989
        %v2992 = vunpack.c.l.s4 286326784
        %v2993 = vunpack.c.0.s8 %v2992
        %v2994 = vperm.slane %v2971, %v2993
        %v2996 = vunpack.c.l.s4 286326784
        %v2997 = vunpack.c.0.s8 %v2996
        %v2998 = vperm.slane %v2972, %v2997
        %v3000 = vunpack.c.l.s4 286326784
        %v3001 = vunpack.c.0.s8 %v3000
        %v3002 = vperm.slane %v2973, %v3001
        %v3004 = vunpack.c.l.s4 286326784
        %v3005 = vunpack.c.0.s8 %v3004
        %v3006 = vperm.slane %v2974, %v3005
        %vm3015 = vsmask.f32 7950
        %vm3016 = vmand %vm2685, %vm3015
        %v3017 = vld [vmem:[%s281] sm:$0x8]
        %v3018 = vsel %vm3016, %v2978, %v3017
        %3019 = vst [vmem:[%s281] sm:$0x8] %v3018
        %v3020 = vld [vmem:[%s281 + $0x4] sm:$0x8]
        %v3021 = vsel %vm3016, %v2982, %v3020
        %3022 = vst [vmem:[%s281 + $0x4] sm:$0x8] %v3021
        %v3023 = vld [vmem:[%s281 + $0x8] sm:$0x8]
        %v3024 = vsel %vm3016, %v2986, %v3023
        %3025 = vst [vmem:[%s281 + $0x8] sm:$0x8] %v3024
        %v3026 = vld [vmem:[%s281 + $0xc] sm:$0x8]
        %v3027 = vsel %vm3016, %v2990, %v3026
        %3028 = vst [vmem:[%s281 + $0xc] sm:$0x8] %v3027
        %v3029 = vld [vmem:[%s281 + $0x10] sm:$0x8]
        %v3030 = vsel %vm3016, %v2994, %v3029
        %3031 = vst [vmem:[%s281 + $0x10] sm:$0x8] %v3030
        %v3032 = vld [vmem:[%s281 + $0x14] sm:$0x8]
        %v3033 = vsel %vm3016, %v2998, %v3032
        %3034 = vst [vmem:[%s281 + $0x14] sm:$0x8] %v3033
        %v3035 = vld [vmem:[%s281 + $0x18] sm:$0x8]
        %v3036 = vsel %vm3016, %v3002, %v3035
        %3037 = vst [vmem:[%s281 + $0x18] sm:$0x8] %v3036
        %v3038 = vld [vmem:[%s281 + $0x1c] sm:$0x8]
        %v3039 = vsel %vm3016, %v3006, %v3038
        %3040 = vst [vmem:[%s281 + $0x1c] sm:$0x8] %v3039
        %v3041 = vsub.f32 %v2942, %v730
        %v3042 = vadd.f32 %v2713, %v3041
        %v3043 = vmul.f32 %v3041, %v3041
        %v3044 = vadd.f32 %v2715, %v3043
        %vm3045 = vcmask 130048
        %v3046 = vsel %vm3045, %v3042, 0.0
        %3047 = vadd.xlane.f32.xlu0 %v3046
        %v3048 = vpop.xlane.xlu0 %3047
        %v3050 = vlaneseq
        %v3051 = vand.u32 %v3050, 127
        %v3052 = vperm.slane %v3048, %v3051
        %vm3054 = vcmask 57344
        %3055 = vst.msk [vmem:[%s333] sm:$0x1] %vm3054, %v3052
        %v3056 = vsel %vm3045, %v3044, 0.0
        %3057 = vadd.xlane.f32.xlu0 %v3056
        %v3058 = vpop.xlane.xlu0 %3057
        %v3060 = vperm.slane %v3058, %v3051
        %3062 = vst.msk [vmem:[%s343] sm:$0x1] %vm3054, %v3060
        %s3063 = sand.u32 %s128, 1
        %s3064 = sand.u32 %s128, 1
        %s3065 = smul.addr %s3064, 32
        %s3066 = scalar_lea.vmem [#allocation2], %s3065
        %p3067 = scmp.lt.s32.totalorder %s22, 1
        %s3068 = scalar_select %p3067, %s22, 1
        %p3069 = scmp.lt.s32.totalorder %s23, 1
        %s3070 = scalar_select %p3069, %s23, 1
        %p3071 = scmp.lt.s32.totalorder %s24, 0
        %s3072 = scalar_select %p3071, %s24, 0
        %s3073 = sadd.s32 %s3072, %s3070
        %s3074 = smul.addr %s3068, 2
        %s3075 = sadd.s32 %s3073, %s3074
        %s3076 = scalar_lea.vmem %s4, %s3075
        %p3077 = scmp.lt.s32.totalorder %s22, 1
        %s3078 = scalar_select %p3077, %s22, 1
        %p3079 = scmp.lt.s32.totalorder %s23, 1
        %s3080 = scalar_select %p3079, %s23, 1
        %p3081 = scmp.lt.s32.totalorder %s24, 0
        %s3082 = scalar_select %p3081, %s24, 0
        %s3083 = sadd.s32 %s3082, %s3080
        %s3084 = smul.addr %s3078, 2
        %s3085 = sadd.s32 %s3083, %s3084
        %s3086 = scalar_lea.vmem %s5, %s3085
        // Predicated region
        $region33: #{crb2d_forward.2} parent=31 // pred_check
          %p3087 = pneg %p138
        $region34: #{crb2d_forward.2} parent=31 // pred_check_branch
          %3089 = sbr.rel (%p3087) target = $region36
        $region35: #{crb2d_forward.2} parent=31 // pred_region
          %s3090 = smul.u32 8, %s24
          %s3091 = smul.addr %s3090, 2
          %s3092 = sadd.s32 %s23, %s3091
          %s3093 = smul.addr %s22, 16
          %s3094 = sadd.s32 %s3092, %s3093
          %s3095 = smul.addr %s3094, 4
          %s3096 = scalar_lea.vmem %s3, %s3095
          // Predicated region
          $region37: #{crb2d_forward.2} parent=35 // pred_check
            _
          $region38: #{crb2d_forward.2} parent=35 // pred_check_branch
            %3098 = sbr.rel (0) target = $region40
          $region39: #{crb2d_forward.2} parent=35 // pred_region
            // Predicated region
            $region41: #{crb2d_forward.2} parent=39 // pred_check
              _
            $region42: #{crb2d_forward.2} parent=39 // pred_check_branch
              %3100 = sbr.rel target = $region44
            $region43: #{crb2d_forward.2} parent=39 // pred_region
              // Predicated region
              $region56: #{crb2d_forward.2} parent=43 // pred_check
                _
              $region57: #{crb2d_forward.2} parent=43 // pred_check_branch
                %3130 = sbr.rel (0) target = $region59
              $region58: #{crb2d_forward.2} parent=43 // pred_region
                loop: start=0, step=1, limit=1
                $region60: #{crb2d_forward.2} parent=58 // loop_pre_header
                  _
                $region61: #{crb2d_forward.2} parent=58 // loop_header
                  %s3132 = sphi 0, %s3136
                  %p3133 = scmp.ge.s32.totalorder %s3132, 1
                  %s3137 = sphi %s3066, %s3066
                  %s3138 = sphi %s3096, %s3096
                $region62: #{crb2d_forward.2} parent=58 // loop_header_branch
                  %3135 = sbr.rel (%p3133) target = $region66
                $region63: #{crb2d_forward.2} parent=58 // loop_body
                  _
                $region64: #{crb2d_forward.2} parent=58 // loop_footer
                  %s3136 = sadd.s32 1, %s3132
                $region65: #{crb2d_forward.2} parent=58 // loop_footer_branch
                  %3131 = sbr.rel target = $region61
                $region66: #{crb2d_forward.2} parent=58 // loop_exit
                  _
                %s3140 = ssub.s32 16, 1
                loop: start=0, step=1, limit=1
                $region67: #{crb2d_forward.2} parent=58 // loop_pre_header
                  _
                $region68: #{crb2d_forward.2} parent=58 // loop_header
                  %s3142 = sphi 0, %s3146
                  %p3143 = scmp.ge.s32.totalorder %s3142, 1
                  %s3147 = sphi %s3066, %s3066
                  %s3148 = sphi %s3096, %s3096
                $region69: #{crb2d_forward.2} parent=58 // loop_header_branch
                  %3145 = sbr.rel (%p3143) target = $region73
                $region70: #{crb2d_forward.2} parent=58 // loop_body
                  %v3149 = vld [vmem:[%s3147] sm:%s3140]
                  %3150 = vst [vmem:[%s3148] sm:%s3140] %v3149
                  %v3151 = vld [vmem:[%s3147 + $0x4] sm:%s3140]
                  %3152 = vst [vmem:[%s3148 + $0x8] sm:%s3140] %v3151
                  %v3153 = vld [vmem:[%s3147 + $0x8] sm:%s3140]
                  %3154 = vst [vmem:[%s3148 + $0x10] sm:%s3140] %v3153
                  %v3155 = vld [vmem:[%s3147 + $0xc] sm:%s3140]
                  %3156 = vst [vmem:[%s3148 + $0x18] sm:%s3140] %v3155
                  %v3157 = vld [vmem:[%s3147 + $0x10] sm:%s3140]
                  %3158 = vst [vmem:[%s3148 + $0x20] sm:%s3140] %v3157
                  %v3159 = vld [vmem:[%s3147 + $0x14] sm:%s3140]
                  %3160 = vst [vmem:[%s3148 + $0x28] sm:%s3140] %v3159
                  %v3161 = vld [vmem:[%s3147 + $0x18] sm:%s3140]
                  %3162 = vst [vmem:[%s3148 + $0x30] sm:%s3140] %v3161
                  %v3163 = vld [vmem:[%s3147 + $0x1c] sm:%s3140]
                  %3164 = vst [vmem:[%s3148 + $0x38] sm:%s3140] %v3163
                $region71: #{crb2d_forward.2} parent=58 // loop_footer
                  %s3146 = sadd.s32 1, %s3142
                $region72: #{crb2d_forward.2} parent=58 // loop_footer_branch
                  %3141 = sbr.rel target = $region68
                $region73: #{crb2d_forward.2} parent=58 // loop_exit
                  _
              $region59: #{crb2d_forward.2} parent=43 // pred_fallthru
                _
            $region44: #{crb2d_forward.2} parent=39 // pred_fallthru
              _
            // Predicated region
            $region45: #{crb2d_forward.2} parent=39 // pred_check
              _
            $region46: #{crb2d_forward.2} parent=39 // pred_check_branch
              %3102 = sbr.rel (0) target = $region48
            $region47: #{crb2d_forward.2} parent=39 // pred_region
              %s3104 = ssub.s32 16, 1
              loop: start=0, step=1, limit=1
              $region49: #{crb2d_forward.2} parent=47 // loop_pre_header
                _
              $region50: #{crb2d_forward.2} parent=47 // loop_header
                %s3106 = sphi 0, %s3110
                %p3107 = scmp.ge.s32.totalorder %s3106, 1
                %s3111 = sphi %s3066, %s3066
                %s3112 = sphi %s3096, %s3096
              $region51: #{crb2d_forward.2} parent=47 // loop_header_branch
                %3109 = sbr.rel (%p3107) target = $region55
              $region52: #{crb2d_forward.2} parent=47 // loop_body
                %v3113 = vld [vmem:[%s3111] sm:%s3104]
                %3114 = vst [vmem:[%s3112] sm:%s3104] %v3113
                %v3115 = vld [vmem:[%s3111 + $0x4] sm:%s3104]
                %3116 = vst [vmem:[%s3112 + $0x8] sm:%s3104] %v3115
                %v3117 = vld [vmem:[%s3111 + $0x8] sm:%s3104]
                %3118 = vst [vmem:[%s3112 + $0x10] sm:%s3104] %v3117
                %v3119 = vld [vmem:[%s3111 + $0xc] sm:%s3104]
                %3120 = vst [vmem:[%s3112 + $0x18] sm:%s3104] %v3119
                %v3121 = vld [vmem:[%s3111 + $0x10] sm:%s3104]
                %3122 = vst [vmem:[%s3112 + $0x20] sm:%s3104] %v3121
                %v3123 = vld [vmem:[%s3111 + $0x14] sm:%s3104]
                %3124 = vst [vmem:[%s3112 + $0x28] sm:%s3104] %v3123
                %v3125 = vld [vmem:[%s3111 + $0x18] sm:%s3104]
                %3126 = vst [vmem:[%s3112 + $0x30] sm:%s3104] %v3125
                %v3127 = vld [vmem:[%s3111 + $0x1c] sm:%s3104]
                %3128 = vst [vmem:[%s3112 + $0x38] sm:%s3104] %v3127
              $region53: #{crb2d_forward.2} parent=47 // loop_footer
                %s3110 = sadd.s32 1, %s3106
              $region54: #{crb2d_forward.2} parent=47 // loop_footer_branch
                %3105 = sbr.rel target = $region50
              $region55: #{crb2d_forward.2} parent=47 // loop_exit
                _
            $region48: #{crb2d_forward.2} parent=39 // pred_fallthru
              _
          $region40: #{crb2d_forward.2} parent=35 // pred_fallthru
            _
          %3165 = vnop
        $region36: #{crb2d_forward.2} parent=31 // pred_fallthru
          _
        // Predicated region
        $region74: #{crb2d_forward.2} parent=31 // pred_check
          %p3166 = pneg %p168
        $region75: #{crb2d_forward.2} parent=31 // pred_check_branch
          %3168 = sbr.rel (%p3166) target = $region77
        $region76: #{crb2d_forward.2} parent=31 // pred_region
          _
        $region77: #{crb2d_forward.2} parent=31 // pred_fallthru
          _
        // Predicated region
        $region78: #{crb2d_forward.2} parent=31 // pred_check
          %p3169 = pneg %p198
        $region79: #{crb2d_forward.2} parent=31 // pred_check_branch
          %3171 = sbr.rel (%p3169) target = $region81
        $region80: #{crb2d_forward.2} parent=31 // pred_region
          _
        $region81: #{crb2d_forward.2} parent=31 // pred_fallthru
          _
      $region32: #{crb2d_forward.2} parent=5 // pred_fallthru
        _
      %p3172 = scmp.le.s32.totalorder 2, %s12
      // Predicated region
      $region82: #{crb2d_forward.2} parent=5 // pred_check
        %p3173 = pneg %p3172
      $region83: #{crb2d_forward.2} parent=5 // pred_check_branch
        %3175 = sbr.rel (%p3173) target = $region85
      $region84: #{crb2d_forward.2} parent=5 // pred_region
        %s3176 = ssub.s32 %s12, 2
        // Predicated region
        $region86: #{crb2d_forward.2} parent=84 // pred_check
          %p3177 = pneg %p144
        $region87: #{crb2d_forward.2} parent=84 // pred_check_branch
          %3179 = sbr.rel (%p3177) target = $region89
        $region88: #{crb2d_forward.2} parent=84 // pred_region
          %s3180 = sand.u32 %s129, 1
          %s3181 = sand.u32 %s129, 1
          %s3182 = smul.addr %s3181, 32
          %s3183 = scalar_lea.vmem [#allocation2], %s3182
        $region89: #{crb2d_forward.2} parent=84 // pred_fallthru
          _
        // Predicated region
        $region90: #{crb2d_forward.2} parent=84 // pred_check
          %p3184 = pneg %p174
        $region91: #{crb2d_forward.2} parent=84 // pred_check_branch
          %3186 = sbr.rel (%p3184) target = $region93
        $region92: #{crb2d_forward.2} parent=84 // pred_region
          %p3187 = scmp.lt.s32.totalorder %s25, 1
          %s3188 = scalar_select %p3187, %s25, 1
          %p3189 = scmp.lt.s32.totalorder %s26, 1
          %s3190 = scalar_select %p3189, %s26, 1
          %p3191 = scmp.lt.s32.totalorder %s27, 0
          %s3192 = scalar_select %p3191, %s27, 0
          %s3193 = sadd.s32 %s3192, %s3190
          %s3194 = smul.addr %s3188, 2
          %s3195 = sadd.s32 %s3193, %s3194
          %s3196 = scalar_lea.vmem %s4, %s3195
        $region93: #{crb2d_forward.2} parent=84 // pred_fallthru
          _
        // Predicated region
        $region94: #{crb2d_forward.2} parent=84 // pred_check
          %p3197 = pneg %p204
        $region95: #{crb2d_forward.2} parent=84 // pred_check_branch
          %3199 = sbr.rel (%p3197) target = $region97
        $region96: #{crb2d_forward.2} parent=84 // pred_region
          %p3200 = scmp.lt.s32.totalorder %s25, 1
          %s3201 = scalar_select %p3200, %s25, 1
          %p3202 = scmp.lt.s32.totalorder %s26, 1
          %s3203 = scalar_select %p3202, %s26, 1
          %p3204 = scmp.lt.s32.totalorder %s27, 0
          %s3205 = scalar_select %p3204, %s27, 0
          %s3206 = sadd.s32 %s3205, %s3203
          %s3207 = smul.addr %s3201, 2
          %s3208 = sadd.s32 %s3206, %s3207
          %s3209 = scalar_lea.vmem %s5, %s3208
        $region97: #{crb2d_forward.2} parent=84 // pred_fallthru
          _
      $region85: #{crb2d_forward.2} parent=5 // pred_fallthru
        _
    $region6: #{crb2d_forward.2} parent=1 // loop_footer
      %s16 = sadd.s32 1, %s12
    $region7: #{crb2d_forward.2} parent=1 // loop_footer_branch
      %11 = sbr.rel target = $region3
    $region8: #{crb2d_forward.2} parent=1 // loop_exit
      _

</llo_original>
